<compile_context>
chip_gen: v7x
topology: tpu7x:2x2x1
jax: 0.10.0
libtpu: 0.0.40
codegen_flags: <defaults>
</compile_context>

<pallas_src>
import functools

import jax
import jax.numpy as jnp
from jax.experimental import pallas as pl
from jax.experimental.pallas import tpu as pltpu

LN_EPS = 1e-5                  # nn.LayerNorm default eps
VAR_EPS = 1e-6                 # eps in exp(-distance / (2 w^2 + 1e-6))
_GELU_C = 0.7978845608028654   # sqrt(2 / pi)
_HP = jax.lax.Precision.HIGHEST  # reference-side matmul precision


def _default_vmem_limit():
    """Generation-aware scoped-VMEM limit: ~96 MiB on v5e/v6e, 48 MiB on v7x."""
    try:
        cap = int(pltpu.get_tpu_info().vmem_capacity_bytes)
        return max(32 << 20, min((cap * 3) // 4, 100 << 20))
    except Exception:
        return 48 << 20  # safe on every generation (v7x has 64 MiB / TC)


def _nbytes(a):
    return int(a.size) * int(a.dtype.itemsize)


def _layer_norm_f32(x_f32, gamma_f32, beta_f32):
    mean = jnp.mean(x_f32, axis=-1, keepdims=True)
    cen = x_f32 - mean
    var = jnp.mean(cen * cen, axis=-1, keepdims=True)
    return cen * jax.lax.rsqrt(var + LN_EPS) * gamma_f32 + beta_f32


def _softmax_ref(x_f32):
    m = jnp.max(x_f32, axis=-1, keepdims=True)
    e = jnp.exp(x_f32 - m)
    return e / jnp.sum(e, axis=-1, keepdims=True)


def _softmax_kernel(x_f32):
    # EUP-friendly softmax: exp + approximate reciprocal (no full VPU divide pass).
    m = jnp.max(x_f32, axis=-1, keepdims=True)
    e = jnp.exp(x_f32 - m)
    return e * pl.reciprocal(jnp.sum(e, axis=-1, keepdims=True), approx=True)


def _gelu(x_f32):
    # TODO(synk): PyTorch nn.GELU() defaults to the exact erf form; the tanh
    # approximation is used because erf has no guaranteed Mosaic lowering.
    return 0.5 * x_f32 * (1.0 + jnp.tanh(_GELU_C * (x_f32 + 0.044715 * x_f32 * x_f32 * x_f32)))


def _resident_spec(shape):
    """Grid-invariant operand: constant index_map + single buffering."""
    zeros = (0,) * len(shape)
    return pl.BlockSpec(shape, lambda *_: zeros, pipeline_mode=pl.Buffered(1))


# --------------------------------------------------------------------------
# Kernels
# --------------------------------------------------------------------------

def _attention_kernel(x_ref, gamma_ref, beta_ref, wq_ref, wk_ref, wv_ref,
                      pos_ref, wm1_ref, bm1_ref, wm2_ref, bm2_ref,
                      wo_ref, bo_ref, o_ref, *, scale):
    f32 = jnp.float32
    cdt = x_ref.dtype                      # MXU operand dtype (bf16 stays bf16)
    _, cblk, L, D = x_ref.shape

    # PreNorm: LayerNorm statistics + affine in f32, cast back for the MXU.
    x2 = x_ref[0].reshape(cblk * L, D)     # flatten the channel-block for D x D matmuls
    y = _layer_norm_f32(x2.astype(f32),
                        gamma_ref[...].astype(f32),
                        beta_ref[...].astype(f32)).astype(cdt)

    # QKV projections; softmax scale folded into q (saves an (L,L) VPU pass).
    q = (jnp.dot(y, wq_ref[...], preferred_element_type=f32) * scale).astype(cdt)
    k = jnp.dot(y, wk_ref[...], preferred_element_type=f32).astype(cdt)
    v = jnp.dot(y, wv_ref[...], preferred_element_type=f32).astype(cdt)
    q3 = q.reshape(cblk, L, D)
    k3 = k.reshape(cblk, L, D)
    v3 = v.reshape(cblk, L, D)

    # dots = (q * scale) @ k^T  per channel slab (batched contraction).
    dots = jax.lax.dot_general(q3, k3, (((2,), (2,)), ((0,), (0,))),
                               preferred_element_type=f32)            # (cblk, L, L)
    attn1 = _softmax_kernel(dots)

    # make_var(attn1 + pos): Linear(L,L) -> ReLU -> Linear(L,1).  Kept in f32:
    # w feeds exp(-dist/(2w^2+eps)) where small relative errors are amplified.
    attn_w = (attn1 + pos_ref[...].astype(f32)).reshape(cblk * L, L)
    h = jnp.dot(attn_w, wm1_ref[...].astype(f32), preferred_element_type=f32)
    h = jnp.maximum(h + bm1_ref[...].astype(f32), 0.0).reshape(cblk, L, L)
    w_var = (jnp.sum(h * wm2_ref[...].astype(f32), axis=-1, keepdims=True)
             + bm2_ref[...].astype(f32))                               # (cblk, L, 1)

    # Distance matrix |j - i|^2 generated in-kernel (iota + square, no HBM operand).
    row = jax.lax.broadcasted_iota(jnp.int32, (L, L), 0)
    col = jax.lax.broadcasted_iota(jnp.int32, (L, L), 1)
    diff = (col - row).astype(f32)
    dist = diff * diff                                                 # (L, L)

    inv = pl.reciprocal(2.0 * w_var * w_var + VAR_EPS, approx=True)    # (cblk, L, 1)
    weight = jnp.exp(-(dist * inv))                                    # (cblk, L, L)
    attn2 = _softmax_kernel(attn1 * weight)

    out3 = jax.lax.dot_general(attn2.astype(cdt), v3, (((2,), (1,)), ((0,), (0,))),
                               preferred_element_type=f32)             # (cblk, L, D)
    out = (jnp.dot(out3.reshape(cblk * L, D).astype(cdt), wo_ref[...],
                   preferred_element_type=f32)
           + bo_ref[...].astype(f32))

    # Fused residual: attn(x) + x  (x re-read from the VMEM block; no long-lived
    # f32 copy kept alive across the matmuls).
    res = out + x_ref[0].reshape(cblk * L, D).astype(f32)
    o_ref[0] = res.reshape(cblk, L, D).astype(o_ref.dtype)


def _feedforward_kernel(x_ref, gamma_ref, beta_ref, w1_ref, b1_ref,
                        w2_ref, b2_ref, o_ref):
    f32 = jnp.float32
    cdt = x_ref.dtype

    y = _layer_norm_f32(x_ref[...].astype(f32),
                        gamma_ref[...].astype(f32),
                        beta_ref[...].astype(f32)).astype(cdt)

    h = jnp.dot(y, w1_ref[...], preferred_element_type=f32)
    h = _gelu(h + b1_ref[...].astype(f32)).astype(cdt)
    out = jnp.dot(h, w2_ref[...], preferred_element_type=f32)
    out = out + b2_ref[...].astype(f32)

    # Fused residual: ff(x) + x  (x re-read from the VMEM block).
    o_ref[...] = (out + x_ref[...].astype(f32)).astype(o_ref.dtype)


# --------------------------------------------------------------------------
# Wrappers (grid / BlockSpecs / compiler params)
# --------------------------------------------------------------------------

def _choose_cblk(C, L, D, itemsize, budget_bytes):
    """Largest divisor of C whose per-step working set fits the VMEM budget."""
    best = 1
    for cb in range(1, C + 1):
        if C % cb:
            continue
        if cb * L > 2048:                        # keep flattened projection rows bounded
            continue
        est = cb * (4 * L * D * itemsize         # x in/out blocks (double-buffered)
                    + 6 * L * D * 4              # y/q/k/v/out f32-ish temporaries
                    + 8 * L * L * 4              # (L, L) f32 attention temporaries
                    + 2 * L * L * itemsize)      # pos block
        if est <= budget_bytes:
            best = cb
    return best


def prenorm_attention(x, p, *, scale, vmem_limit_bytes=None):
    B, C, L, D = x.shape
    if vmem_limit_bytes is None:
        vmem_limit_bytes = _default_vmem_limit()
    cblk = _choose_cblk(C, L, D, int(x.dtype.itemsize), vmem_limit_bytes // 2)
    n_cb = C // cblk

    flops_slab = 8 * L * D * D + 4 * L * L * D + 2 * L * L * L
    weight_bytes = sum(_nbytes(p[k]) for k in
                       ("gamma", "beta", "wq", "wk", "wv", "pos", "wm1",
                        "bm1", "wm2", "bm2", "wo", "bo"))
    cost = pl.CostEstimate(
        flops=int(B * C * flops_slab),
        transcendentals=int(B * C * (3 * L * L + 2 * L)),
        bytes_accessed=int(2 * _nbytes(x) + weight_bytes),
    )

    # Channel-block is the OUTER grid axis so pos_embedding[c]'s block index is
    # constant across the inner batch axis (no per-step re-DMA of the pos block).
    x_spec = pl.BlockSpec((1, cblk, L, D), lambda cb, b: (b, cb, 0, 0))
    pos_spec = pl.BlockSpec((cblk, L, L), lambda cb, b: (cb, 0, 0))

    kernel = functools.partial(_attention_kernel, scale=scale)
    return pl.pallas_call(
        kernel,
        out_shape=jax.ShapeDtypeStruct(x.shape, x.dtype),
        grid=(n_cb, B),
        in_specs=[
            x_spec,                      # x slab(s) for this (channel-block, batch)
            _resident_spec((1, D)),      # LN gamma
            _resident_spec((1, D)),      # LN beta
            _resident_spec((D, D)),      # Wq
            _resident_spec((D, D)),      # Wk
            _resident_spec((D, D)),      # Wv
            pos_spec,                    # pos_embedding[channel block]
            _resident_spec((L, L)),      # make_var W1
            _resident_spec((1, L)),      # make_var b1
            _resident_spec((1, L)),      # make_var W2 (as a row)
            _resident_spec((1, 1)),      # make_var b2
            _resident_spec((D, D)),      # Wo
            _resident_spec((1, D)),      # bo
        ],
        out_specs=x_spec,
        input_output_aliases={0: 0},     # in-place residual update of x
        compiler_params=pltpu.CompilerParams(
            dimension_semantics=("parallel", "parallel"),
            vmem_limit_bytes=vmem_limit_bytes,
        ),
        cost_estimate=cost,
    )(x, p["gamma"], p["beta"], p["wq"], p["wk"], p["wv"], p["pos"],
      p["wm1"], p["bm1"], p["wm2"], p["bm2"], p["wo"], p["bo"])


def _choose_block_m(m, d, itemsize, cap, vmem_limit_bytes):
    # Resident (single-buffered) weights + biases are part of the budget.
    weight_bytes = (2 * d * d + 4 * d) * itemsize
    budget = max((vmem_limit_bytes // 2) - weight_bytes, 1 << 20)
    # Per-row: x & out tiles (double-buffered, native dtype) + f32 temporaries.
    per_row = 2 * 2 * d * itemsize + 6 * d * 4
    tm = cap
    while tm > 8 and tm * per_row > budget:
        tm //= 2
    if tm >= m:
        return m                        # single full block (always layout-legal)
    return max(8, (tm // 8) * 8)        # keep the sublane dim a multiple of 8


def prenorm_feedforward(x, p, *, block_m=None, vmem_limit_bytes=None):
    B, C, L, D = x.shape
    M = B * C * L
    if vmem_limit_bytes is None:
        vmem_limit_bytes = _default_vmem_limit()
    if block_m is None:
        # Bigger token tiles on v5e/v6e (128 MiB VMEM), conservative on v7x.
        block_m = 1024 if vmem_limit_bytes > (64 << 20) else 512
    x2 = x.reshape(M, D)
    tm = _choose_block_m(M, D, int(x.dtype.itemsize), block_m, vmem_limit_bytes)

    weight_bytes = sum(_nbytes(p[k]) for k in ("gamma", "beta", "w1", "b1", "w2", "b2"))
    cost = pl.CostEstimate(
        flops=int(4 * M * D * D),
        transcendentals=int(M * D + M),       # tanh-GELU + rsqrt
        bytes_accessed=int(2 * _nbytes(x2) + weight_bytes),
    )
    out2 = pl.pallas_call(
        _feedforward_kernel,
        out_shape=jax.ShapeDtypeStruct((M, D), x.dtype),
        grid=(pl.cdiv(M, tm),),
        in_specs=[
            pl.BlockSpec((tm, D), lambda i: (i, 0)),   # x tile (pipelined over tokens)
            _resident_spec((1, D)),                    # LN gamma
            _resident_spec((1, D)),                    # LN beta
            _resident_spec((D, D)),                    # W1
            _resident_spec((1, D)),                    # b1
            _resident_spec((D, D)),                    # W2
            _resident_spec((1, D)),                    # b2
        ],
        out_specs=pl.BlockSpec((tm, D), lambda i: (i, 0)),
        input_output_aliases={0: 0},                   # in-place residual update
        compiler_params=pltpu.CompilerParams(
            dimension_semantics=("parallel",),
            vmem_limit_bytes=vmem_limit_bytes,
        ),
        cost_estimate=cost,
    )(x2, p["gamma"], p["beta"], p["w1"], p["b1"], p["w2"], p["b2"])
    return out2.reshape(B, C, L, D)


def transformer_forward(x, params, *, scale, vmem_limit_bytes=None):
    for layer in params:
        x = prenorm_attention(x, layer["attn"], scale=scale,
                              vmem_limit_bytes=vmem_limit_bytes)
        x = prenorm_feedforward(x, layer["ff"],
                                vmem_limit_bytes=vmem_limit_bytes)
    return x


# --------------------------------------------------------------------------
# Parameters / distance matrix / pure-JAX reference
# --------------------------------------------------------------------------

def _distance_matrix(lenth):
    idx = jnp.arange(lenth, dtype=jnp.float32)
    d = idx[None, :] - idx[:, None]
    return d * d                              # |j - i| ** 2, shape (L, L)


def _init_layer(key, dim, lenth, channels, dtype=jnp.float32):
    ks = jax.random.split(key, 12)
    sd = 1.0 / float(dim) ** 0.5
    sl = 1.0 / float(lenth) ** 0.5
    attn = dict(
        gamma=jnp.ones((1, dim), dtype),
        beta=jnp.zeros((1, dim), dtype),
        wq=(jax.random.normal(ks[0], (dim, dim)) * sd).astype(dtype),
        wk=(jax.random.normal(ks[1], (dim, dim)) * sd).astype(dtype),
        wv=(jax.random.normal(ks[2], (dim, dim)) * sd).astype(dtype),
        pos=jax.random.normal(ks[3], (channels, lenth, lenth)).astype(dtype),
        wm1=(jax.random.normal(ks[4], (lenth, lenth)) * sl).astype(dtype),
        bm1=(jax.random.normal(ks[5], (1, lenth)) * 0.02).astype(dtype),
        wm2=(jax.random.normal(ks[6], (1, lenth)) * sl).astype(dtype),  # Linear(L,1) weight as a row
        bm2=(jax.random.normal(ks[7], (1, 1)) * 0.02).astype(dtype),
        wo=(jax.random.normal(ks[8], (dim, dim)) * sd).astype(dtype),
        bo=(jax.random.normal(ks[9], (1, dim)) * 0.02).astype(dtype),
    )
    ff = dict(
        gamma=jnp.ones((1, dim), dtype),
        beta=jnp.zeros((1, dim), dtype),
        w1=(jax.random.normal(ks[10], (dim, dim)) * sd).astype(dtype),
        b1=jnp.zeros((1, dim), dtype),
        w2=(jax.random.normal(ks[11], (dim, dim)) * sd).astype(dtype),
        b2=jnp.zeros((1, dim), dtype),
    )
    return dict(attn=attn, ff=ff)


def transformer_reference(x, params, dist, scale):
    for layer in params:
        a = layer["attn"]
        xf = x.astype(jnp.float32)
        y = _layer_norm_f32(xf, a["gamma"].astype(jnp.float32),
                            a["beta"].astype(jnp.float32)).astype(x.dtype)
        q = jnp.einsum("bcld,de->bcle", y, a["wq"], precision=_HP)
        k = jnp.einsum("bcld,de->bcle", y, a["wk"], precision=_HP)
        v = jnp.einsum("bcld,de->bcle", y, a["wv"], precision=_HP)
        dots = jnp.einsum("bcld,bcmd->bclm", q, k, precision=_HP) * scale
        attn1 = _softmax_ref(dots.astype(jnp.float32))
        attn_w = attn1 + a["pos"][None].astype(jnp.float32)
        h = jnp.einsum("bclm,mn->bcln", attn_w, a["wm1"].astype(jnp.float32),
                       precision=_HP) + a["bm1"].astype(jnp.float32)
        h = jnp.maximum(h, 0.0)
        w_var = (jnp.sum(h * a["wm2"].astype(jnp.float32), axis=-1, keepdims=True)
                 + a["bm2"].astype(jnp.float32))
        weight = jnp.exp(-dist[None, None] / (2.0 * w_var * w_var + VAR_EPS))
        attn2 = _softmax_ref(attn1 * weight)
        out = jnp.einsum("bclm,bcmd->bcld", attn2, v.astype(jnp.float32),
                         precision=_HP)
        out = jnp.einsum("bcld,de->bcle", out.astype(x.dtype), a["wo"],
                         precision=_HP) + a["bo"].astype(jnp.float32)
        x = (out + xf).astype(x.dtype)

        f = layer["ff"]
        xf = x.astype(jnp.float32)
        y = _layer_norm_f32(xf, f["gamma"].astype(jnp.float32),
                            f["beta"].astype(jnp.float32)).astype(x.dtype)
        h = _gelu(jnp.einsum("bcld,de->bcle", y, f["w1"], precision=_HP)
                  + f["b1"].astype(jnp.float32))
        out = jnp.einsum("bcld,de->bcle", h.astype(x.dtype), f["w2"],
                         precision=_HP) + f["b2"].astype(jnp.float32)
        x = (out + xf).astype(x.dtype)
    return x


# --------------------------------------------------------------------------
# Demo / self-check
# --------------------------------------------------------------------------

if __name__ == "__main__":
    # Small shapes consistent with Transformer(dim, lenth, channels, ...):
    # x: (batch, channels, lenth, dim).  At real ViT sizes D, L would be
    # 128-multiples; here the blocks equal the full (legal) array dims.
    B, C, L, D = 2, 4, 16, 32
    depth, heads, dim_head = 2, 8, 64          # heads unused by the forward
    scale = float(dim_head) ** -0.5

    key = jax.random.PRNGKey(0)
    kx, kp = jax.random.split(key)
    x = jax.random.normal(kx, (B, C, L, D), dtype=jnp.float32)

    params = [_init_layer(k, D, L, C, dtype=jnp.float32)
              for k in jax.random.split(kp, depth)]

    fwd = jax.jit(functools.partial(transformer_forward, scale=scale))
    out = fwd(x, params)
    jax.block_until_ready(out)

    dist = _distance_matrix(L)
    ref = transformer_reference(x, params, dist, scale)
    assert out.shape == x.shape and out.dtype == x.dtype
    err = float(jnp.max(jnp.abs(out.astype(jnp.float32) - ref.astype(jnp.float32))))
    assert jnp.allclose(out, ref, atol=1e-2, rtol=1e-2), f"max abs err {err}"
    print("KERNEL_OK")
</pallas_src>

<mosaic_0001>
module attributes {stable_mosaic.version = 11 : i64} {
  func.func @_feedforward_kernel(%arg0: i32, %arg1: memref<128x32xf32, #tpu.memory_space<vmem>>, %arg2: memref<1x32xf32, #tpu.memory_space<vmem>>, %arg3: memref<1x32xf32, #tpu.memory_space<vmem>>, %arg4: memref<32x32xf32, #tpu.memory_space<vmem>>, %arg5: memref<1x32xf32, #tpu.memory_space<vmem>>, %arg6: memref<32x32xf32, #tpu.memory_space<vmem>>, %arg7: memref<1x32xf32, #tpu.memory_space<vmem>>, %arg8: memref<128x32xf32, #tpu.memory_space<vmem>>) attributes {dimension_semantics = [#tpu.dimension_semantics<parallel>], iteration_bounds = array<i64: 1>, scalar_prefetch = 0 : i64, scratch_operands = 0 : i64, tpu.core_type = #tpu.core_type<tc>, window_params = [{transform_indices = @transform_0, window_bounds = array<i64: 128, 32>}, {pipeline_mode = #tpu.pipeline_mode<synchronous>, transform_indices = @transform_1, window_bounds = array<i64: 1, 32>}, {pipeline_mode = #tpu.pipeline_mode<synchronous>, transform_indices = @transform_2, window_bounds = array<i64: 1, 32>}, {pipeline_mode = #tpu.pipeline_mode<synchronous>, transform_indices = @transform_3, window_bounds = array<i64: 32, 32>}, {pipeline_mode = #tpu.pipeline_mode<synchronous>, transform_indices = @transform_4, window_bounds = array<i64: 1, 32>}, {pipeline_mode = #tpu.pipeline_mode<synchronous>, transform_indices = @transform_5, window_bounds = array<i64: 32, 32>}, {pipeline_mode = #tpu.pipeline_mode<synchronous>, transform_indices = @transform_6, window_bounds = array<i64: 1, 32>}, {transform_indices = @transform_7, window_bounds = array<i64: 128, 32>}]} {
    %c0 = arith.constant 0 : index
    %c0_0 = arith.constant 0 : index
    %0 = vector.load %arg1[%c0, %c0_0] : memref<128x32xf32, #tpu.memory_space<vmem>>, vector<128x32xf32>
    %c0_1 = arith.constant 0 : index
    %c0_2 = arith.constant 0 : index
    %1 = vector.load %arg2[%c0_1, %c0_2] : memref<1x32xf32, #tpu.memory_space<vmem>>, vector<1x32xf32>
    %c0_3 = arith.constant 0 : index
    %c0_4 = arith.constant 0 : index
    %2 = vector.load %arg3[%c0_3, %c0_4] : memref<1x32xf32, #tpu.memory_space<vmem>>, vector<1x32xf32>
    %cst = arith.constant dense<0.000000e+00> : vector<128xf32>
    %3 = vector.multi_reduction <add>, %0, %cst [1] : vector<128x32xf32> to vector<128xf32>
    %4 = vector.shape_cast %3 : vector<128xf32> to vector<128x1xf32>
    %cst_5 = arith.constant 3.200000e+01 : f32
    %5 = vector.broadcast %cst_5 : f32 to vector<128x1xf32>
    %6 = arith.divf %4, %5 : vector<128x1xf32>
    %7 = vector.broadcast %6 : vector<128x1xf32> to vector<128x32xf32>
    %8 = arith.subf %0, %7 : vector<128x32xf32>
    %9 = arith.mulf %8, %8 : vector<128x32xf32>
    %cst_6 = arith.constant dense<0.000000e+00> : vector<128xf32>
    %10 = vector.multi_reduction <add>, %9, %cst_6 [1] : vector<128x32xf32> to vector<128xf32>
    %11 = vector.shape_cast %10 : vector<128xf32> to vector<128x1xf32>
    %cst_7 = arith.constant 3.200000e+01 : f32
    %12 = vector.broadcast %cst_7 : f32 to vector<128x1xf32>
    %13 = arith.divf %11, %12 : vector<128x1xf32>
    %cst_8 = arith.constant 9.99999974E-6 : f32
    %14 = vector.broadcast %cst_8 : f32 to vector<128x1xf32>
    %15 = arith.addf %13, %14 : vector<128x1xf32>
    %16 = math.rsqrt %15 : vector<128x1xf32>
    %17 = vector.broadcast %16 : vector<128x1xf32> to vector<128x32xf32>
    %18 = arith.mulf %8, %17 : vector<128x32xf32>
    %19 = vector.broadcast %1 : vector<1x32xf32> to vector<128x32xf32>
    %20 = arith.mulf %18, %19 : vector<128x32xf32>
    %21 = vector.broadcast %2 : vector<1x32xf32> to vector<128x32xf32>
    %22 = arith.addf %20, %21 : vector<128x32xf32>
    %c0_9 = arith.constant 0 : index
    %c0_10 = arith.constant 0 : index
    %23 = vector.load %arg4[%c0_9, %c0_10] : memref<32x32xf32, #tpu.memory_space<vmem>>, vector<32x32xf32>
    %cst_11 = arith.constant dense<0.000000e+00> : vector<128x32xf32>
    %24 = tpu.matmul %22, %23, %cst_11 {dimension_numbers = #tpu.dot_dimension_numbers<[1], [0], [0], [1], [0, 0, 1, 1], [], []>} : vector<128x32xf32>, vector<32x32xf32>, vector<128x32xf32> -> vector<128x32xf32>
    %c0_12 = arith.constant 0 : index
    %c0_13 = arith.constant 0 : index
    %25 = vector.load %arg5[%c0_12, %c0_13] : memref<1x32xf32, #tpu.memory_space<vmem>>, vector<1x32xf32>
    %26 = vector.broadcast %25 : vector<1x32xf32> to vector<128x32xf32>
    %27 = arith.addf %24, %26 : vector<128x32xf32>
    %cst_14 = arith.constant 5.000000e-01 : f32
    %28 = vector.broadcast %cst_14 : f32 to vector<128x32xf32>
    %29 = arith.mulf %28, %27 : vector<128x32xf32>
    %cst_15 = arith.constant 4.471500e-02 : f32
    %30 = vector.broadcast %cst_15 : f32 to vector<128x32xf32>
    %31 = arith.mulf %30, %27 : vector<128x32xf32>
    %32 = arith.mulf %31, %27 : vector<128x32xf32>
    %33 = arith.mulf %32, %27 : vector<128x32xf32>
    %34 = arith.addf %27, %33 : vector<128x32xf32>
    %cst_16 = arith.constant 0.797884583 : f32
    %35 = vector.broadcast %cst_16 : f32 to vector<128x32xf32>
    %36 = arith.mulf %35, %34 : vector<128x32xf32>
    %37 = math.tanh %36 : vector<128x32xf32>
    %cst_17 = arith.constant 1.000000e+00 : f32
    %38 = vector.broadcast %cst_17 : f32 to vector<128x32xf32>
    %39 = arith.addf %38, %37 : vector<128x32xf32>
    %40 = arith.mulf %29, %39 : vector<128x32xf32>
    %c0_18 = arith.constant 0 : index
    %c0_19 = arith.constant 0 : index
    %41 = vector.load %arg6[%c0_18, %c0_19] : memref<32x32xf32, #tpu.memory_space<vmem>>, vector<32x32xf32>
    %cst_20 = arith.constant dense<0.000000e+00> : vector<128x32xf32>
    %42 = tpu.matmul %40, %41, %cst_20 {dimension_numbers = #tpu.dot_dimension_numbers<[1], [0], [0], [1], [0, 0, 1, 1], [], []>} : vector<128x32xf32>, vector<32x32xf32>, vector<128x32xf32> -> vector<128x32xf32>
    %c0_21 = arith.constant 0 : index
    %c0_22 = arith.constant 0 : index
    %43 = vector.load %arg7[%c0_21, %c0_22] : memref<1x32xf32, #tpu.memory_space<vmem>>, vector<1x32xf32>
    %44 = vector.broadcast %43 : vector<1x32xf32> to vector<128x32xf32>
    %45 = arith.addf %42, %44 : vector<128x32xf32>
    %c0_23 = arith.constant 0 : index
    %c0_24 = arith.constant 0 : index
    %46 = vector.load %arg1[%c0_23, %c0_24] : memref<128x32xf32, #tpu.memory_space<vmem>>, vector<128x32xf32>
    %47 = arith.addf %45, %46 : vector<128x32xf32>
    %c0_25 = arith.constant 0 : index
    %c0_26 = arith.constant 0 : index
    %48 = vector.load %arg8[%c0_25, %c0_26] : memref<128x32xf32, #tpu.memory_space<vmem>>, vector<128x32xf32>
    tpu.vector_store %arg8[%c0_25, %c0_26], %47 {strides = array<i32>} : memref<128x32xf32, #tpu.memory_space<vmem>>, vector<128x32xf32>,
    return
  }
  func.func @transform_0(%arg0: i32) -> (i32, i32) {
    %c0_i32 = arith.constant 0 : i32
    %c0_i32_0 = arith.constant 0 : i32
    return %arg0, %c0_i32 : i32, i32
  }
  func.func @transform_1(%arg0: i32) -> (i32, i32) {
    %c0_i32 = arith.constant 0 : i32
    %c0_i32_0 = arith.constant 0 : i32
    %c0_i32_1 = arith.constant 0 : i32
    return %c0_i32, %c0_i32_0 : i32, i32
  }
  func.func @transform_2(%arg0: i32) -> (i32, i32) {
    %c0_i32 = arith.constant 0 : i32
    %c0_i32_0 = arith.constant 0 : i32
    %c0_i32_1 = arith.constant 0 : i32
    return %c0_i32, %c0_i32_0 : i32, i32
  }
  func.func @transform_3(%arg0: i32) -> (i32, i32) {
    %c0_i32 = arith.constant 0 : i32
    %c0_i32_0 = arith.constant 0 : i32
    %c0_i32_1 = arith.constant 0 : i32
    return %c0_i32, %c0_i32_0 : i32, i32
  }
  func.func @transform_4(%arg0: i32) -> (i32, i32) {
    %c0_i32 = arith.constant 0 : i32
    %c0_i32_0 = arith.constant 0 : i32
    %c0_i32_1 = arith.constant 0 : i32
    return %c0_i32, %c0_i32_0 : i32, i32
  }
  func.func @transform_5(%arg0: i32) -> (i32, i32) {
    %c0_i32 = arith.constant 0 : i32
    %c0_i32_0 = arith.constant 0 : i32
    %c0_i32_1 = arith.constant 0 : i32
    return %c0_i32, %c0_i32_0 : i32, i32
  }
  func.func @transform_6(%arg0: i32) -> (i32, i32) {
    %c0_i32 = arith.constant 0 : i32
    %c0_i32_0 = arith.constant 0 : i32
    %c0_i32_1 = arith.constant 0 : i32
    return %c0_i32, %c0_i32_0 : i32, i32
  }
  func.func @transform_7(%arg0: i32) -> (i32, i32) {
    %c0_i32 = arith.constant 0 : i32
    %c0_i32_0 = arith.constant 0 : i32
    return %arg0, %c0_i32 : i32, i32
  }
}

module attributes {stable_mosaic.version = 11 : i64} {
  func.func @_attention_kernel(%arg0: i32, %arg1: i32, %arg2: memref<1x4x16x32xf32, #tpu.memory_space<vmem>>, %arg3: memref<1x32xf32, #tpu.memory_space<vmem>>, %arg4: memref<1x32xf32, #tpu.memory_space<vmem>>, %arg5: memref<32x32xf32, #tpu.memory_space<vmem>>, %arg6: memref<32x32xf32, #tpu.memory_space<vmem>>, %arg7: memref<32x32xf32, #tpu.memory_space<vmem>>, %arg8: memref<4x16x16xf32, #tpu.memory_space<vmem>>, %arg9: memref<16x16xf32, #tpu.memory_space<vmem>>, %arg10: memref<1x16xf32, #tpu.memory_space<vmem>>, %arg11: memref<1x16xf32, #tpu.memory_space<vmem>>, %arg12: memref<1x1xf32, #tpu.memory_space<vmem>>, %arg13: memref<32x32xf32, #tpu.memory_space<vmem>>, %arg14: memref<1x32xf32, #tpu.memory_space<vmem>>, %arg15: memref<1x4x16x32xf32, #tpu.memory_space<vmem>>) attributes {dimension_semantics = [#tpu.dimension_semantics<parallel>, #tpu.dimension_semantics<parallel>], iteration_bounds = array<i64: 1, 2>, scalar_prefetch = 0 : i64, scratch_operands = 0 : i64, tpu.core_type = #tpu.core_type<tc>, window_params = [{transform_indices = @transform_0, window_bounds = array<i64: 1, 4, 16, 32>}, {pipeline_mode = #tpu.pipeline_mode<synchronous>, transform_indices = @transform_1, window_bounds = array<i64: 1, 32>}, {pipeline_mode = #tpu.pipeline_mode<synchronous>, transform_indices = @transform_2, window_bounds = array<i64: 1, 32>}, {pipeline_mode = #tpu.pipeline_mode<synchronous>, transform_indices = @transform_3, window_bounds = array<i64: 32, 32>}, {pipeline_mode = #tpu.pipeline_mode<synchronous>, transform_indices = @transform_4, window_bounds = array<i64: 32, 32>}, {pipeline_mode = #tpu.pipeline_mode<synchronous>, transform_indices = @transform_5, window_bounds = array<i64: 32, 32>}, {transform_indices = @transform_6, window_bounds = array<i64: 4, 16, 16>}, {pipeline_mode = #tpu.pipeline_mode<synchronous>, transform_indices = @transform_7, window_bounds = array<i64: 16, 16>}, {pipeline_mode = #tpu.pipeline_mode<synchronous>, transform_indices = @transform_8, window_bounds = array<i64: 1, 16>}, {pipeline_mode = #tpu.pipeline_mode<synchronous>, transform_indices = @transform_9, window_bounds = array<i64: 1, 16>}, {pipeline_mode = #tpu.pipeline_mode<synchronous>, transform_indices = @transform_10, window_bounds = array<i64: 1, 1>}, {pipeline_mode = #tpu.pipeline_mode<synchronous>, transform_indices = @transform_11, window_bounds = array<i64: 32, 32>}, {pipeline_mode = #tpu.pipeline_mode<synchronous>, transform_indices = @transform_12, window_bounds = array<i64: 1, 32>}, {transform_indices = @transform_13, window_bounds = array<i64: 1, 4, 16, 32>}]} {
    %c0 = arith.constant 0 : index
    %c0_0 = arith.constant 0 : index
    %c0_1 = arith.constant 0 : index
    %c0_2 = arith.constant 0 : index
    %0 = vector.load %arg2[%c0, %c0_0, %c0_1, %c0_2] : memref<1x4x16x32xf32, #tpu.memory_space<vmem>>, vector<1x4x16x32xf32>
    %1 = vector.shape_cast %0 : vector<1x4x16x32xf32> to vector<4x16x32xf32>
    %2 = vector.shape_cast %1 : vector<4x16x32xf32> to vector<64x32xf32>
    %c0_3 = arith.constant 0 : index
    %c0_4 = arith.constant 0 : index
    %3 = vector.load %arg3[%c0_3, %c0_4] : memref<1x32xf32, #tpu.memory_space<vmem>>, vector<1x32xf32>
    %c0_5 = arith.constant 0 : index
    %c0_6 = arith.constant 0 : index
    %4 = vector.load %arg4[%c0_5, %c0_6] : memref<1x32xf32, #tpu.memory_space<vmem>>, vector<1x32xf32>
    %cst = arith.constant dense<0.000000e+00> : vector<64xf32>
    %5 = vector.multi_reduction <add>, %2, %cst [1] : vector<64x32xf32> to vector<64xf32>
    %6 = vector.shape_cast %5 : vector<64xf32> to vector<64x1xf32>
    %cst_7 = arith.constant 3.200000e+01 : f32
    %7 = vector.broadcast %cst_7 : f32 to vector<64x1xf32>
    %8 = arith.divf %6, %7 : vector<64x1xf32>
    %9 = vector.broadcast %8 : vector<64x1xf32> to vector<64x32xf32>
    %10 = arith.subf %2, %9 : vector<64x32xf32>
    %11 = arith.mulf %10, %10 : vector<64x32xf32>
    %cst_8 = arith.constant dense<0.000000e+00> : vector<64xf32>
    %12 = vector.multi_reduction <add>, %11, %cst_8 [1] : vector<64x32xf32> to vector<64xf32>
    %13 = vector.shape_cast %12 : vector<64xf32> to vector<64x1xf32>
    %cst_9 = arith.constant 3.200000e+01 : f32
    %14 = vector.broadcast %cst_9 : f32 to vector<64x1xf32>
    %15 = arith.divf %13, %14 : vector<64x1xf32>
    %cst_10 = arith.constant 9.99999974E-6 : f32
    %16 = vector.broadcast %cst_10 : f32 to vector<64x1xf32>
    %17 = arith.addf %15, %16 : vector<64x1xf32>
    %18 = math.rsqrt %17 : vector<64x1xf32>
    %19 = vector.broadcast %18 : vector<64x1xf32> to vector<64x32xf32>
    %20 = arith.mulf %10, %19 : vector<64x32xf32>
    %21 = vector.broadcast %3 : vector<1x32xf32> to vector<64x32xf32>
    %22 = arith.mulf %20, %21 : vector<64x32xf32>
    %23 = vector.broadcast %4 : vector<1x32xf32> to vector<64x32xf32>
    %24 = arith.addf %22, %23 : vector<64x32xf32>
    %c0_11 = arith.constant 0 : index
    %c0_12 = arith.constant 0 : index
    %25 = vector.load %arg5[%c0_11, %c0_12] : memref<32x32xf32, #tpu.memory_space<vmem>>, vector<32x32xf32>
    %cst_13 = arith.constant dense<0.000000e+00> : vector<64x32xf32>
    %26 = tpu.matmul %24, %25, %cst_13 {dimension_numbers = #tpu.dot_dimension_numbers<[1], [0], [0], [1], [0, 0, 1, 1], [], []>} : vector<64x32xf32>, vector<32x32xf32>, vector<64x32xf32> -> vector<64x32xf32>
    %cst_14 = arith.constant 1.250000e-01 : f32
    %27 = vector.broadcast %cst_14 : f32 to vector<64x32xf32>
    %28 = arith.mulf %26, %27 : vector<64x32xf32>
    %c0_15 = arith.constant 0 : index
    %c0_16 = arith.constant 0 : index
    %29 = vector.load %arg6[%c0_15, %c0_16] : memref<32x32xf32, #tpu.memory_space<vmem>>, vector<32x32xf32>
    %cst_17 = arith.constant dense<0.000000e+00> : vector<64x32xf32>
    %30 = tpu.matmul %24, %29, %cst_17 {dimension_numbers = #tpu.dot_dimension_numbers<[1], [0], [0], [1], [0, 0, 1, 1], [], []>} : vector<64x32xf32>, vector<32x32xf32>, vector<64x32xf32> -> vector<64x32xf32>
    %c0_18 = arith.constant 0 : index
    %c0_19 = arith.constant 0 : index
    %31 = vector.load %arg7[%c0_18, %c0_19] : memref<32x32xf32, #tpu.memory_space<vmem>>, vector<32x32xf32>
    %cst_20 = arith.constant dense<0.000000e+00> : vector<64x32xf32>
    %32 = tpu.matmul %24, %31, %cst_20 {dimension_numbers = #tpu.dot_dimension_numbers<[1], [0], [0], [1], [0, 0, 1, 1], [], []>} : vector<64x32xf32>, vector<32x32xf32>, vector<64x32xf32> -> vector<64x32xf32>
    %33 = vector.shape_cast %28 : vector<64x32xf32> to vector<4x16x32xf32>
    %34 = vector.shape_cast %30 : vector<64x32xf32> to vector<4x16x32xf32>
    %35 = vector.shape_cast %32 : vector<64x32xf32> to vector<4x16x32xf32>
    %cst_21 = arith.constant dense<0.000000e+00> : vector<4x16x16xf32>
    %36 = tpu.matmul %33, %34, %cst_21 {dimension_numbers = #tpu.dot_dimension_numbers<[2], [2], [1], [1], [0, 0, 0, 1, 1, 1], [0], [0]>} : vector<4x16x32xf32>, vector<4x16x32xf32>, vector<4x16x16xf32> -> vector<4x16x16xf32>
    %cst_22 = arith.constant dense<0xFF800000> : vector<4x16xf32>
    %37 = vector.multi_reduction <maximumf>, %36, %cst_22 [2] : vector<4x16x16xf32> to vector<4x16xf32>
    %38 = vector.shape_cast %37 : vector<4x16xf32> to vector<4x16x1xf32>
    %39 = vector.broadcast %38 : vector<4x16x1xf32> to vector<4x16x16xf32>
    %40 = arith.subf %36, %39 : vector<4x16x16xf32>
    %41 = math.exp %40 : vector<4x16x16xf32>
    %cst_23 = arith.constant dense<0.000000e+00> : vector<4x16xf32>
    %42 = vector.multi_reduction <add>, %41, %cst_23 [2] : vector<4x16x16xf32> to vector<4x16xf32>
    %43 = vector.shape_cast %42 : vector<4x16xf32> to vector<4x16x1xf32>
    %44 = tpu.reciprocal %43 {approx = true} : vector<4x16x1xf32> -> vector<4x16x1xf32>
    %45 = vector.broadcast %44 : vector<4x16x1xf32> to vector<4x16x16xf32>
    %46 = arith.mulf %41, %45 : vector<4x16x16xf32>
    %c0_24 = arith.constant 0 : index
    %c0_25 = arith.constant 0 : index
    %c0_26 = arith.constant 0 : index
    %47 = vector.load %arg8[%c0_24, %c0_25, %c0_26] : memref<4x16x16xf32, #tpu.memory_space<vmem>>, vector<4x16x16xf32>
    %48 = arith.addf %46, %47 : vector<4x16x16xf32>
    %49 = vector.shape_cast %48 : vector<4x16x16xf32> to vector<64x16xf32>
    %c0_27 = arith.constant 0 : index
    %c0_28 = arith.constant 0 : index
    %50 = vector.load %arg9[%c0_27, %c0_28] : memref<16x16xf32, #tpu.memory_space<vmem>>, vector<16x16xf32>
    %cst_29 = arith.constant dense<0.000000e+00> : vector<64x16xf32>
    %51 = tpu.matmul %49, %50, %cst_29 {dimension_numbers = #tpu.dot_dimension_numbers<[1], [0], [0], [1], [0, 0, 1, 1], [], []>} : vector<64x16xf32>, vector<16x16xf32>, vector<64x16xf32> -> vector<64x16xf32>
    %c0_30 = arith.constant 0 : index
    %c0_31 = arith.constant 0 : index
    %52 = vector.load %arg10[%c0_30, %c0_31] : memref<1x16xf32, #tpu.memory_space<vmem>>, vector<1x16xf32>
    %53 = vector.broadcast %52 : vector<1x16xf32> to vector<64x16xf32>
    %54 = arith.addf %51, %53 : vector<64x16xf32>
    %cst_32 = arith.constant 0.000000e+00 : f32
    %55 = vector.broadcast %cst_32 : f32 to vector<64x16xf32>
    %56 = arith.maximumf %54, %55 : vector<64x16xf32>
    %57 = vector.shape_cast %56 : vector<64x16xf32> to vector<4x16x16xf32>
    %c0_33 = arith.constant 0 : index
    %c0_34 = arith.constant 0 : index
    %58 = vector.load %arg11[%c0_33, %c0_34] : memref<1x16xf32, #tpu.memory_space<vmem>>, vector<1x16xf32>
    %59 = vector.shape_cast %58 : vector<1x16xf32> to vector<1x1x16xf32>
    %60 = vector.broadcast %59 : vector<1x1x16xf32> to vector<4x16x16xf32>
    %61 = arith.mulf %57, %60 : vector<4x16x16xf32>
    %cst_35 = arith.constant dense<0.000000e+00> : vector<4x16xf32>
    %62 = vector.multi_reduction <add>, %61, %cst_35 [2] : vector<4x16x16xf32> to vector<4x16xf32>
    %63 = vector.shape_cast %62 : vector<4x16xf32> to vector<4x16x1xf32>
    %c0_36 = arith.constant 0 : index
    %c0_37 = arith.constant 0 : index
    %64 = vector.load %arg12[%c0_36, %c0_37] : memref<1x1xf32, #tpu.memory_space<vmem>>, vector<1x1xf32>
    %65 = vector.shape_cast %64 : vector<1x1xf32> to vector<1x1x1xf32>
    %66 = vector.broadcast %65 : vector<1x1x1xf32> to vector<4x16x1xf32>
    %67 = arith.addf %63, %66 : vector<4x16x1xf32>
    %68 = tpu.iota {dimensions = array<i32: 0>} : vector<16x16xi32>
    %69 = tpu.iota {dimensions = array<i32: 1>} : vector<16x16xi32>
    %70 = arith.subi %69, %68 : vector<16x16xi32>
    %71 = arith.sitofp %70 : vector<16x16xi32> to vector<16x16xf32>
    %72 = arith.mulf %71, %71 : vector<16x16xf32>
    %cst_38 = arith.constant 2.000000e+00 : f32
    %73 = vector.broadcast %cst_38 : f32 to vector<4x16x1xf32>
    %74 = arith.mulf %73, %67 : vector<4x16x1xf32>
    %75 = arith.mulf %74, %67 : vector<4x16x1xf32>
    %cst_39 = arith.constant 9.99999997E-7 : f32
    %76 = vector.broadcast %cst_39 : f32 to vector<4x16x1xf32>
    %77 = arith.addf %75, %76 : vector<4x16x1xf32>
    %78 = tpu.reciprocal %77 {approx = true} : vector<4x16x1xf32> -> vector<4x16x1xf32>
    %79 = vector.shape_cast %72 : vector<16x16xf32> to vector<1x16x16xf32>
    %80 = vector.broadcast %79 : vector<1x16x16xf32> to vector<4x16x16xf32>
    %81 = vector.broadcast %78 : vector<4x16x1xf32> to vector<4x16x16xf32>
    %82 = arith.mulf %80, %81 : vector<4x16x16xf32>
    %cst_40 = arith.constant 0.000000e+00 : f32
    %83 = vector.broadcast %cst_40 : f32 to vector<4x16x16xf32>
    %84 = arith.subf %83, %82 : vector<4x16x16xf32>
    %85 = math.exp %84 : vector<4x16x16xf32>
    %86 = arith.mulf %46, %85 : vector<4x16x16xf32>
    %cst_41 = arith.constant dense<0xFF800000> : vector<4x16xf32>
    %87 = vector.multi_reduction <maximumf>, %86, %cst_41 [2] : vector<4x16x16xf32> to vector<4x16xf32>
    %88 = vector.shape_cast %87 : vector<4x16xf32> to vector<4x16x1xf32>
    %89 = vector.broadcast %88 : vector<4x16x1xf32> to vector<4x16x16xf32>
    %90 = arith.subf %86, %89 : vector<4x16x16xf32>
    %91 = math.exp %90 : vector<4x16x16xf32>
    %cst_42 = arith.constant dense<0.000000e+00> : vector<4x16xf32>
    %92 = vector.multi_reduction <add>, %91, %cst_42 [2] : vector<4x16x16xf32> to vector<4x16xf32>
    %93 = vector.shape_cast %92 : vector<4x16xf32> to vector<4x16x1xf32>
    %94 = tpu.reciprocal %93 {approx = true} : vector<4x16x1xf32> -> vector<4x16x1xf32>
    %95 = vector.broadcast %94 : vector<4x16x1xf32> to vector<4x16x16xf32>
    %96 = arith.mulf %91, %95 : vector<4x16x16xf32>
    %cst_43 = arith.constant dense<0.000000e+00> : vector<4x16x32xf32>
    %97 = tpu.matmul %96, %35, %cst_43 {dimension_numbers = #tpu.dot_dimension_numbers<[2], [1], [1], [2], [0, 0, 0, 1, 1, 2], [0], [0]>} : vector<4x16x16xf32>, vector<4x16x32xf32>, vector<4x16x32xf32> -> vector<4x16x32xf32>
    %98 = vector.shape_cast %97 : vector<4x16x32xf32> to vector<64x32xf32>
    %c0_44 = arith.constant 0 : index
    %c0_45 = arith.constant 0 : index
    %99 = vector.load %arg13[%c0_44, %c0_45] : memref<32x32xf32, #tpu.memory_space<vmem>>, vector<32x32xf32>
    %cst_46 = arith.constant dense<0.000000e+00> : vector<64x32xf32>
    %100 = tpu.matmul %98, %99, %cst_46 {dimension_numbers = #tpu.dot_dimension_numbers<[1], [0], [0], [1], [0, 0, 1, 1], [], []>} : vector<64x32xf32>, vector<32x32xf32>, vector<64x32xf32> -> vector<64x32xf32>
    %c0_47 = arith.constant 0 : index
    %c0_48 = arith.constant 0 : index
    %101 = vector.load %arg14[%c0_47, %c0_48] : memref<1x32xf32, #tpu.memory_space<vmem>>, vector<1x32xf32>
    %102 = vector.broadcast %101 : vector<1x32xf32> to vector<64x32xf32>
    %103 = arith.addf %100, %102 : vector<64x32xf32>
    %c0_49 = arith.constant 0 : index
    %c0_50 = arith.constant 0 : index
    %c0_51 = arith.constant 0 : index
    %c0_52 = arith.constant 0 : index
    %104 = vector.load %arg2[%c0_49, %c0_50, %c0_51, %c0_52] : memref<1x4x16x32xf32, #tpu.memory_space<vmem>>, vector<1x4x16x32xf32>
    %105 = vector.shape_cast %104 : vector<1x4x16x32xf32> to vector<4x16x32xf32>
    %106 = vector.shape_cast %105 : vector<4x16x32xf32> to vector<64x32xf32>
    %107 = arith.addf %103, %106 : vector<64x32xf32>
    %108 = vector.shape_cast %107 : vector<64x32xf32> to vector<4x16x32xf32>
    %c0_53 = arith.constant 0 : index
    %c0_54 = arith.constant 0 : index
    %c0_55 = arith.constant 0 : index
    %c0_56 = arith.constant 0 : index
    %109 = vector.load %arg15[%c0_53, %c0_54, %c0_55, %c0_56] : memref<1x4x16x32xf32, #tpu.memory_space<vmem>>, vector<1x4x16x32xf32>
    %110 = vector.shape_cast %109 : vector<1x4x16x32xf32> to vector<4x16x32xf32>
    %111 = vector.shape_cast %108 : vector<4x16x32xf32> to vector<1x4x16x32xf32>
    tpu.vector_store %arg15[%c0_53, %c0_54, %c0_55, %c0_56], %111 {strides = array<i32>} : memref<1x4x16x32xf32, #tpu.memory_space<vmem>>, vector<1x4x16x32xf32>,
    return
  }
  func.func @transform_0(%arg0: i32, %arg1: i32) -> (i32, i32, i32, i32) {
    %c0_i32 = arith.constant 0 : i32
    %c0_i32_0 = arith.constant 0 : i32
    %c0_i32_1 = arith.constant 0 : i32
    return %arg1, %arg0, %c0_i32, %c0_i32_0 : i32, i32, i32, i32
  }
  func.func @transform_1(%arg0: i32, %arg1: i32) -> (i32, i32) {
    %c0_i32 = arith.constant 0 : i32
    %c0_i32_0 = arith.constant 0 : i32
    %c0_i32_1 = arith.constant 0 : i32
    return %c0_i32, %c0_i32_0 : i32, i32
  }
  func.func @transform_2(%arg0: i32, %arg1: i32) -> (i32, i32) {
    %c0_i32 = arith.constant 0 : i32
    %c0_i32_0 = arith.constant 0 : i32
    %c0_i32_1 = arith.constant 0 : i32
    return %c0_i32, %c0_i32_0 : i32, i32
  }
  func.func @transform_3(%arg0: i32, %arg1: i32) -> (i32, i32) {
    %c0_i32 = arith.constant 0 : i32
    %c0_i32_0 = arith.constant 0 : i32
    %c0_i32_1 = arith.constant 0 : i32
    return %c0_i32, %c0_i32_0 : i32, i32
  }
  func.func @transform_4(%arg0: i32, %arg1: i32) -> (i32, i32) {
    %c0_i32 = arith.constant 0 : i32
    %c0_i32_0 = arith.constant 0 : i32
    %c0_i32_1 = arith.constant 0 : i32
    return %c0_i32, %c0_i32_0 : i32, i32
  }
  func.func @transform_5(%arg0: i32, %arg1: i32) -> (i32, i32) {
    %c0_i32 = arith.constant 0 : i32
    %c0_i32_0 = arith.constant 0 : i32
    %c0_i32_1 = arith.constant 0 : i32
    return %c0_i32, %c0_i32_0 : i32, i32
  }
  func.func @transform_6(%arg0: i32, %arg1: i32) -> (i32, i32, i32) {
    %c0_i32 = arith.constant 0 : i32
    %c0_i32_0 = arith.constant 0 : i32
    %c0_i32_1 = arith.constant 0 : i32
    return %arg0, %c0_i32, %c0_i32_0 : i32, i32, i32
  }
  func.func @transform_7(%arg0: i32, %arg1: i32) -> (i32, i32) {
    %c0_i32 = arith.constant 0 : i32
    %c0_i32_0 = arith.constant 0 : i32
    %c0_i32_1 = arith.constant 0 : i32
    return %c0_i32, %c0_i32_0 : i32, i32
  }
  func.func @transform_8(%arg0: i32, %arg1: i32) -> (i32, i32) {
    %c0_i32 = arith.constant 0 : i32
    %c0_i32_0 = arith.constant 0 : i32
    %c0_i32_1 = arith.constant 0 : i32
    return %c0_i32, %c0_i32_0 : i32, i32
  }
  func.func @transform_9(%arg0: i32, %arg1: i32) -> (i32, i32) {
    %c0_i32 = arith.constant 0 : i32
    %c0_i32_0 = arith.constant 0 : i32
    %c0_i32_1 = arith.constant 0 : i32
    return %c0_i32, %c0_i32_0 : i32, i32
  }
  func.func @transform_10(%arg0: i32, %arg1: i32) -> (i32, i32) {
    %c0_i32 = arith.constant 0 : i32
    %c0_i32_0 = arith.constant 0 : i32
    %c0_i32_1 = arith.constant 0 : i32
    return %c0_i32, %c0_i32_0 : i32, i32
  }
  func.func @transform_11(%arg0: i32, %arg1: i32) -> (i32, i32) {
    %c0_i32 = arith.constant 0 : i32
    %c0_i32_0 = arith.constant 0 : i32
    %c0_i32_1 = arith.constant 0 : i32
    return %c0_i32, %c0_i32_0 : i32, i32
  }
  func.func @transform_12(%arg0: i32, %arg1: i32) -> (i32, i32) {
    %c0_i32 = arith.constant 0 : i32
    %c0_i32_0 = arith.constant 0 : i32
    %c0_i32_1 = arith.constant 0 : i32
    return %c0_i32, %c0_i32_0 : i32, i32
  }
  func.func @transform_13(%arg0: i32, %arg1: i32) -> (i32, i32, i32, i32) {
    %c0_i32 = arith.constant 0 : i32
    %c0_i32_0 = arith.constant 0 : i32
    %c0_i32_1 = arith.constant 0 : i32
    return %arg1, %arg0, %c0_i32, %c0_i32_0 : i32, i32, i32, i32
  }
}

</mosaic_0001>

<llo_original>
// kernel: transformer_forward.5
$region0: #{transformer_forward.5}
  #allocation0 [shape = 'u32[]', space=smem, size = 0x4, offset = 0x4, fixed_abs, tag = 'smem constant byte address 0x4 - core index']
  #allocation1 [shape = 'u32[144,128]{1,0:T(1,128)}', space=vmem, size = 0x12000, scoped, tag = 'internal scratch']
  %s0 = inlined_call_operand.vmem [shape: f32[128,32], index: 0, kind: input, shape index: {}, may-alias: {0,7}]
  %s1 = inlined_call_operand.vmem [shape: f32[1,32], index: 1, kind: input, shape index: {}]
  %s2 = inlined_call_operand.vmem [shape: f32[1,32], index: 2, kind: input, shape index: {}]
  %s3 = inlined_call_operand.vmem [shape: f32[32,32], index: 3, kind: input, shape index: {}]
  %s4 = inlined_call_operand.vmem [shape: f32[1,32], index: 4, kind: input, shape index: {}]
  %s5 = inlined_call_operand.vmem [shape: f32[32,32], index: 5, kind: input, shape index: {}]
  %s6 = inlined_call_operand.vmem [shape: f32[1,32], index: 6, kind: input, shape index: {}]
  %s7 = inlined_call_operand.vmem [shape: f32[128,32], index: 7, kind: output, shape index: {}, may-alias: {0,7}]
  %s8 = sld [smem:[#allocation0]]
  $region38: #{transformer_forward.5} parent=0
    _
  %s10 = ssub.s32 1, %s8
  %s11 = scalar_select 0, %s10, %s8
  // Predicated region
  $region2: #{transformer_forward.5} parent=0 // pred_check
    _
  $region3: #{transformer_forward.5} parent=0 // pred_check_branch
    %13 = sbr.rel (0) target = $region5
  $region4: #{transformer_forward.5} parent=0 // pred_region
    _
  $region5: #{transformer_forward.5} parent=0 // pred_fallthru
    _
  // Predicated region
  $region6: #{transformer_forward.5} parent=0 // pred_check
    _
  $region7: #{transformer_forward.5} parent=0 // pred_check_branch
    %15 = sbr.rel (0) target = $region9
  $region8: #{transformer_forward.5} parent=0 // pred_region
    _
  $region9: #{transformer_forward.5} parent=0 // pred_fallthru
    _
  // Predicated region
  $region10: #{transformer_forward.5} parent=0 // pred_check
    _
  $region11: #{transformer_forward.5} parent=0 // pred_check_branch
    %17 = sbr.rel (0) target = $region13
  $region12: #{transformer_forward.5} parent=0 // pred_region
    _
  $region13: #{transformer_forward.5} parent=0 // pred_fallthru
    _
  // Predicated region
  $region14: #{transformer_forward.5} parent=0 // pred_check
    _
  $region15: #{transformer_forward.5} parent=0 // pred_check_branch
    %19 = sbr.rel (0) target = $region17
  $region16: #{transformer_forward.5} parent=0 // pred_region
    _
  $region17: #{transformer_forward.5} parent=0 // pred_fallthru
    _
  // Predicated region
  $region18: #{transformer_forward.5} parent=0 // pred_check
    _
  $region19: #{transformer_forward.5} parent=0 // pred_check_branch
    %21 = sbr.rel (0) target = $region21
  $region20: #{transformer_forward.5} parent=0 // pred_region
    _
  $region21: #{transformer_forward.5} parent=0 // pred_fallthru
    _
  // Predicated region
  $region22: #{transformer_forward.5} parent=0 // pred_check
    _
  $region23: #{transformer_forward.5} parent=0 // pred_check_branch
    %23 = sbr.rel (0) target = $region25
  $region24: #{transformer_forward.5} parent=0 // pred_region
    _
  $region25: #{transformer_forward.5} parent=0 // pred_fallthru
    _
  // Predicated region
  $region26: #{transformer_forward.5} parent=0 // pred_check
    _
  $region27: #{transformer_forward.5} parent=0 // pred_check_branch
    %25 = sbr.rel (0) target = $region29
  $region28: #{transformer_forward.5} parent=0 // pred_region
    _
  $region29: #{transformer_forward.5} parent=0 // pred_fallthru
    _
  %v26 = vld [vmem:[%s0] sm:$0xff]
  %v27 = vld [vmem:[%s0 + $0x8] sm:$0xff]
  %v28 = vld [vmem:[%s0 + $0x10] sm:$0xff]
  %v29 = vld [vmem:[%s0 + $0x18] sm:$0xff]
  %v30 = vld [vmem:[%s0 + $0x20] sm:$0xff]
  %v31 = vld [vmem:[%s0 + $0x28] sm:$0xff]
  %v32 = vld [vmem:[%s0 + $0x30] sm:$0xff]
  %v33 = vld [vmem:[%s0 + $0x38] sm:$0xff]
  %v34 = vld [vmem:[%s0 + $0x40] sm:$0xff]
  %v35 = vld [vmem:[%s0 + $0x48] sm:$0xff]
  %v36 = vld [vmem:[%s0 + $0x50] sm:$0xff]
  %v37 = vld [vmem:[%s0 + $0x58] sm:$0xff]
  %v38 = vld [vmem:[%s0 + $0x60] sm:$0xff]
  %v39 = vld [vmem:[%s0 + $0x68] sm:$0xff]
  %v40 = vld [vmem:[%s0 + $0x70] sm:$0xff]
  %v41 = vld [vmem:[%s0 + $0x78] sm:$0xff]
  %v42 = vld [vmem:[%s1] sm:$0x1]
  %v43 = vld [vmem:[%s2] sm:$0x1]
  %vm44 = vcmask 261120
  %v45 = vsel %vm44, %v26, 0.0
  %46 = vadd.xlane.f32.xlu0 %v45
  %v47 = vpop.xlane.xlu0 %46
  %v48 = vsel %vm44, %v27, 0.0
  %49 = vadd.xlane.f32.xlu0 %v48
  %v50 = vpop.xlane.xlu0 %49
  %v51 = vsel %vm44, %v28, 0.0
  %52 = vadd.xlane.f32.xlu0 %v51
  %v53 = vpop.xlane.xlu0 %52
  %v54 = vsel %vm44, %v29, 0.0
  %55 = vadd.xlane.f32.xlu0 %v54
  %v56 = vpop.xlane.xlu0 %55
  %v57 = vsel %vm44, %v30, 0.0
  %58 = vadd.xlane.f32.xlu0 %v57
  %v59 = vpop.xlane.xlu0 %58
  %v60 = vsel %vm44, %v31, 0.0
  %61 = vadd.xlane.f32.xlu0 %v60
  %v62 = vpop.xlane.xlu0 %61
  %v63 = vsel %vm44, %v32, 0.0
  %64 = vadd.xlane.f32.xlu0 %v63
  %v65 = vpop.xlane.xlu0 %64
  %v66 = vsel %vm44, %v33, 0.0
  %67 = vadd.xlane.f32.xlu0 %v66
  %v68 = vpop.xlane.xlu0 %67
  %v69 = vsel %vm44, %v34, 0.0
  %70 = vadd.xlane.f32.xlu0 %v69
  %v71 = vpop.xlane.xlu0 %70
  %v72 = vsel %vm44, %v35, 0.0
  %73 = vadd.xlane.f32.xlu0 %v72
  %v74 = vpop.xlane.xlu0 %73
  %v75 = vsel %vm44, %v36, 0.0
  %76 = vadd.xlane.f32.xlu0 %v75
  %v77 = vpop.xlane.xlu0 %76
  %v78 = vsel %vm44, %v37, 0.0
  %79 = vadd.xlane.f32.xlu0 %v78
  %v80 = vpop.xlane.xlu0 %79
  %v81 = vsel %vm44, %v38, 0.0
  %82 = vadd.xlane.f32.xlu0 %v81
  %v83 = vpop.xlane.xlu0 %82
  %v84 = vsel %vm44, %v39, 0.0
  %85 = vadd.xlane.f32.xlu0 %v84
  %v86 = vpop.xlane.xlu0 %85
  %v87 = vsel %vm44, %v40, 0.0
  %88 = vadd.xlane.f32.xlu0 %v87
  %v89 = vpop.xlane.xlu0 %88
  %v90 = vsel %vm44, %v41, 0.0
  %91 = vadd.xlane.f32.xlu0 %v90
  %v92 = vpop.xlane.xlu0 %91
  %v93 = vrcp.pop 32.0
  %v94 = vmul.f32 %v47, %v93
  %v95 = vmul.f32 %v50, %v93
  %v96 = vmul.f32 %v53, %v93
  %v97 = vmul.f32 %v56, %v93
  %v98 = vmul.f32 %v59, %v93
  %v99 = vmul.f32 %v62, %v93
  %v100 = vmul.f32 %v65, %v93
  %v101 = vmul.f32 %v68, %v93
  %v102 = vmul.f32 %v71, %v93
  %v103 = vmul.f32 %v74, %v93
  %v104 = vmul.f32 %v77, %v93
  %v105 = vmul.f32 %v80, %v93
  %v106 = vmul.f32 %v83, %v93
  %v107 = vmul.f32 %v86, %v93
  %v108 = vmul.f32 %v89, %v93
  %v109 = vmul.f32 %v92, %v93
  %v110 = vsub.f32 %v26, %v94
  %v111 = vsub.f32 %v27, %v95
  %v112 = vsub.f32 %v28, %v96
  %v113 = vsub.f32 %v29, %v97
  %v114 = vsub.f32 %v30, %v98
  %v115 = vsub.f32 %v31, %v99
  %v116 = vsub.f32 %v32, %v100
  %v117 = vsub.f32 %v33, %v101
  %v118 = vsub.f32 %v34, %v102
  %v119 = vsub.f32 %v35, %v103
  %v120 = vsub.f32 %v36, %v104
  %v121 = vsub.f32 %v37, %v105
  %v122 = vsub.f32 %v38, %v106
  %v123 = vsub.f32 %v39, %v107
  %v124 = vsub.f32 %v40, %v108
  %v125 = vsub.f32 %v41, %v109
  %v126 = vmul.f32 %v110, %v110
  %v127 = vmul.f32 %v111, %v111
  %v128 = vmul.f32 %v112, %v112
  %v129 = vmul.f32 %v113, %v113
  %v130 = vmul.f32 %v114, %v114
  %v131 = vmul.f32 %v115, %v115
  %v132 = vmul.f32 %v116, %v116
  %v133 = vmul.f32 %v117, %v117
  %v134 = vmul.f32 %v118, %v118
  %v135 = vmul.f32 %v119, %v119
  %v136 = vmul.f32 %v120, %v120
  %v137 = vmul.f32 %v121, %v121
  %v138 = vmul.f32 %v122, %v122
  %v139 = vmul.f32 %v123, %v123
  %v140 = vmul.f32 %v124, %v124
  %v141 = vmul.f32 %v125, %v125
  %v142 = vsel %vm44, %v126, 0.0
  %143 = vadd.xlane.f32.xlu0 %v142
  %v144 = vpop.xlane.xlu0 %143
  %v145 = vsel %vm44, %v127, 0.0
  %146 = vadd.xlane.f32.xlu0 %v145
  %v147 = vpop.xlane.xlu0 %146
  %v148 = vsel %vm44, %v128, 0.0
  %149 = vadd.xlane.f32.xlu0 %v148
  %v150 = vpop.xlane.xlu0 %149
  %v151 = vsel %vm44, %v129, 0.0
  %152 = vadd.xlane.f32.xlu0 %v151
  %v153 = vpop.xlane.xlu0 %152
  %v154 = vsel %vm44, %v130, 0.0
  %155 = vadd.xlane.f32.xlu0 %v154
  %v156 = vpop.xlane.xlu0 %155
  %v157 = vsel %vm44, %v131, 0.0
  %158 = vadd.xlane.f32.xlu0 %v157
  %v159 = vpop.xlane.xlu0 %158
  %v160 = vsel %vm44, %v132, 0.0
  %161 = vadd.xlane.f32.xlu0 %v160
  %v162 = vpop.xlane.xlu0 %161
  %v163 = vsel %vm44, %v133, 0.0
  %164 = vadd.xlane.f32.xlu0 %v163
  %v165 = vpop.xlane.xlu0 %164
  %v166 = vsel %vm44, %v134, 0.0
  %167 = vadd.xlane.f32.xlu0 %v166
  %v168 = vpop.xlane.xlu0 %167
  %v169 = vsel %vm44, %v135, 0.0
  %170 = vadd.xlane.f32.xlu0 %v169
  %v171 = vpop.xlane.xlu0 %170
  %v172 = vsel %vm44, %v136, 0.0
  %173 = vadd.xlane.f32.xlu0 %v172
  %v174 = vpop.xlane.xlu0 %173
  %v175 = vsel %vm44, %v137, 0.0
  %176 = vadd.xlane.f32.xlu0 %v175
  %v177 = vpop.xlane.xlu0 %176
  %v178 = vsel %vm44, %v138, 0.0
  %179 = vadd.xlane.f32.xlu0 %v178
  %v180 = vpop.xlane.xlu0 %179
  %v181 = vsel %vm44, %v139, 0.0
  %182 = vadd.xlane.f32.xlu0 %v181
  %v183 = vpop.xlane.xlu0 %182
  %v184 = vsel %vm44, %v140, 0.0
  %185 = vadd.xlane.f32.xlu0 %v184
  %v186 = vpop.xlane.xlu0 %185
  %v187 = vsel %vm44, %v141, 0.0
  %188 = vadd.xlane.f32.xlu0 %v187
  %v189 = vpop.xlane.xlu0 %188
  %v190 = vmul.f32 %v144, %v93
  %v191 = vmul.f32 %v147, %v93
  %v192 = vmul.f32 %v150, %v93
  %v193 = vmul.f32 %v153, %v93
  %v194 = vmul.f32 %v156, %v93
  %v195 = vmul.f32 %v159, %v93
  %v196 = vmul.f32 %v162, %v93
  %v197 = vmul.f32 %v165, %v93
  %v198 = vmul.f32 %v168, %v93
  %v199 = vmul.f32 %v171, %v93
  %v200 = vmul.f32 %v174, %v93
  %v201 = vmul.f32 %v177, %v93
  %v202 = vmul.f32 %v180, %v93
  %v203 = vmul.f32 %v183, %v93
  %v204 = vmul.f32 %v186, %v93
  %v205 = vmul.f32 %v189, %v93
  %v206 = vadd.f32 %v190, 1e-05
  %v207 = vadd.f32 %v191, 1e-05
  %v208 = vadd.f32 %v192, 1e-05
  %v209 = vadd.f32 %v193, 1e-05
  %v210 = vadd.f32 %v194, 1e-05
  %v211 = vadd.f32 %v195, 1e-05
  %v212 = vadd.f32 %v196, 1e-05
  %v213 = vadd.f32 %v197, 1e-05
  %v214 = vadd.f32 %v198, 1e-05
  %v215 = vadd.f32 %v199, 1e-05
  %v216 = vadd.f32 %v200, 1e-05
  %v217 = vadd.f32 %v201, 1e-05
  %v218 = vadd.f32 %v202, 1e-05
  %v219 = vadd.f32 %v203, 1e-05
  %v220 = vadd.f32 %v204, 1e-05
  %v221 = vadd.f32 %v205, 1e-05
  %v222 = vrsqrt.pop %v206
  %v223 = vrsqrt.pop %v207
  %v224 = vrsqrt.pop %v208
  %v225 = vrsqrt.pop %v209
  %v226 = vrsqrt.pop %v210
  %v227 = vrsqrt.pop %v211
  %v228 = vrsqrt.pop %v212
  %v229 = vrsqrt.pop %v213
  %v230 = vrsqrt.pop %v214
  %v231 = vrsqrt.pop %v215
  %v232 = vrsqrt.pop %v216
  %v233 = vrsqrt.pop %v217
  %v234 = vrsqrt.pop %v218
  %v235 = vrsqrt.pop %v219
  %v236 = vrsqrt.pop %v220
  %v237 = vrsqrt.pop %v221
  %v238 = vmul.f32 %v110, %v222
  %v239 = vmul.f32 %v111, %v223
  %v240 = vmul.f32 %v112, %v224
  %v241 = vmul.f32 %v113, %v225
  %v242 = vmul.f32 %v114, %v226
  %v243 = vmul.f32 %v115, %v227
  %v244 = vmul.f32 %v116, %v228
  %v245 = vmul.f32 %v117, %v229
  %v246 = vmul.f32 %v118, %v230
  %v247 = vmul.f32 %v119, %v231
  %v248 = vmul.f32 %v120, %v232
  %v249 = vmul.f32 %v121, %v233
  %v250 = vmul.f32 %v122, %v234
  %v251 = vmul.f32 %v123, %v235
  %v252 = vmul.f32 %v124, %v236
  %v253 = vmul.f32 %v125, %v237
  %v255 = vlaneseq
  %v256 = vshrl.u32 %v255, 7
  %v257 = vsub.s32 0, %v256
  %v258 = vrot.slane %v42, %v257
  %v260 = vmul.f32 %v238, %v258
  %v261 = vmul.f32 %v239, %v258
  %v262 = vmul.f32 %v240, %v258
  %v263 = vmul.f32 %v241, %v258
  %v264 = vmul.f32 %v242, %v258
  %v265 = vmul.f32 %v243, %v258
  %v266 = vmul.f32 %v244, %v258
  %v267 = vmul.f32 %v245, %v258
  %v268 = vmul.f32 %v246, %v258
  %v269 = vmul.f32 %v247, %v258
  %v270 = vmul.f32 %v248, %v258
  %v271 = vmul.f32 %v249, %v258
  %v272 = vmul.f32 %v250, %v258
  %v273 = vmul.f32 %v251, %v258
  %v274 = vmul.f32 %v252, %v258
  %v275 = vmul.f32 %v253, %v258
  %v277 = vlaneseq
  %v278 = vshrl.u32 %v277, 7
  %v279 = vsub.s32 0, %v278
  %v280 = vrot.slane %v43, %v279
  %v282 = vadd.f32 %v260, %v280
  %v283 = vadd.f32 %v261, %v280
  %v284 = vadd.f32 %v262, %v280
  %v285 = vadd.f32 %v263, %v280
  %v286 = vadd.f32 %v264, %v280
  %v287 = vadd.f32 %v265, %v280
  %v288 = vadd.f32 %v266, %v280
  %v289 = vadd.f32 %v267, %v280
  %v290 = vadd.f32 %v268, %v280
  %v291 = vadd.f32 %v269, %v280
  %v292 = vadd.f32 %v270, %v280
  %v293 = vadd.f32 %v271, %v280
  %v294 = vadd.f32 %v272, %v280
  %v295 = vadd.f32 %v273, %v280
  %v296 = vadd.f32 %v274, %v280
  %v297 = vadd.f32 %v275, %v280
  %v298 = vld [vmem:[%s3] sm:$0xff]
  %v299 = vld [vmem:[%s3 + $0x8] sm:$0xff]
  %v300 = vld [vmem:[%s3 + $0x10] sm:$0xff]
  %v301 = vld [vmem:[%s3 + $0x18] sm:$0xff]
  %v302 = vld [vmem:[%s4] sm:$0x1]
  %v304 = vlaneseq
  %v305 = vshrl.u32 %v304, 7
  %v306 = vsub.s32 0, %v305
  %v307 = vrot.slane %v302, %v306
  %v310 = vsel %vm44, %v282, 0
  %v313 = vsel %vm44, %v283, 0
  %v316 = vsel %vm44, %v284, 0
  %v319 = vsel %vm44, %v285, 0
  %v322 = vsel %vm44, %v286, 0
  %v325 = vsel %vm44, %v287, 0
  %v328 = vsel %vm44, %v288, 0
  %v331 = vsel %vm44, %v289, 0
  %v334 = vsel %vm44, %v290, 0
  %v337 = vsel %vm44, %v291, 0
  %v340 = vsel %vm44, %v292, 0
  %v343 = vsel %vm44, %v293, 0
  %v346 = vsel %vm44, %v294, 0
  %v349 = vsel %vm44, %v295, 0
  %v352 = vsel %vm44, %v296, 0
  %v355 = vsel %vm44, %v297, 0
  %357 = vmatprep.subr.mxu0 0.0
  %358 = vmatpush1.msra.mxu0 %v298
  %359 = vmatprep.subr.mxu0 0.0
  %360 = vmatpush1.msra.mxu0 %v299
  %361 = vmatprep.subr.mxu0 0.0
  %362 = vmatpush1.msra.mxu0 %v300
  %363 = vmatprep.subr.mxu0 0.0
  %364 = vmatpush1.msra.mxu0 %v301
  %365 = vmatprep.subr.mxu0 0.0
  %366 = vmatpush1.msra.mxu0 0.0
  %367 = vmatprep.subr.mxu0 0.0
  %368 = vmatpush1.msra.mxu0 0.0
  %369 = vmatprep.subr.mxu0 0.0
  %370 = vmatpush1.msra.mxu0 0.0
  %371 = vmatprep.subr.mxu0 0.0
  %372 = vmatpush1.msra.mxu0 0.0
  %373 = vmatprep.subr.mxu0 0.0
  %374 = vmatpush1.msra.mxu0 0.0
  %375 = vmatprep.subr.mxu0 0.0
  %376 = vmatpush1.msra.mxu0 0.0
  %377 = vmatprep.subr.mxu0 0.0
  %378 = vmatpush1.msra.mxu0 0.0
  %379 = vmatprep.subr.mxu0 0.0
  %380 = vmatpush1.msra.mxu0 0.0
  %381 = vmatprep.subr.mxu0 0.0
  %382 = vmatpush1.msra.mxu0 0.0
  %383 = vmatprep.subr.mxu0 0.0
  %384 = vmatpush1.msra.mxu0 0.0
  %385 = vmatprep.subr.mxu0 0.0
  %386 = vmatpush1.msra.mxu0 0.0
  %387 = vmatprep.subr.mxu0 0.0
  %388 = vmatpush1.msra.mxu0 0.0
  %389 = vmatprep.subr.mxu0 0.0
  %390 = vmatpush1.msra.mxu0 0.0
  %391 = vmatprep.subr.mxu0 0.0
  %392 = vmatpush1.msra.mxu0 0.0
  %393 = vmatprep.subr.mxu0 0.0
  %394 = vmatpush1.msra.mxu0 0.0
  %395 = vmatprep.subr.mxu0 0.0
  %396 = vmatpush1.msra.mxu0 0.0
  %397 = vmatprep.subr.mxu0 0.0
  %398 = vmatpush1.msra.mxu0 0.0
  %399 = vmatprep.subr.mxu0 0.0
  %400 = vmatpush1.msra.mxu0 0.0
  %401 = vmatprep.subr.mxu0 0.0
  %402 = vmatpush1.msra.mxu0 0.0
  %403 = vmatprep.subr.mxu0 0.0
  %404 = vmatpush1.msra.mxu0 0.0
  %405 = vmatprep.subr.mxu0 0.0
  %406 = vmatpush1.msra.mxu0 0.0
  %407 = vmatprep.subr.mxu0 0.0
  %408 = vmatpush1.msra.mxu0 0.0
  %409 = vmatprep.subr.mxu0 0.0
  %410 = vmatpush1.msra.mxu0 0.0
  %411 = vmatprep.subr.mxu0 0.0
  %412 = vmatpush1.msra.mxu0 0.0
  %413 = vmatprep.subr.mxu0 0.0
  %414 = vmatpush1.msra.mxu0 0.0
  %415 = vmatprep.subr.mxu0 0.0
  %416 = vmatpush1.msra.mxu0 0.0
  %417 = vmatprep.subr.mxu0 0.0
  %418 = vmatpush1.msra.mxu0 0.0
  %419 = vmatprep.subr.mxu0 0.0
  %420 = vmatpush1.msra.mxu0 0.0
  %421 = vmatprep.mubr.f32.mxu0 0.0
  %422 = vmatmul.mubr.f32.gmra.mrb[0].mxu0 %v310
  %v423 = vpop.f32.mrb[0].mxu0
  %v424 = vadd.f32 %v307, %v423
  %v425 = vpop.f32.mrb[0].mxu0
  %426 = vmatprep.mubr.f32.mxu0 0.0
  %427 = vmatmul.mubr.f32.gmra.mrb[0].mxu0 %v313
  %v428 = vpop.f32.mrb[0].mxu0
  %v429 = vadd.f32 %v307, %v428
  %v430 = vpop.f32.mrb[0].mxu0
  %431 = vmatprep.mubr.f32.mxu0 0.0
  %432 = vmatmul.mubr.f32.gmra.mrb[0].mxu0 %v316
  %v433 = vpop.f32.mrb[0].mxu0
  %v434 = vadd.f32 %v307, %v433
  %v435 = vpop.f32.mrb[0].mxu0
  %436 = vmatprep.mubr.f32.mxu0 0.0
  %437 = vmatmul.mubr.f32.gmra.mrb[0].mxu0 %v319
  %v438 = vpop.f32.mrb[0].mxu0
  %v439 = vadd.f32 %v307, %v438
  %v440 = vpop.f32.mrb[0].mxu0
  %441 = vmatprep.mubr.f32.mxu0 0.0
  %442 = vmatmul.mubr.f32.gmra.mrb[0].mxu0 %v322
  %v443 = vpop.f32.mrb[0].mxu0
  %v444 = vadd.f32 %v307, %v443
  %v445 = vpop.f32.mrb[0].mxu0
  %446 = vmatprep.mubr.f32.mxu0 0.0
  %447 = vmatmul.mubr.f32.gmra.mrb[0].mxu0 %v325
  %v448 = vpop.f32.mrb[0].mxu0
  %v449 = vadd.f32 %v307, %v448
  %v450 = vpop.f32.mrb[0].mxu0
  %451 = vmatprep.mubr.f32.mxu0 0.0
  %452 = vmatmul.mubr.f32.gmra.mrb[0].mxu0 %v328
  %v453 = vpop.f32.mrb[0].mxu0
  %v454 = vadd.f32 %v307, %v453
  %v455 = vpop.f32.mrb[0].mxu0
  %456 = vmatprep.mubr.f32.mxu0 0.0
  %457 = vmatmul.mubr.f32.gmra.mrb[0].mxu0 %v331
  %v458 = vpop.f32.mrb[0].mxu0
  %v459 = vadd.f32 %v307, %v458
  %v460 = vpop.f32.mrb[0].mxu0
  %461 = vmatprep.mubr.f32.mxu0 0.0
  %462 = vmatmul.mubr.f32.gmra.mrb[0].mxu0 %v334
  %v463 = vpop.f32.mrb[0].mxu0
  %v464 = vadd.f32 %v307, %v463
  %v465 = vpop.f32.mrb[0].mxu0
  %466 = vmatprep.mubr.f32.mxu0 0.0
  %467 = vmatmul.mubr.f32.gmra.mrb[0].mxu0 %v337
  %v468 = vpop.f32.mrb[0].mxu0
  %v469 = vadd.f32 %v307, %v468
  %v470 = vpop.f32.mrb[0].mxu0
  %471 = vmatprep.mubr.f32.mxu0 0.0
  %472 = vmatmul.mubr.f32.gmra.mrb[0].mxu0 %v340
  %v473 = vpop.f32.mrb[0].mxu0
  %v474 = vadd.f32 %v307, %v473
  %v475 = vpop.f32.mrb[0].mxu0
  %476 = vmatprep.mubr.f32.mxu0 0.0
  %477 = vmatmul.mubr.f32.gmra.mrb[0].mxu0 %v343
  %v478 = vpop.f32.mrb[0].mxu0
  %v479 = vadd.f32 %v307, %v478
  %v480 = vpop.f32.mrb[0].mxu0
  %481 = vmatprep.mubr.f32.mxu0 0.0
  %482 = vmatmul.mubr.f32.gmra.mrb[0].mxu0 %v346
  %v483 = vpop.f32.mrb[0].mxu0
  %v484 = vadd.f32 %v307, %v483
  %v485 = vpop.f32.mrb[0].mxu0
  %486 = vmatprep.mubr.f32.mxu0 0.0
  %487 = vmatmul.mubr.f32.gmra.mrb[0].mxu0 %v349
  %v488 = vpop.f32.mrb[0].mxu0
  %v489 = vadd.f32 %v307, %v488
  %v490 = vpop.f32.mrb[0].mxu0
  %491 = vmatprep.mubr.f32.mxu0 0.0
  %492 = vmatmul.mubr.f32.gmra.mrb[0].mxu0 %v352
  %v493 = vpop.f32.mrb[0].mxu0
  %v494 = vadd.f32 %v307, %v493
  %v495 = vpop.f32.mrb[0].mxu0
  %496 = vmatprep.mubr.f32.mxu0 0.0
  %497 = vmatmul.mubr.f32.gmra.mrb[0].mxu0 %v355
  %v498 = vpop.f32.mrb[0].mxu0
  %v499 = vadd.f32 %v307, %v498
  %v500 = vpop.f32.mrb[0].mxu0
  %501 = vdwg.mxu0
  %v502 = vmul.f32 %v424, 0.5
  %v503 = vmul.f32 %v429, 0.5
  %v504 = vmul.f32 %v434, 0.5
  %v505 = vmul.f32 %v439, 0.5
  %v506 = vmul.f32 %v444, 0.5
  %v507 = vmul.f32 %v449, 0.5
  %v508 = vmul.f32 %v454, 0.5
  %v509 = vmul.f32 %v459, 0.5
  %v510 = vmul.f32 %v464, 0.5
  %v511 = vmul.f32 %v469, 0.5
  %v512 = vmul.f32 %v474, 0.5
  %v513 = vmul.f32 %v479, 0.5
  %v514 = vmul.f32 %v484, 0.5
  %v515 = vmul.f32 %v489, 0.5
  %v516 = vmul.f32 %v494, 0.5
  %v517 = vmul.f32 %v499, 0.5
  %v518 = vmul.f32 %v424, 0.044715
  %v519 = vmul.f32 %v429, 0.044715
  %v520 = vmul.f32 %v434, 0.044715
  %v521 = vmul.f32 %v439, 0.044715
  %v522 = vmul.f32 %v444, 0.044715
  %v523 = vmul.f32 %v449, 0.044715
  %v524 = vmul.f32 %v454, 0.044715
  %v525 = vmul.f32 %v459, 0.044715
  %v526 = vmul.f32 %v464, 0.044715
  %v527 = vmul.f32 %v469, 0.044715
  %v528 = vmul.f32 %v474, 0.044715
  %v529 = vmul.f32 %v479, 0.044715
  %v530 = vmul.f32 %v484, 0.044715
  %v531 = vmul.f32 %v489, 0.044715
  %v532 = vmul.f32 %v494, 0.044715
  %v533 = vmul.f32 %v499, 0.044715
  %v534 = vmul.f32 %v518, %v424
  %v535 = vmul.f32 %v519, %v429
  %v536 = vmul.f32 %v520, %v434
  %v537 = vmul.f32 %v521, %v439
  %v538 = vmul.f32 %v522, %v444
  %v539 = vmul.f32 %v523, %v449
  %v540 = vmul.f32 %v524, %v454
  %v541 = vmul.f32 %v525, %v459
  %v542 = vmul.f32 %v526, %v464
  %v543 = vmul.f32 %v527, %v469
  %v544 = vmul.f32 %v528, %v474
  %v545 = vmul.f32 %v529, %v479
  %v546 = vmul.f32 %v530, %v484
  %v547 = vmul.f32 %v531, %v489
  %v548 = vmul.f32 %v532, %v494
  %v549 = vmul.f32 %v533, %v499
  %v550 = vmul.f32 %v534, %v424
  %v551 = vmul.f32 %v535, %v429
  %v552 = vmul.f32 %v536, %v434
  %v553 = vmul.f32 %v537, %v439
  %v554 = vmul.f32 %v538, %v444
  %v555 = vmul.f32 %v539, %v449
  %v556 = vmul.f32 %v540, %v454
  %v557 = vmul.f32 %v541, %v459
  %v558 = vmul.f32 %v542, %v464
  %v559 = vmul.f32 %v543, %v469
  %v560 = vmul.f32 %v544, %v474
  %v561 = vmul.f32 %v545, %v479
  %v562 = vmul.f32 %v546, %v484
  %v563 = vmul.f32 %v547, %v489
  %v564 = vmul.f32 %v548, %v494
  %v565 = vmul.f32 %v549, %v499
  %v566 = vadd.f32 %v424, %v550
  %v567 = vadd.f32 %v429, %v551
  %v568 = vadd.f32 %v434, %v552
  %v569 = vadd.f32 %v439, %v553
  %v570 = vadd.f32 %v444, %v554
  %v571 = vadd.f32 %v449, %v555
  %v572 = vadd.f32 %v454, %v556
  %v573 = vadd.f32 %v459, %v557
  %v574 = vadd.f32 %v464, %v558
  %v575 = vadd.f32 %v469, %v559
  %v576 = vadd.f32 %v474, %v560
  %v577 = vadd.f32 %v479, %v561
  %v578 = vadd.f32 %v484, %v562
  %v579 = vadd.f32 %v489, %v563
  %v580 = vadd.f32 %v494, %v564
  %v581 = vadd.f32 %v499, %v565
  %v582 = vmul.f32 %v566, 0.7978846
  %v583 = vmul.f32 %v567, 0.7978846
  %v584 = vmul.f32 %v568, 0.7978846
  %v585 = vmul.f32 %v569, 0.7978846
  %v586 = vmul.f32 %v570, 0.7978846
  %v587 = vmul.f32 %v571, 0.7978846
  %v588 = vmul.f32 %v572, 0.7978846
  %v589 = vmul.f32 %v573, 0.7978846
  %v590 = vmul.f32 %v574, 0.7978846
  %v591 = vmul.f32 %v575, 0.7978846
  %v592 = vmul.f32 %v576, 0.7978846
  %v593 = vmul.f32 %v577, 0.7978846
  %v594 = vmul.f32 %v578, 0.7978846
  %v595 = vmul.f32 %v579, 0.7978846
  %v596 = vmul.f32 %v580, 0.7978846
  %v597 = vmul.f32 %v581, 0.7978846
  %v598 = vtanh.pop %v582
  %v599 = vtanh.pop %v583
  %v600 = vtanh.pop %v584
  %v601 = vtanh.pop %v585
  %v602 = vtanh.pop %v586
  %v603 = vtanh.pop %v587
  %v604 = vtanh.pop %v588
  %v605 = vtanh.pop %v589
  %v606 = vtanh.pop %v590
  %v607 = vtanh.pop %v591
  %v608 = vtanh.pop %v592
  %v609 = vtanh.pop %v593
  %v610 = vtanh.pop %v594
  %v611 = vtanh.pop %v595
  %v612 = vtanh.pop %v596
  %v613 = vtanh.pop %v597
  %v614 = vadd.f32 %v598, 1.0
  %v615 = vadd.f32 %v599, 1.0
  %v616 = vadd.f32 %v600, 1.0
  %v617 = vadd.f32 %v601, 1.0
  %v618 = vadd.f32 %v602, 1.0
  %v619 = vadd.f32 %v603, 1.0
  %v620 = vadd.f32 %v604, 1.0
  %v621 = vadd.f32 %v605, 1.0
  %v622 = vadd.f32 %v606, 1.0
  %v623 = vadd.f32 %v607, 1.0
  %v624 = vadd.f32 %v608, 1.0
  %v625 = vadd.f32 %v609, 1.0
  %v626 = vadd.f32 %v610, 1.0
  %v627 = vadd.f32 %v611, 1.0
  %v628 = vadd.f32 %v612, 1.0
  %v629 = vadd.f32 %v613, 1.0
  %v630 = vmul.f32 %v502, %v614
  %v631 = vmul.f32 %v503, %v615
  %v632 = vmul.f32 %v504, %v616
  %v633 = vmul.f32 %v505, %v617
  %v634 = vmul.f32 %v506, %v618
  %v635 = vmul.f32 %v507, %v619
  %v636 = vmul.f32 %v508, %v620
  %v637 = vmul.f32 %v509, %v621
  %v638 = vmul.f32 %v510, %v622
  %v639 = vmul.f32 %v511, %v623
  %v640 = vmul.f32 %v512, %v624
  %v641 = vmul.f32 %v513, %v625
  %v642 = vmul.f32 %v514, %v626
  %v643 = vmul.f32 %v515, %v627
  %v644 = vmul.f32 %v516, %v628
  %v645 = vmul.f32 %v517, %v629
  %v646 = vld [vmem:[%s5] sm:$0xff]
  %v647 = vld [vmem:[%s5 + $0x8] sm:$0xff]
  %v648 = vld [vmem:[%s5 + $0x10] sm:$0xff]
  %v649 = vld [vmem:[%s5 + $0x18] sm:$0xff]
  %v650 = vld [vmem:[%s6] sm:$0x1]
  %v652 = vlaneseq
  %v653 = vshrl.u32 %v652, 7
  %v654 = vsub.s32 0, %v653
  %v655 = vrot.slane %v650, %v654
  %v658 = vsel %vm44, %v630, 0
  %v661 = vsel %vm44, %v631, 0
  %v664 = vsel %vm44, %v632, 0
  %v667 = vsel %vm44, %v633, 0
  %v670 = vsel %vm44, %v634, 0
  %v673 = vsel %vm44, %v635, 0
  %v676 = vsel %vm44, %v636, 0
  %v679 = vsel %vm44, %v637, 0
  %v682 = vsel %vm44, %v638, 0
  %v685 = vsel %vm44, %v639, 0
  %v688 = vsel %vm44, %v640, 0
  %v691 = vsel %vm44, %v641, 0
  %v694 = vsel %vm44, %v642, 0
  %v697 = vsel %vm44, %v643, 0
  %v700 = vsel %vm44, %v644, 0
  %v703 = vsel %vm44, %v645, 0
  %705 = vmatprep.subr.mxu0 0.0
  %706 = vmatpush1.msra.mxu0 %v646
  %707 = vmatprep.subr.mxu0 0.0
  %708 = vmatpush1.msra.mxu0 %v647
  %709 = vmatprep.subr.mxu0 0.0
  %710 = vmatpush1.msra.mxu0 %v648
  %711 = vmatprep.subr.mxu0 0.0
  %712 = vmatpush1.msra.mxu0 %v649
  %713 = vmatprep.subr.mxu0 0.0
  %714 = vmatpush1.msra.mxu0 0.0
  %715 = vmatprep.subr.mxu0 0.0
  %716 = vmatpush1.msra.mxu0 0.0
  %717 = vmatprep.subr.mxu0 0.0
  %718 = vmatpush1.msra.mxu0 0.0
  %719 = vmatprep.subr.mxu0 0.0
  %720 = vmatpush1.msra.mxu0 0.0
  %721 = vmatprep.subr.mxu0 0.0
  %722 = vmatpush1.msra.mxu0 0.0
  %723 = vmatprep.subr.mxu0 0.0
  %724 = vmatpush1.msra.mxu0 0.0
  %725 = vmatprep.subr.mxu0 0.0
  %726 = vmatpush1.msra.mxu0 0.0
  %727 = vmatprep.subr.mxu0 0.0
  %728 = vmatpush1.msra.mxu0 0.0
  %729 = vmatprep.subr.mxu0 0.0
  %730 = vmatpush1.msra.mxu0 0.0
  %731 = vmatprep.subr.mxu0 0.0
  %732 = vmatpush1.msra.mxu0 0.0
  %733 = vmatprep.subr.mxu0 0.0
  %734 = vmatpush1.msra.mxu0 0.0
  %735 = vmatprep.subr.mxu0 0.0
  %736 = vmatpush1.msra.mxu0 0.0
  %737 = vmatprep.subr.mxu0 0.0
  %738 = vmatpush1.msra.mxu0 0.0
  %739 = vmatprep.subr.mxu0 0.0
  %740 = vmatpush1.msra.mxu0 0.0
  %741 = vmatprep.subr.mxu0 0.0
  %742 = vmatpush1.msra.mxu0 0.0
  %743 = vmatprep.subr.mxu0 0.0
  %744 = vmatpush1.msra.mxu0 0.0
  %745 = vmatprep.subr.mxu0 0.0
  %746 = vmatpush1.msra.mxu0 0.0
  %747 = vmatprep.subr.mxu0 0.0
  %748 = vmatpush1.msra.mxu0 0.0
  %749 = vmatprep.subr.mxu0 0.0
  %750 = vmatpush1.msra.mxu0 0.0
  %751 = vmatprep.subr.mxu0 0.0
  %752 = vmatpush1.msra.mxu0 0.0
  %753 = vmatprep.subr.mxu0 0.0
  %754 = vmatpush1.msra.mxu0 0.0
  %755 = vmatprep.subr.mxu0 0.0
  %756 = vmatpush1.msra.mxu0 0.0
  %757 = vmatprep.subr.mxu0 0.0
  %758 = vmatpush1.msra.mxu0 0.0
  %759 = vmatprep.subr.mxu0 0.0
  %760 = vmatpush1.msra.mxu0 0.0
  %761 = vmatprep.subr.mxu0 0.0
  %762 = vmatpush1.msra.mxu0 0.0
  %763 = vmatprep.subr.mxu0 0.0
  %764 = vmatpush1.msra.mxu0 0.0
  %765 = vmatprep.subr.mxu0 0.0
  %766 = vmatpush1.msra.mxu0 0.0
  %767 = vmatprep.subr.mxu0 0.0
  %768 = vmatpush1.msra.mxu0 0.0
  %769 = vmatprep.mubr.f32.mxu0 0.0
  %770 = vmatmul.mubr.f32.gmra.mrb[0].mxu0 %v658
  %v771 = vpop.f32.mrb[0].mxu0
  %v772 = vadd.f32 %v655, %v771
  %v773 = vpop.f32.mrb[0].mxu0
  %774 = vmatprep.mubr.f32.mxu0 0.0
  %775 = vmatmul.mubr.f32.gmra.mrb[0].mxu0 %v661
  %v776 = vpop.f32.mrb[0].mxu0
  %v777 = vadd.f32 %v655, %v776
  %v778 = vpop.f32.mrb[0].mxu0
  %779 = vmatprep.mubr.f32.mxu0 0.0
  %780 = vmatmul.mubr.f32.gmra.mrb[0].mxu0 %v664
  %v781 = vpop.f32.mrb[0].mxu0
  %v782 = vadd.f32 %v655, %v781
  %v783 = vpop.f32.mrb[0].mxu0
  %784 = vmatprep.mubr.f32.mxu0 0.0
  %785 = vmatmul.mubr.f32.gmra.mrb[0].mxu0 %v667
  %v786 = vpop.f32.mrb[0].mxu0
  %v787 = vadd.f32 %v655, %v786
  %v788 = vpop.f32.mrb[0].mxu0
  %789 = vmatprep.mubr.f32.mxu0 0.0
  %790 = vmatmul.mubr.f32.gmra.mrb[0].mxu0 %v670
  %v791 = vpop.f32.mrb[0].mxu0
  %v792 = vadd.f32 %v655, %v791
  %v793 = vpop.f32.mrb[0].mxu0
  %794 = vmatprep.mubr.f32.mxu0 0.0
  %795 = vmatmul.mubr.f32.gmra.mrb[0].mxu0 %v673
  %v796 = vpop.f32.mrb[0].mxu0
  %v797 = vadd.f32 %v655, %v796
  %v798 = vpop.f32.mrb[0].mxu0
  %799 = vmatprep.mubr.f32.mxu0 0.0
  %800 = vmatmul.mubr.f32.gmra.mrb[0].mxu0 %v676
  %v801 = vpop.f32.mrb[0].mxu0
  %v802 = vadd.f32 %v655, %v801
  %v803 = vpop.f32.mrb[0].mxu0
  %804 = vmatprep.mubr.f32.mxu0 0.0
  %805 = vmatmul.mubr.f32.gmra.mrb[0].mxu0 %v679
  %v806 = vpop.f32.mrb[0].mxu0
  %v807 = vadd.f32 %v655, %v806
  %v808 = vpop.f32.mrb[0].mxu0
  %809 = vmatprep.mubr.f32.mxu0 0.0
  %810 = vmatmul.mubr.f32.gmra.mrb[0].mxu0 %v682
  %v811 = vpop.f32.mrb[0].mxu0
  %v812 = vadd.f32 %v655, %v811
  %v813 = vpop.f32.mrb[0].mxu0
  %814 = vmatprep.mubr.f32.mxu0 0.0
  %815 = vmatmul.mubr.f32.gmra.mrb[0].mxu0 %v685
  %v816 = vpop.f32.mrb[0].mxu0
  %v817 = vadd.f32 %v655, %v816
  %v818 = vpop.f32.mrb[0].mxu0
  %819 = vmatprep.mubr.f32.mxu0 0.0
  %820 = vmatmul.mubr.f32.gmra.mrb[0].mxu0 %v688
  %v821 = vpop.f32.mrb[0].mxu0
  %v822 = vadd.f32 %v655, %v821
  %v823 = vpop.f32.mrb[0].mxu0
  %824 = vmatprep.mubr.f32.mxu0 0.0
  %825 = vmatmul.mubr.f32.gmra.mrb[0].mxu0 %v691
  %v826 = vpop.f32.mrb[0].mxu0
  %v827 = vadd.f32 %v655, %v826
  %v828 = vpop.f32.mrb[0].mxu0
  %829 = vmatprep.mubr.f32.mxu0 0.0
  %830 = vmatmul.mubr.f32.gmra.mrb[0].mxu0 %v694
  %v831 = vpop.f32.mrb[0].mxu0
  %v832 = vadd.f32 %v655, %v831
  %v833 = vpop.f32.mrb[0].mxu0
  %834 = vmatprep.mubr.f32.mxu0 0.0
  %835 = vmatmul.mubr.f32.gmra.mrb[0].mxu0 %v697
  %v836 = vpop.f32.mrb[0].mxu0
  %v837 = vadd.f32 %v655, %v836
  %v838 = vpop.f32.mrb[0].mxu0
  %839 = vmatprep.mubr.f32.mxu0 0.0
  %840 = vmatmul.mubr.f32.gmra.mrb[0].mxu0 %v700
  %v841 = vpop.f32.mrb[0].mxu0
  %v842 = vadd.f32 %v655, %v841
  %v843 = vpop.f32.mrb[0].mxu0
  %844 = vmatprep.mubr.f32.mxu0 0.0
  %845 = vmatmul.mubr.f32.gmra.mrb[0].mxu0 %v703
  %v846 = vpop.f32.mrb[0].mxu0
  %v847 = vadd.f32 %v655, %v846
  %v848 = vpop.f32.mrb[0].mxu0
  %849 = vdwg.mxu0
  %v850 = vadd.f32 %v772, %v26
  %v851 = vadd.f32 %v777, %v27
  %v852 = vadd.f32 %v782, %v28
  %v853 = vadd.f32 %v787, %v29
  %v854 = vadd.f32 %v792, %v30
  %v855 = vadd.f32 %v797, %v31
  %v856 = vadd.f32 %v802, %v32
  %v857 = vadd.f32 %v807, %v33
  %v858 = vadd.f32 %v812, %v34
  %v859 = vadd.f32 %v817, %v35
  %v860 = vadd.f32 %v822, %v36
  %v861 = vadd.f32 %v827, %v37
  %v862 = vadd.f32 %v832, %v38
  %v863 = vadd.f32 %v837, %v39
  %v864 = vadd.f32 %v842, %v40
  %v865 = vadd.f32 %v847, %v41
  %866 = vst.msk [vmem:[%s7] sm:$0xff] %vm44, %v850
  %867 = vst.msk [vmem:[%s7 + $0x8] sm:$0xff] %vm44, %v851
  %868 = vst.msk [vmem:[%s7 + $0x10] sm:$0xff] %vm44, %v852
  %869 = vst.msk [vmem:[%s7 + $0x18] sm:$0xff] %vm44, %v853
  %870 = vst.msk [vmem:[%s7 + $0x20] sm:$0xff] %vm44, %v854
  %871 = vst.msk [vmem:[%s7 + $0x28] sm:$0xff] %vm44, %v855
  %872 = vst.msk [vmem:[%s7 + $0x30] sm:$0xff] %vm44, %v856
  %873 = vst.msk [vmem:[%s7 + $0x38] sm:$0xff] %vm44, %v857
  %874 = vst.msk [vmem:[%s7 + $0x40] sm:$0xff] %vm44, %v858
  %875 = vst.msk [vmem:[%s7 + $0x48] sm:$0xff] %vm44, %v859
  %876 = vst.msk [vmem:[%s7 + $0x50] sm:$0xff] %vm44, %v860
  %877 = vst.msk [vmem:[%s7 + $0x58] sm:$0xff] %vm44, %v861
  %878 = vst.msk [vmem:[%s7 + $0x60] sm:$0xff] %vm44, %v862
  %879 = vst.msk [vmem:[%s7 + $0x68] sm:$0xff] %vm44, %v863
  %880 = vst.msk [vmem:[%s7 + $0x70] sm:$0xff] %vm44, %v864
  %881 = vst.msk [vmem:[%s7 + $0x78] sm:$0xff] %vm44, %v865
  // Predicated region
  $region30: #{transformer_forward.5} parent=0 // pred_check
    _
  $region31: #{transformer_forward.5} parent=0 // pred_check_branch
    %883 = sbr.rel (0) target = $region33
  $region32: #{transformer_forward.5} parent=0 // pred_region
    _
  $region33: #{transformer_forward.5} parent=0 // pred_fallthru
    _
  // Predicated region
  $region34: #{transformer_forward.5} parent=0 // pred_check
    _
  $region35: #{transformer_forward.5} parent=0 // pred_check_branch
    %885 = sbr.rel (0) target = $region37
  $region36: #{transformer_forward.5} parent=0 // pred_region
    _
  $region37: #{transformer_forward.5} parent=0 // pred_fallthru
    _

// kernel: transformer_forward.4
$region0: #{transformer_forward.4}
  #allocation0 [shape = 'u32[]', space=smem, size = 0x4, offset = 0x4, fixed_abs, tag = 'smem constant byte address 0x4 - core index']
  #allocation1 [shape = 'u32[144,128]{1,0:T(1,128)}', space=vmem, size = 0x12000, scoped, tag = 'internal scratch']
  #allocation2 [shape = 'f32[1,1]{1,0:T(1,128)S(1)}', space=vmem, size = 0x200, scoped, tag = 'scoped memory for transformer_forward.4']
  %s0 = inlined_call_operand.vmem [shape: f32[2,4,16,32], index: 0, kind: input, shape index: {}, may-alias: {0,13}]
  %s1 = inlined_call_operand.vmem [shape: f32[1,32], index: 1, kind: input, shape index: {}]
  %s2 = inlined_call_operand.vmem [shape: f32[1,32], index: 2, kind: input, shape index: {}]
  %s3 = inlined_call_operand.vmem [shape: f32[32,32], index: 3, kind: input, shape index: {}]
  %s4 = inlined_call_operand.vmem [shape: f32[32,32], index: 4, kind: input, shape index: {}]
  %s5 = inlined_call_operand.vmem [shape: f32[32,32], index: 5, kind: input, shape index: {}]
  %s6 = inlined_call_operand.vmem [shape: f32[4,16,16], index: 6, kind: input, shape index: {}]
  %s7 = inlined_call_operand.vmem [shape: f32[16,16], index: 7, kind: input, shape index: {}]
  %s8 = inlined_call_operand.vmem [shape: f32[1,16], index: 8, kind: input, shape index: {}]
  %s9 = inlined_call_operand.vmem [shape: f32[1,16], index: 9, kind: input, shape index: {}]
  %s10 = inlined_call_operand.<no memory space> [shape: f32[1,1], index: 10, kind: input, shape index: {}]
  %s11 = inlined_call_operand.vmem [shape: f32[32,32], index: 11, kind: input, shape index: {}]
  %s12 = inlined_call_operand.vmem [shape: f32[1,32], index: 12, kind: input, shape index: {}]
  %s13 = inlined_call_operand.vmem [shape: f32[2,4,16,32], index: 13, kind: output, shape index: {}, may-alias: {0,13}]
  %s14 = sld [smem:[#allocation0]]
  $region85: #{transformer_forward.4} parent=0
    _
  %s16 = ssub.s32 1, %s14
  %s17 = scalar_select 0, %s16, %s14
  %v18 = vstv %s10
  %19 = vst [vmem:[#allocation2] sm:$0x1] %v18
  loop: start=0, step=1, limit=4
  $region2: #{transformer_forward.4} parent=0 // loop_pre_header
    _
  $region3: #{transformer_forward.4} parent=0 // loop_header
    %s21 = sphi 0, %s25
    %p22 = scmp.ge.s32.totalorder %s21, 4
    %s28 = sphi 0, %s40
    %s29 = sphi 0, %s36
    %s30 = sphi 0, %s28
    %s31 = sphi 0, %s29
    %s32 = sphi 0, %s30
    %s33 = sphi 0, %s31
    %s45 = sphi 0, %s47
    %s48 = sphi 0, %s45
    %s49 = sphi 0, %s48
    %s65 = sphi 0, %s49
    %s69 = sphi 0, %s69
    %s71 = sphi 0, %s69
    %s72 = sphi 0, %s71
    %s86 = sphi 0, %s72
    %s90 = sphi 0, %s90
    %s92 = sphi 0, %s90
    %s93 = sphi 0, %s92
    %s107 = sphi 0, %s93
    %s111 = sphi 0, %s111
    %s113 = sphi 0, %s111
    %s114 = sphi 0, %s113
    %s128 = sphi 0, %s114
    %s132 = sphi 0, %s132
    %s134 = sphi 0, %s132
    %s135 = sphi 0, %s134
    %s149 = sphi 0, %s135
    %s153 = sphi 0, %s153
    %s155 = sphi 0, %s153
    %s156 = sphi 0, %s155
    %s170 = sphi 0, %s156
    %s176 = sphi 0, %s178
    %s179 = sphi 0, %s176
    %s180 = sphi 0, %s179
    %s196 = sphi 0, %s180
    %s200 = sphi 0, %s200
    %s202 = sphi 0, %s200
    %s203 = sphi 0, %s202
    %s217 = sphi 0, %s203
    %s221 = sphi 0, %s221
    %s223 = sphi 0, %s221
    %s224 = sphi 0, %s223
    %s238 = sphi 0, %s224
    %s242 = sphi 0, %s242
    %s244 = sphi 0, %s242
    %s245 = sphi 0, %s244
    %s259 = sphi 0, %s245
    %s263 = sphi 0, %s263
    %s265 = sphi 0, %s263
    %s266 = sphi 0, %s265
    %s280 = sphi 0, %s266
    %s284 = sphi 0, %s284
    %s286 = sphi 0, %s284
    %s287 = sphi 0, %s286
    %s301 = sphi 0, %s287
    %s305 = sphi 0, %s305
    %s307 = sphi 0, %s305
    %s308 = sphi 0, %s307
    %s322 = sphi 0, %s308
    %s330 = sphi 0, %s332
    %s333 = sphi 0, %s330
    %s334 = sphi 0, %s333
    %s350 = sphi 0, %s334
  $region4: #{transformer_forward.4} parent=0 // loop_header_branch
    %24 = sbr.rel (%p22) target = $region8
  $region5: #{transformer_forward.4} parent=0 // loop_body
    %s26 = ssub.s32 %s21, 1
    %s27 = ssub.s32 %s21, 2
    %s34 = sadd.s32 1, %s29
    %p35 = scmp.ge.s32.totalorder %s34, 2
    %s36 = scalar_select %p35, 0, %s34
    %s37 = sadd.s32 1, %s28
    %s38 = scalar_select %p35, %s37, %s28
    %p39 = scmp.ge.s32.totalorder %s38, 1
    %s40 = scalar_select %p39, 0, %s38
    %s41 = ssub.s32 %s29, %s36
    %s42 = ssub.s32 %s28, %s40
    %s43 = sor.u32 %s41, %s42
    %p44 = scmp.eq.s32.totalorder %s43, 0
    %s46 = sadd.s32 %s45, 1
    %s47 = scalar_select %p44, %s45, %s46
    %p50 = pneg %p44
    %p51 = scmp.eq.s32.totalorder %s21, 1
    %p52 = por %p50, %p51
    %p53 = scmp.ne.s32.totalorder %s45, %s48
    %p54 = scmp.eq.s32.totalorder %s21, 0
    %p55 = por %p53, %p54
    %p56 = scmp.ne.s32.totalorder %s45, %s48
    %p57 = scmp.eq.s32.totalorder %s26, 1
    %p58 = por %p56, %p57
    %p59 = scmp.ne.s32.totalorder %s48, %s49
    %p60 = scmp.eq.s32.totalorder %s26, 0
    %p61 = por %p59, %p60
    %p62 = scmp.ne.s32.totalorder %s48, %s49
    %p63 = scmp.eq.s32.totalorder %s27, 1
    %p64 = por %p62, %p63
    %p66 = scmp.ne.s32.totalorder %s49, %s65
    %p67 = scmp.eq.s32.totalorder %s27, 0
    %p68 = por %p66, %p67
    %s70 = sadd.s32 %s69, 1
    %p73 = scmp.eq.s32.totalorder %s21, 1
    %p74 = scmp.ne.s32.totalorder %s69, %s71
    %p75 = scmp.eq.s32.totalorder %s21, 0
    %p76 = por %p74, %p75
    %p77 = scmp.ne.s32.totalorder %s69, %s71
    %p78 = scmp.eq.s32.totalorder %s26, 1
    %p79 = por %p77, %p78
    %p80 = scmp.ne.s32.totalorder %s71, %s72
    %p81 = scmp.eq.s32.totalorder %s26, 0
    %p82 = por %p80, %p81
    %p83 = scmp.ne.s32.totalorder %s71, %s72
    %p84 = scmp.eq.s32.totalorder %s27, 1
    %p85 = por %p83, %p84
    %p87 = scmp.ne.s32.totalorder %s72, %s86
    %p88 = scmp.eq.s32.totalorder %s27, 0
    %p89 = por %p87, %p88
    %s91 = sadd.s32 %s90, 1
    %p94 = scmp.eq.s32.totalorder %s21, 1
    %p95 = scmp.ne.s32.totalorder %s90, %s92
    %p96 = scmp.eq.s32.totalorder %s21, 0
    %p97 = por %p95, %p96
    %p98 = scmp.ne.s32.totalorder %s90, %s92
    %p99 = scmp.eq.s32.totalorder %s26, 1
    %p100 = por %p98, %p99
    %p101 = scmp.ne.s32.totalorder %s92, %s93
    %p102 = scmp.eq.s32.totalorder %s26, 0
    %p103 = por %p101, %p102
    %p104 = scmp.ne.s32.totalorder %s92, %s93
    %p105 = scmp.eq.s32.totalorder %s27, 1
    %p106 = por %p104, %p105
    %p108 = scmp.ne.s32.totalorder %s93, %s107
    %p109 = scmp.eq.s32.totalorder %s27, 0
    %p110 = por %p108, %p109
    %s112 = sadd.s32 %s111, 1
    %p115 = scmp.eq.s32.totalorder %s21, 1
    %p116 = scmp.ne.s32.totalorder %s111, %s113
    %p117 = scmp.eq.s32.totalorder %s21, 0
    %p118 = por %p116, %p117
    %p119 = scmp.ne.s32.totalorder %s111, %s113
    %p120 = scmp.eq.s32.totalorder %s26, 1
    %p121 = por %p119, %p120
    %p122 = scmp.ne.s32.totalorder %s113, %s114
    %p123 = scmp.eq.s32.totalorder %s26, 0
    %p124 = por %p122, %p123
    %p125 = scmp.ne.s32.totalorder %s113, %s114
    %p126 = scmp.eq.s32.totalorder %s27, 1
    %p127 = por %p125, %p126
    %p129 = scmp.ne.s32.totalorder %s114, %s128
    %p130 = scmp.eq.s32.totalorder %s27, 0
    %p131 = por %p129, %p130
    %s133 = sadd.s32 %s132, 1
    %p136 = scmp.eq.s32.totalorder %s21, 1
    %p137 = scmp.ne.s32.totalorder %s132, %s134
    %p138 = scmp.eq.s32.totalorder %s21, 0
    %p139 = por %p137, %p138
    %p140 = scmp.ne.s32.totalorder %s132, %s134
    %p141 = scmp.eq.s32.totalorder %s26, 1
    %p142 = por %p140, %p141
    %p143 = scmp.ne.s32.totalorder %s134, %s135
    %p144 = scmp.eq.s32.totalorder %s26, 0
    %p145 = por %p143, %p144
    %p146 = scmp.ne.s32.totalorder %s134, %s135
    %p147 = scmp.eq.s32.totalorder %s27, 1
    %p148 = por %p146, %p147
    %p150 = scmp.ne.s32.totalorder %s135, %s149
    %p151 = scmp.eq.s32.totalorder %s27, 0
    %p152 = por %p150, %p151
    %s154 = sadd.s32 %s153, 1
    %p157 = scmp.eq.s32.totalorder %s21, 1
    %p158 = scmp.ne.s32.totalorder %s153, %s155
    %p159 = scmp.eq.s32.totalorder %s21, 0
    %p160 = por %p158, %p159
    %p161 = scmp.ne.s32.totalorder %s153, %s155
    %p162 = scmp.eq.s32.totalorder %s26, 1
    %p163 = por %p161, %p162
    %p164 = scmp.ne.s32.totalorder %s155, %s156
    %p165 = scmp.eq.s32.totalorder %s26, 0
    %p166 = por %p164, %p165
    %p167 = scmp.ne.s32.totalorder %s155, %s156
    %p168 = scmp.eq.s32.totalorder %s27, 1
    %p169 = por %p167, %p168
    %p171 = scmp.ne.s32.totalorder %s156, %s170
    %p172 = scmp.eq.s32.totalorder %s27, 0
    %p173 = por %p171, %p172
    %s174 = ssub.s32 %s28, %s40
    %p175 = scmp.eq.s32.totalorder %s174, 0
    %s177 = sadd.s32 %s176, 1
    %s178 = scalar_select %p175, %s176, %s177
    %p181 = pneg %p175
    %p182 = scmp.eq.s32.totalorder %s21, 1
    %p183 = por %p181, %p182
    %p184 = scmp.ne.s32.totalorder %s176, %s179
    %p185 = scmp.eq.s32.totalorder %s21, 0
    %p186 = por %p184, %p185
    %p187 = scmp.ne.s32.totalorder %s176, %s179
    %p188 = scmp.eq.s32.totalorder %s26, 1
    %p189 = por %p187, %p188
    %p190 = scmp.ne.s32.totalorder %s179, %s180
    %p191 = scmp.eq.s32.totalorder %s26, 0
    %p192 = por %p190, %p191
    %p193 = scmp.ne.s32.totalorder %s179, %s180
    %p194 = scmp.eq.s32.totalorder %s27, 1
    %p195 = por %p193, %p194
    %p197 = scmp.ne.s32.totalorder %s180, %s196
    %p198 = scmp.eq.s32.totalorder %s27, 0
    %p199 = por %p197, %p198
    %s201 = sadd.s32 %s200, 1
    %p204 = scmp.eq.s32.totalorder %s21, 1
    %p205 = scmp.ne.s32.totalorder %s200, %s202
    %p206 = scmp.eq.s32.totalorder %s21, 0
    %p207 = por %p205, %p206
    %p208 = scmp.ne.s32.totalorder %s200, %s202
    %p209 = scmp.eq.s32.totalorder %s26, 1
    %p210 = por %p208, %p209
    %p211 = scmp.ne.s32.totalorder %s202, %s203
    %p212 = scmp.eq.s32.totalorder %s26, 0
    %p213 = por %p211, %p212
    %p214 = scmp.ne.s32.totalorder %s202, %s203
    %p215 = scmp.eq.s32.totalorder %s27, 1
    %p216 = por %p214, %p215
    %p218 = scmp.ne.s32.totalorder %s203, %s217
    %p219 = scmp.eq.s32.totalorder %s27, 0
    %p220 = por %p218, %p219
    %s222 = sadd.s32 %s221, 1
    %p225 = scmp.eq.s32.totalorder %s21, 1
    %p226 = scmp.ne.s32.totalorder %s221, %s223
    %p227 = scmp.eq.s32.totalorder %s21, 0
    %p228 = por %p226, %p227
    %p229 = scmp.ne.s32.totalorder %s221, %s223
    %p230 = scmp.eq.s32.totalorder %s26, 1
    %p231 = por %p229, %p230
    %p232 = scmp.ne.s32.totalorder %s223, %s224
    %p233 = scmp.eq.s32.totalorder %s26, 0
    %p234 = por %p232, %p233
    %p235 = scmp.ne.s32.totalorder %s223, %s224
    %p236 = scmp.eq.s32.totalorder %s27, 1
    %p237 = por %p235, %p236
    %p239 = scmp.ne.s32.totalorder %s224, %s238
    %p240 = scmp.eq.s32.totalorder %s27, 0
    %p241 = por %p239, %p240
    %s243 = sadd.s32 %s242, 1
    %p246 = scmp.eq.s32.totalorder %s21, 1
    %p247 = scmp.ne.s32.totalorder %s242, %s244
    %p248 = scmp.eq.s32.totalorder %s21, 0
    %p249 = por %p247, %p248
    %p250 = scmp.ne.s32.totalorder %s242, %s244
    %p251 = scmp.eq.s32.totalorder %s26, 1
    %p252 = por %p250, %p251
    %p253 = scmp.ne.s32.totalorder %s244, %s245
    %p254 = scmp.eq.s32.totalorder %s26, 0
    %p255 = por %p253, %p254
    %p256 = scmp.ne.s32.totalorder %s244, %s245
    %p257 = scmp.eq.s32.totalorder %s27, 1
    %p258 = por %p256, %p257
    %p260 = scmp.ne.s32.totalorder %s245, %s259
    %p261 = scmp.eq.s32.totalorder %s27, 0
    %p262 = por %p260, %p261
    %s264 = sadd.s32 %s263, 1
    %p267 = scmp.eq.s32.totalorder %s21, 1
    %p268 = scmp.ne.s32.totalorder %s263, %s265
    %p269 = scmp.eq.s32.totalorder %s21, 0
    %p270 = por %p268, %p269
    %p271 = scmp.ne.s32.totalorder %s263, %s265
    %p272 = scmp.eq.s32.totalorder %s26, 1
    %p273 = por %p271, %p272
    %p274 = scmp.ne.s32.totalorder %s265, %s266
    %p275 = scmp.eq.s32.totalorder %s26, 0
    %p276 = por %p274, %p275
    %p277 = scmp.ne.s32.totalorder %s265, %s266
    %p278 = scmp.eq.s32.totalorder %s27, 1
    %p279 = por %p277, %p278
    %p281 = scmp.ne.s32.totalorder %s266, %s280
    %p282 = scmp.eq.s32.totalorder %s27, 0
    %p283 = por %p281, %p282
    %s285 = sadd.s32 %s284, 1
    %p288 = scmp.eq.s32.totalorder %s21, 1
    %p289 = scmp.ne.s32.totalorder %s284, %s286
    %p290 = scmp.eq.s32.totalorder %s21, 0
    %p291 = por %p289, %p290
    %p292 = scmp.ne.s32.totalorder %s284, %s286
    %p293 = scmp.eq.s32.totalorder %s26, 1
    %p294 = por %p292, %p293
    %p295 = scmp.ne.s32.totalorder %s286, %s287
    %p296 = scmp.eq.s32.totalorder %s26, 0
    %p297 = por %p295, %p296
    %p298 = scmp.ne.s32.totalorder %s286, %s287
    %p299 = scmp.eq.s32.totalorder %s27, 1
    %p300 = por %p298, %p299
    %p302 = scmp.ne.s32.totalorder %s287, %s301
    %p303 = scmp.eq.s32.totalorder %s27, 0
    %p304 = por %p302, %p303
    %s306 = sadd.s32 %s305, 1
    %p309 = scmp.eq.s32.totalorder %s21, 1
    %p310 = scmp.ne.s32.totalorder %s305, %s307
    %p311 = scmp.eq.s32.totalorder %s21, 0
    %p312 = por %p310, %p311
    %p313 = scmp.ne.s32.totalorder %s305, %s307
    %p314 = scmp.eq.s32.totalorder %s26, 1
    %p315 = por %p313, %p314
    %p316 = scmp.ne.s32.totalorder %s307, %s308
    %p317 = scmp.eq.s32.totalorder %s26, 0
    %p318 = por %p316, %p317
    %p319 = scmp.ne.s32.totalorder %s307, %s308
    %p320 = scmp.eq.s32.totalorder %s27, 1
    %p321 = por %p319, %p320
    %p323 = scmp.ne.s32.totalorder %s308, %s322
    %p324 = scmp.eq.s32.totalorder %s27, 0
    %p325 = por %p323, %p324
    %s326 = ssub.s32 %s29, %s36
    %s327 = ssub.s32 %s28, %s40
    %s328 = sor.u32 %s326, %s327
    %p329 = scmp.eq.s32.totalorder %s328, 0
    %s331 = sadd.s32 %s330, 1
    %s332 = scalar_select %p329, %s330, %s331
    %p335 = pneg %p329
    %p336 = scmp.eq.s32.totalorder %s21, 1
    %p337 = por %p335, %p336
    %p338 = scmp.ne.s32.totalorder %s330, %s333
    %p339 = scmp.eq.s32.totalorder %s21, 0
    %p340 = por %p338, %p339
    %p341 = scmp.ne.s32.totalorder %s330, %s333
    %p342 = scmp.eq.s32.totalorder %s26, 1
    %p343 = por %p341, %p342
    %p344 = scmp.ne.s32.totalorder %s333, %s334
    %p345 = scmp.eq.s32.totalorder %s26, 0
    %p346 = por %p344, %p345
    %p347 = scmp.ne.s32.totalorder %s333, %s334
    %p348 = scmp.eq.s32.totalorder %s27, 1
    %p349 = por %p347, %p348
    %p351 = scmp.ne.s32.totalorder %s334, %s350
    %p352 = scmp.eq.s32.totalorder %s27, 0
    %p353 = por %p351, %p352
    %p354 = scmp.le.s32.totalorder 1, %s21
    %p355 = scmp.lt.s32.totalorder %s21, 3
    %p356 = pnand %p354, %p355
    %p357 = pneg %p356
    // Predicated region
    $region9: #{transformer_forward.4} parent=5 // pred_check
      _
    $region10: #{transformer_forward.4} parent=5 // pred_check_branch
      %359 = sbr.rel (%p356) target = $region12
    $region11: #{transformer_forward.4} parent=5 // pred_region
      %s360 = ssub.s32 %s21, 1
      // Predicated region
      $region13: #{transformer_forward.4} parent=11 // pred_check
        %p361 = pneg %p82
      $region14: #{transformer_forward.4} parent=11 // pred_check_branch
        %363 = sbr.rel (%p361) target = $region16
      $region15: #{transformer_forward.4} parent=11 // pred_region
        _
      $region16: #{transformer_forward.4} parent=11 // pred_fallthru
        _
      // Predicated region
      $region17: #{transformer_forward.4} parent=11 // pred_check
        %p364 = pneg %p103
      $region18: #{transformer_forward.4} parent=11 // pred_check_branch
        %366 = sbr.rel (%p364) target = $region20
      $region19: #{transformer_forward.4} parent=11 // pred_region
        _
      $region20: #{transformer_forward.4} parent=11 // pred_fallthru
        _
      // Predicated region
      $region21: #{transformer_forward.4} parent=11 // pred_check
        %p367 = pneg %p124
      $region22: #{transformer_forward.4} parent=11 // pred_check_branch
        %369 = sbr.rel (%p367) target = $region24
      $region23: #{transformer_forward.4} parent=11 // pred_region
        _
      $region24: #{transformer_forward.4} parent=11 // pred_fallthru
        _
      // Predicated region
      $region25: #{transformer_forward.4} parent=11 // pred_check
        %p370 = pneg %p145
      $region26: #{transformer_forward.4} parent=11 // pred_check_branch
        %372 = sbr.rel (%p370) target = $region28
      $region27: #{transformer_forward.4} parent=11 // pred_region
        _
      $region28: #{transformer_forward.4} parent=11 // pred_fallthru
        _
      // Predicated region
      $region29: #{transformer_forward.4} parent=11 // pred_check
        %p373 = pneg %p166
      $region30: #{transformer_forward.4} parent=11 // pred_check_branch
        %375 = sbr.rel (%p373) target = $region32
      $region31: #{transformer_forward.4} parent=11 // pred_region
        _
      $region32: #{transformer_forward.4} parent=11 // pred_fallthru
        _
      // Predicated region
      $region33: #{transformer_forward.4} parent=11 // pred_check
        %p376 = pneg %p192
      $region34: #{transformer_forward.4} parent=11 // pred_check_branch
        %378 = sbr.rel (%p376) target = $region36
      $region35: #{transformer_forward.4} parent=11 // pred_region
        %s379 = smul.u32 4, %s30
        %p380 = scmp.lt.s32.totalorder %s379, 3
        %s381 = scalar_select %p380, %s379, 3
        %s382 = smul.addr %s381, 2
        %s383 = smul.addr %s382, 8
        %s384 = scalar_lea.vmem %s6, %s383
        %s385 = smul.u32 4, %s30
      $region36: #{transformer_forward.4} parent=11 // pred_fallthru
        _
      // Predicated region
      $region37: #{transformer_forward.4} parent=11 // pred_check
        %p386 = pneg %p213
      $region38: #{transformer_forward.4} parent=11 // pred_check_branch
        %388 = sbr.rel (%p386) target = $region40
      $region39: #{transformer_forward.4} parent=11 // pred_region
        _
      $region40: #{transformer_forward.4} parent=11 // pred_fallthru
        _
      // Predicated region
      $region41: #{transformer_forward.4} parent=11 // pred_check
        %p389 = pneg %p234
      $region42: #{transformer_forward.4} parent=11 // pred_check_branch
        %391 = sbr.rel (%p389) target = $region44
      $region43: #{transformer_forward.4} parent=11 // pred_region
        _
      $region44: #{transformer_forward.4} parent=11 // pred_fallthru
        _
      // Predicated region
      $region45: #{transformer_forward.4} parent=11 // pred_check
        %p392 = pneg %p255
      $region46: #{transformer_forward.4} parent=11 // pred_check_branch
        %394 = sbr.rel (%p392) target = $region48
      $region47: #{transformer_forward.4} parent=11 // pred_region
        _
      $region48: #{transformer_forward.4} parent=11 // pred_fallthru
        _
      // Predicated region
      $region49: #{transformer_forward.4} parent=11 // pred_check
        %p395 = pneg %p276
      $region50: #{transformer_forward.4} parent=11 // pred_check_branch
        %397 = sbr.rel (%p395) target = $region52
      $region51: #{transformer_forward.4} parent=11 // pred_region
        _
      $region52: #{transformer_forward.4} parent=11 // pred_fallthru
        _
      // Predicated region
      $region53: #{transformer_forward.4} parent=11 // pred_check
        %p398 = pneg %p297
      $region54: #{transformer_forward.4} parent=11 // pred_check_branch
        %400 = sbr.rel (%p398) target = $region56
      $region55: #{transformer_forward.4} parent=11 // pred_region
        _
      $region56: #{transformer_forward.4} parent=11 // pred_fallthru
        _
      // Predicated region
      $region57: #{transformer_forward.4} parent=11 // pred_check
        %p401 = pneg %p318
      $region58: #{transformer_forward.4} parent=11 // pred_check_branch
        %403 = sbr.rel (%p401) target = $region60
      $region59: #{transformer_forward.4} parent=11 // pred_region
        _
      $region60: #{transformer_forward.4} parent=11 // pred_fallthru
        _
    $region12: #{transformer_forward.4} parent=5 // pred_fallthru
      _
    %p404 = scmp.lt.s32.totalorder %s21, 2
    // Predicated region
    $region61: #{transformer_forward.4} parent=5 // pred_check
      %p405 = pneg %p404
    $region62: #{transformer_forward.4} parent=5 // pred_check_branch
      %407 = sbr.rel (%p405) target = $region64
    $region63: #{transformer_forward.4} parent=5 // pred_region
      // Predicated region
      $region65: #{transformer_forward.4} parent=63 // pred_check
        %p408 = pneg %p55
      $region66: #{transformer_forward.4} parent=63 // pred_check_branch
        %410 = sbr.rel (%p408) target = $region68
      $region67: #{transformer_forward.4} parent=63 // pred_region
        %s411 = smul.u32 4, %s28
        %p412 = scmp.lt.s32.totalorder %s29, 1
        %s413 = scalar_select %p412, %s29, 1
        %p414 = scmp.lt.s32.totalorder %s411, 3
        %s415 = scalar_select %p414, %s411, 3
        %s416 = smul.addr %s415, 2
        %s417 = smul.addr %s413, 8
        %s418 = sadd.s32 %s416, %s417
        %s419 = smul.addr %s418, 8
        %s420 = scalar_lea.vmem %s0, %s419
        %s421 = smul.u32 4, %s28
      $region68: #{transformer_forward.4} parent=63 // pred_fallthru
        _
    $region64: #{transformer_forward.4} parent=5 // pred_fallthru
      _
    %p422 = scmp.le.s32.totalorder 1, %s21
    %p423 = scmp.lt.s32.totalorder %s21, 3
    %p424 = pnand %p422, %p423
    %p425 = pneg %p424
    // Predicated region
    $region69: #{transformer_forward.4} parent=5 // pred_check
      _
    $region70: #{transformer_forward.4} parent=5 // pred_check_branch
      %427 = sbr.rel (%p424) target = $region72
    $region71: #{transformer_forward.4} parent=5 // pred_region
      %s428 = ssub.s32 %s21, 1
      %s429 = smul.u32 4, %s30
      %p430 = scmp.lt.s32.totalorder %s31, 1
      %s431 = scalar_select %p430, %s31, 1
      %p432 = scmp.lt.s32.totalorder %s429, 3
      %s433 = scalar_select %p432, %s429, 3
      %s434 = smul.addr %s433, 2
      %s435 = smul.addr %s431, 8
      %s436 = sadd.s32 %s434, %s435
      %s437 = smul.addr %s436, 8
      %s438 = scalar_lea.vmem %s0, %s437
      %p439 = pneg %p61
      %p440 = pneg %p58
      %p441 = pneg %p82
      %p442 = pneg %p79
      %p443 = pneg %p103
      %p444 = pneg %p100
      %p445 = pneg %p124
      %p446 = pneg %p121
      %p447 = pneg %p145
      %p448 = pneg %p142
      %p449 = pneg %p166
      %p450 = pneg %p163
      %s451 = smul.u32 4, %s30
      %p452 = scmp.lt.s32.totalorder %s451, 3
      %s453 = scalar_select %p452, %s451, 3
      %s454 = smul.addr %s453, 2
      %s455 = smul.addr %s454, 8
      %s456 = scalar_lea.vmem %s6, %s455
      %p457 = pneg %p192
      %p458 = pneg %p189
      %p459 = pneg %p213
      %p460 = pneg %p210
      %p461 = pneg %p234
      %p462 = pneg %p231
      %p463 = pneg %p255
      %p464 = pneg %p252
      %p465 = pneg %p276
      %p466 = pneg %p273
      %p467 = pneg %p297
      %p468 = pneg %p294
      %p469 = pneg %p318
      %p470 = pneg %p315
      %p471 = pneg %p346
      %p472 = pneg %p343
      %s473 = smul.u32 4, %s30
      %p474 = scmp.lt.s32.totalorder %s31, 1
      %s475 = scalar_select %p474, %s31, 1
      %p476 = scmp.lt.s32.totalorder %s473, 3
      %s477 = scalar_select %p476, %s473, 3
      %s478 = smul.addr %s477, 2
      %s479 = smul.addr %s475, 8
      %s480 = sadd.s32 %s478, %s479
      %s481 = smul.addr %s480, 8
      %s482 = scalar_lea.vmem %s13, %s481
      %s483 = smul.u32 4, %s30
      %p484 = scmp.lt.s32.totalorder %s31, 1
      %s485 = scalar_select %p484, %s31, 1
      %p486 = scmp.lt.s32.totalorder %s483, 3
      %s487 = scalar_select %p486, %s483, 3
      %s488 = smul.addr %s487, 2
      %s489 = smul.addr %s485, 8
      %s490 = sadd.s32 %s488, %s489
      %s491 = smul.addr %s490, 8
      %s492 = scalar_lea.vmem %s0, %s491
      %s493 = smul.u32 4, %s30
      %s494 = smul.u32 4, %s30
      %p495 = scmp.lt.s32.totalorder %s494, 3
      %s496 = scalar_select %p495, %s494, 3
      %s497 = smul.addr %s496, 2
      %s498 = smul.addr %s497, 8
      %s499 = scalar_lea.vmem %s6, %s498
      %s500 = smul.u32 4, %s30
      %s501 = smul.u32 4, %s30
      %p502 = scmp.lt.s32.totalorder %s31, 1
      %s503 = scalar_select %p502, %s31, 1
      %p504 = scmp.lt.s32.totalorder %s501, 3
      %s505 = scalar_select %p504, %s501, 3
      %s506 = smul.addr %s505, 2
      %s507 = smul.addr %s503, 8
      %s508 = sadd.s32 %s506, %s507
      %s509 = smul.addr %s508, 8
      %s510 = scalar_lea.vmem %s13, %s509
      %s511 = smul.u32 4, %s30
      %v512 = vld [vmem:[%s492] sm:$0xff]
      %v513 = vld [vmem:[%s492 + $0x8] sm:$0xff]
      %v514 = vld [vmem:[%s492 + $0x10] sm:$0xff]
      %v515 = vld [vmem:[%s492 + $0x18] sm:$0xff]
      %v516 = vld [vmem:[%s492 + $0x20] sm:$0xff]
      %v517 = vld [vmem:[%s492 + $0x28] sm:$0xff]
      %v518 = vld [vmem:[%s492 + $0x30] sm:$0xff]
      %v519 = vld [vmem:[%s492 + $0x38] sm:$0xff]
      %v520 = vld [vmem:[%s1] sm:$0x1]
      %v521 = vld [vmem:[%s2] sm:$0x1]
      %vm522 = vcmask 261120
      %v523 = vsel %vm522, %v512, 0.0
      %524 = vadd.xlane.f32.xlu0 %v523
      %v525 = vpop.xlane.xlu0 %524
      %v526 = vsel %vm522, %v513, 0.0
      %527 = vadd.xlane.f32.xlu0 %v526
      %v528 = vpop.xlane.xlu0 %527
      %v529 = vsel %vm522, %v514, 0.0
      %530 = vadd.xlane.f32.xlu0 %v529
      %v531 = vpop.xlane.xlu0 %530
      %v532 = vsel %vm522, %v515, 0.0
      %533 = vadd.xlane.f32.xlu0 %v532
      %v534 = vpop.xlane.xlu0 %533
      %v535 = vsel %vm522, %v516, 0.0
      %536 = vadd.xlane.f32.xlu0 %v535
      %v537 = vpop.xlane.xlu0 %536
      %v538 = vsel %vm522, %v517, 0.0
      %539 = vadd.xlane.f32.xlu0 %v538
      %v540 = vpop.xlane.xlu0 %539
      %v541 = vsel %vm522, %v518, 0.0
      %542 = vadd.xlane.f32.xlu0 %v541
      %v543 = vpop.xlane.xlu0 %542
      %v544 = vsel %vm522, %v519, 0.0
      %545 = vadd.xlane.f32.xlu0 %v544
      %v546 = vpop.xlane.xlu0 %545
      %v547 = vrcp.pop 32.0
      %v548 = vmul.f32 %v525, %v547
      %v549 = vmul.f32 %v528, %v547
      %v550 = vmul.f32 %v531, %v547
      %v551 = vmul.f32 %v534, %v547
      %v552 = vmul.f32 %v537, %v547
      %v553 = vmul.f32 %v540, %v547
      %v554 = vmul.f32 %v543, %v547
      %v555 = vmul.f32 %v546, %v547
      %v556 = vsub.f32 %v512, %v548
      %v557 = vsub.f32 %v513, %v549
      %v558 = vsub.f32 %v514, %v550
      %v559 = vsub.f32 %v515, %v551
      %v560 = vsub.f32 %v516, %v552
      %v561 = vsub.f32 %v517, %v553
      %v562 = vsub.f32 %v518, %v554
      %v563 = vsub.f32 %v519, %v555
      %v564 = vmul.f32 %v556, %v556
      %v565 = vmul.f32 %v557, %v557
      %v566 = vmul.f32 %v558, %v558
      %v567 = vmul.f32 %v559, %v559
      %v568 = vmul.f32 %v560, %v560
      %v569 = vmul.f32 %v561, %v561
      %v570 = vmul.f32 %v562, %v562
      %v571 = vmul.f32 %v563, %v563
      %v572 = vsel %vm522, %v564, 0.0
      %573 = vadd.xlane.f32.xlu0 %v572
      %v574 = vpop.xlane.xlu0 %573
      %v575 = vsel %vm522, %v565, 0.0
      %576 = vadd.xlane.f32.xlu0 %v575
      %v577 = vpop.xlane.xlu0 %576
      %v578 = vsel %vm522, %v566, 0.0
      %579 = vadd.xlane.f32.xlu0 %v578
      %v580 = vpop.xlane.xlu0 %579
      %v581 = vsel %vm522, %v567, 0.0
      %582 = vadd.xlane.f32.xlu0 %v581
      %v583 = vpop.xlane.xlu0 %582
      %v584 = vsel %vm522, %v568, 0.0
      %585 = vadd.xlane.f32.xlu0 %v584
      %v586 = vpop.xlane.xlu0 %585
      %v587 = vsel %vm522, %v569, 0.0
      %588 = vadd.xlane.f32.xlu0 %v587
      %v589 = vpop.xlane.xlu0 %588
      %v590 = vsel %vm522, %v570, 0.0
      %591 = vadd.xlane.f32.xlu0 %v590
      %v592 = vpop.xlane.xlu0 %591
      %v593 = vsel %vm522, %v571, 0.0
      %594 = vadd.xlane.f32.xlu0 %v593
      %v595 = vpop.xlane.xlu0 %594
      %v596 = vmul.f32 %v574, %v547
      %v597 = vmul.f32 %v577, %v547
      %v598 = vmul.f32 %v580, %v547
      %v599 = vmul.f32 %v583, %v547
      %v600 = vmul.f32 %v586, %v547
      %v601 = vmul.f32 %v589, %v547
      %v602 = vmul.f32 %v592, %v547
      %v603 = vmul.f32 %v595, %v547
      %v604 = vadd.f32 %v596, 1e-05
      %v605 = vadd.f32 %v597, 1e-05
      %v606 = vadd.f32 %v598, 1e-05
      %v607 = vadd.f32 %v599, 1e-05
      %v608 = vadd.f32 %v600, 1e-05
      %v609 = vadd.f32 %v601, 1e-05
      %v610 = vadd.f32 %v602, 1e-05
      %v611 = vadd.f32 %v603, 1e-05
      %v612 = vrsqrt.pop %v604
      %v613 = vrsqrt.pop %v605
      %v614 = vrsqrt.pop %v606
      %v615 = vrsqrt.pop %v607
      %v616 = vrsqrt.pop %v608
      %v617 = vrsqrt.pop %v609
      %v618 = vrsqrt.pop %v610
      %v619 = vrsqrt.pop %v611
      %v620 = vmul.f32 %v556, %v612
      %v621 = vmul.f32 %v557, %v613
      %v622 = vmul.f32 %v558, %v614
      %v623 = vmul.f32 %v559, %v615
      %v624 = vmul.f32 %v560, %v616
      %v625 = vmul.f32 %v561, %v617
      %v626 = vmul.f32 %v562, %v618
      %v627 = vmul.f32 %v563, %v619
      %v629 = vlaneseq
      %v630 = vshrl.u32 %v629, 7
      %v631 = vsub.s32 0, %v630
      %v632 = vrot.slane %v520, %v631
      %v634 = vmul.f32 %v620, %v632
      %v635 = vmul.f32 %v621, %v632
      %v636 = vmul.f32 %v622, %v632
      %v637 = vmul.f32 %v623, %v632
      %v638 = vmul.f32 %v624, %v632
      %v639 = vmul.f32 %v625, %v632
      %v640 = vmul.f32 %v626, %v632
      %v641 = vmul.f32 %v627, %v632
      %v643 = vlaneseq
      %v644 = vshrl.u32 %v643, 7
      %v645 = vsub.s32 0, %v644
      %v646 = vrot.slane %v521, %v645
      %v648 = vadd.f32 %v634, %v646
      %v649 = vadd.f32 %v635, %v646
      %v650 = vadd.f32 %v636, %v646
      %v651 = vadd.f32 %v637, %v646
      %v652 = vadd.f32 %v638, %v646
      %v653 = vadd.f32 %v639, %v646
      %v654 = vadd.f32 %v640, %v646
      %v655 = vadd.f32 %v641, %v646
      %v656 = vld [vmem:[%s3] sm:$0xff]
      %v657 = vld [vmem:[%s3 + $0x8] sm:$0xff]
      %v658 = vld [vmem:[%s3 + $0x10] sm:$0xff]
      %v659 = vld [vmem:[%s3 + $0x18] sm:$0xff]
      %v661 = vsel %vm522, %v648, 0
      %v664 = vsel %vm522, %v649, 0
      %v667 = vsel %vm522, %v650, 0
      %v670 = vsel %vm522, %v651, 0
      %v673 = vsel %vm522, %v652, 0
      %v676 = vsel %vm522, %v653, 0
      %v679 = vsel %vm522, %v654, 0
      %v682 = vsel %vm522, %v655, 0
      %684 = vmatprep.subr.mxu0 0.0
      %685 = vmatpush1.msra.mxu0 %v656
      %686 = vmatprep.subr.mxu0 0.0
      %687 = vmatpush1.msra.mxu0 %v657
      %688 = vmatprep.subr.mxu0 0.0
      %689 = vmatpush1.msra.mxu0 %v658
      %690 = vmatprep.subr.mxu0 0.0
      %691 = vmatpush1.msra.mxu0 %v659
      %692 = vmatprep.subr.mxu0 0.0
      %693 = vmatpush1.msra.mxu0 0.0
      %694 = vmatprep.subr.mxu0 0.0
      %695 = vmatpush1.msra.mxu0 0.0
      %696 = vmatprep.subr.mxu0 0.0
      %697 = vmatpush1.msra.mxu0 0.0
      %698 = vmatprep.subr.mxu0 0.0
      %699 = vmatpush1.msra.mxu0 0.0
      %700 = vmatprep.subr.mxu0 0.0
      %701 = vmatpush1.msra.mxu0 0.0
      %702 = vmatprep.subr.mxu0 0.0
      %703 = vmatpush1.msra.mxu0 0.0
      %704 = vmatprep.subr.mxu0 0.0
      %705 = vmatpush1.msra.mxu0 0.0
      %706 = vmatprep.subr.mxu0 0.0
      %707 = vmatpush1.msra.mxu0 0.0
      %708 = vmatprep.subr.mxu0 0.0
      %709 = vmatpush1.msra.mxu0 0.0
      %710 = vmatprep.subr.mxu0 0.0
      %711 = vmatpush1.msra.mxu0 0.0
      %712 = vmatprep.subr.mxu0 0.0
      %713 = vmatpush1.msra.mxu0 0.0
      %714 = vmatprep.subr.mxu0 0.0
      %715 = vmatpush1.msra.mxu0 0.0
      %716 = vmatprep.subr.mxu0 0.0
      %717 = vmatpush1.msra.mxu0 0.0
      %718 = vmatprep.subr.mxu0 0.0
      %719 = vmatpush1.msra.mxu0 0.0
      %720 = vmatprep.subr.mxu0 0.0
      %721 = vmatpush1.msra.mxu0 0.0
      %722 = vmatprep.subr.mxu0 0.0
      %723 = vmatpush1.msra.mxu0 0.0
      %724 = vmatprep.subr.mxu0 0.0
      %725 = vmatpush1.msra.mxu0 0.0
      %726 = vmatprep.subr.mxu0 0.0
      %727 = vmatpush1.msra.mxu0 0.0
      %728 = vmatprep.subr.mxu0 0.0
      %729 = vmatpush1.msra.mxu0 0.0
      %730 = vmatprep.subr.mxu0 0.0
      %731 = vmatpush1.msra.mxu0 0.0
      %732 = vmatprep.subr.mxu0 0.0
      %733 = vmatpush1.msra.mxu0 0.0
      %734 = vmatprep.subr.mxu0 0.0
      %735 = vmatpush1.msra.mxu0 0.0
      %736 = vmatprep.subr.mxu0 0.0
      %737 = vmatpush1.msra.mxu0 0.0
      %738 = vmatprep.subr.mxu0 0.0
      %739 = vmatpush1.msra.mxu0 0.0
      %740 = vmatprep.subr.mxu0 0.0
      %741 = vmatpush1.msra.mxu0 0.0
      %742 = vmatprep.subr.mxu0 0.0
      %743 = vmatpush1.msra.mxu0 0.0
      %744 = vmatprep.subr.mxu0 0.0
      %745 = vmatpush1.msra.mxu0 0.0
      %746 = vmatprep.subr.mxu0 0.0
      %747 = vmatpush1.msra.mxu0 0.0
      %748 = vmatprep.mubr.f32.mxu0 0.0
      %749 = vmatmul.mubr.f32.gmra.mrb[0].mxu0 %v661
      %v750 = vpop.f32.mrb[0].mxu0
      %v751 = vadd.f32 0.0, %v750
      %v752 = vpop.f32.mrb[0].mxu0
      %753 = vmatprep.mubr.f32.mxu0 0.0
      %754 = vmatmul.mubr.f32.gmra.mrb[0].mxu0 %v664
      %v755 = vpop.f32.mrb[0].mxu0
      %v756 = vadd.f32 0.0, %v755
      %v757 = vpop.f32.mrb[0].mxu0
      %758 = vmatprep.mubr.f32.mxu0 0.0
      %759 = vmatmul.mubr.f32.gmra.mrb[0].mxu0 %v667
      %v760 = vpop.f32.mrb[0].mxu0
      %v761 = vadd.f32 0.0, %v760
      %v762 = vpop.f32.mrb[0].mxu0
      %763 = vmatprep.mubr.f32.mxu0 0.0
      %764 = vmatmul.mubr.f32.gmra.mrb[0].mxu0 %v670
      %v765 = vpop.f32.mrb[0].mxu0
      %v766 = vadd.f32 0.0, %v765
      %v767 = vpop.f32.mrb[0].mxu0
      %768 = vmatprep.mubr.f32.mxu0 0.0
      %769 = vmatmul.mubr.f32.gmra.mrb[0].mxu0 %v673
      %v770 = vpop.f32.mrb[0].mxu0
      %v771 = vadd.f32 0.0, %v770
      %v772 = vpop.f32.mrb[0].mxu0
      %773 = vmatprep.mubr.f32.mxu0 0.0
      %774 = vmatmul.mubr.f32.gmra.mrb[0].mxu0 %v676
      %v775 = vpop.f32.mrb[0].mxu0
      %v776 = vadd.f32 0.0, %v775
      %v777 = vpop.f32.mrb[0].mxu0
      %778 = vmatprep.mubr.f32.mxu0 0.0
      %779 = vmatmul.mubr.f32.gmra.mrb[0].mxu0 %v679
      %v780 = vpop.f32.mrb[0].mxu0
      %v781 = vadd.f32 0.0, %v780
      %v782 = vpop.f32.mrb[0].mxu0
      %783 = vmatprep.mubr.f32.mxu0 0.0
      %784 = vmatmul.mubr.f32.gmra.mrb[0].mxu0 %v682
      %v785 = vpop.f32.mrb[0].mxu0
      %v786 = vadd.f32 0.0, %v785
      %v787 = vpop.f32.mrb[0].mxu0
      %788 = vdwg.mxu0
      %v789 = vmul.f32 %v751, 0.125
      %v790 = vmul.f32 %v756, 0.125
      %v791 = vmul.f32 %v761, 0.125
      %v792 = vmul.f32 %v766, 0.125
      %v793 = vmul.f32 %v771, 0.125
      %v794 = vmul.f32 %v776, 0.125
      %v795 = vmul.f32 %v781, 0.125
      %v796 = vmul.f32 %v786, 0.125
      %v797 = vld [vmem:[%s4] sm:$0xff]
      %v798 = vld [vmem:[%s4 + $0x8] sm:$0xff]
      %v799 = vld [vmem:[%s4 + $0x10] sm:$0xff]
      %v800 = vld [vmem:[%s4 + $0x18] sm:$0xff]
      %801 = vmatprep.subr.mxu0 0.0
      %802 = vmatpush1.msra.mxu0 %v797
      %803 = vmatprep.subr.mxu0 0.0
      %804 = vmatpush1.msra.mxu0 %v798
      %805 = vmatprep.subr.mxu0 0.0
      %806 = vmatpush1.msra.mxu0 %v799
      %807 = vmatprep.subr.mxu0 0.0
      %808 = vmatpush1.msra.mxu0 %v800
      %809 = vmatprep.subr.mxu0 0.0
      %810 = vmatpush1.msra.mxu0 0.0
      %811 = vmatprep.subr.mxu0 0.0
      %812 = vmatpush1.msra.mxu0 0.0
      %813 = vmatprep.subr.mxu0 0.0
      %814 = vmatpush1.msra.mxu0 0.0
      %815 = vmatprep.subr.mxu0 0.0
      %816 = vmatpush1.msra.mxu0 0.0
      %817 = vmatprep.subr.mxu0 0.0
      %818 = vmatpush1.msra.mxu0 0.0
      %819 = vmatprep.subr.mxu0 0.0
      %820 = vmatpush1.msra.mxu0 0.0
      %821 = vmatprep.subr.mxu0 0.0
      %822 = vmatpush1.msra.mxu0 0.0
      %823 = vmatprep.subr.mxu0 0.0
      %824 = vmatpush1.msra.mxu0 0.0
      %825 = vmatprep.subr.mxu0 0.0
      %826 = vmatpush1.msra.mxu0 0.0
      %827 = vmatprep.subr.mxu0 0.0
      %828 = vmatpush1.msra.mxu0 0.0
      %829 = vmatprep.subr.mxu0 0.0
      %830 = vmatpush1.msra.mxu0 0.0
      %831 = vmatprep.subr.mxu0 0.0
      %832 = vmatpush1.msra.mxu0 0.0
      %833 = vmatprep.subr.mxu0 0.0
      %834 = vmatpush1.msra.mxu0 0.0
      %835 = vmatprep.subr.mxu0 0.0
      %836 = vmatpush1.msra.mxu0 0.0
      %837 = vmatprep.subr.mxu0 0.0
      %838 = vmatpush1.msra.mxu0 0.0
      %839 = vmatprep.subr.mxu0 0.0
      %840 = vmatpush1.msra.mxu0 0.0
      %841 = vmatprep.subr.mxu0 0.0
      %842 = vmatpush1.msra.mxu0 0.0
      %843 = vmatprep.subr.mxu0 0.0
      %844 = vmatpush1.msra.mxu0 0.0
      %845 = vmatprep.subr.mxu0 0.0
      %846 = vmatpush1.msra.mxu0 0.0
      %847 = vmatprep.subr.mxu0 0.0
      %848 = vmatpush1.msra.mxu0 0.0
      %849 = vmatprep.subr.mxu0 0.0
      %850 = vmatpush1.msra.mxu0 0.0
      %851 = vmatprep.subr.mxu0 0.0
      %852 = vmatpush1.msra.mxu0 0.0
      %853 = vmatprep.subr.mxu0 0.0
      %854 = vmatpush1.msra.mxu0 0.0
      %855 = vmatprep.subr.mxu0 0.0
      %856 = vmatpush1.msra.mxu0 0.0
      %857 = vmatprep.subr.mxu0 0.0
      %858 = vmatpush1.msra.mxu0 0.0
      %859 = vmatprep.subr.mxu0 0.0
      %860 = vmatpush1.msra.mxu0 0.0
      %861 = vmatprep.subr.mxu0 0.0
      %862 = vmatpush1.msra.mxu0 0.0
      %863 = vmatprep.subr.mxu0 0.0
      %864 = vmatpush1.msra.mxu0 0.0
      %865 = vmatprep.mubr.f32.mxu0 0.0
      %866 = vmatmul.mubr.f32.gmra.mrb[0].mxu0 %v661
      %v867 = vpop.f32.mrb[0].mxu0
      %v868 = vadd.f32 0.0, %v867
      %v869 = vpop.f32.mrb[0].mxu0
      %870 = vmatprep.mubr.f32.mxu0 0.0
      %871 = vmatmul.mubr.f32.gmra.mrb[0].mxu0 %v664
      %v872 = vpop.f32.mrb[0].mxu0
      %v873 = vadd.f32 0.0, %v872
      %v874 = vpop.f32.mrb[0].mxu0
      %875 = vmatprep.mubr.f32.mxu0 0.0
      %876 = vmatmul.mubr.f32.gmra.mrb[0].mxu0 %v667
      %v877 = vpop.f32.mrb[0].mxu0
      %v878 = vadd.f32 0.0, %v877
      %v879 = vpop.f32.mrb[0].mxu0
      %880 = vmatprep.mubr.f32.mxu0 0.0
      %881 = vmatmul.mubr.f32.gmra.mrb[0].mxu0 %v670
      %v882 = vpop.f32.mrb[0].mxu0
      %v883 = vadd.f32 0.0, %v882
      %v884 = vpop.f32.mrb[0].mxu0
      %885 = vmatprep.mubr.f32.mxu0 0.0
      %886 = vmatmul.mubr.f32.gmra.mrb[0].mxu0 %v673
      %v887 = vpop.f32.mrb[0].mxu0
      %v888 = vadd.f32 0.0, %v887
      %v889 = vpop.f32.mrb[0].mxu0
      %890 = vmatprep.mubr.f32.mxu0 0.0
      %891 = vmatmul.mubr.f32.gmra.mrb[0].mxu0 %v676
      %v892 = vpop.f32.mrb[0].mxu0
      %v893 = vadd.f32 0.0, %v892
      %v894 = vpop.f32.mrb[0].mxu0
      %895 = vmatprep.mubr.f32.mxu0 0.0
      %896 = vmatmul.mubr.f32.gmra.mrb[0].mxu0 %v679
      %v897 = vpop.f32.mrb[0].mxu0
      %v898 = vadd.f32 0.0, %v897
      %v899 = vpop.f32.mrb[0].mxu0
      %900 = vmatprep.mubr.f32.mxu0 0.0
      %901 = vmatmul.mubr.f32.gmra.mrb[0].mxu0 %v682
      %v902 = vpop.f32.mrb[0].mxu0
      %v903 = vadd.f32 0.0, %v902
      %v904 = vpop.f32.mrb[0].mxu0
      %905 = vdwg.mxu0
      %v906 = vld [vmem:[%s5] sm:$0xff]
      %v907 = vld [vmem:[%s5 + $0x8] sm:$0xff]
      %v908 = vld [vmem:[%s5 + $0x10] sm:$0xff]
      %v909 = vld [vmem:[%s5 + $0x18] sm:$0xff]
      %910 = vmatprep.subr.mxu0 0.0
      %911 = vmatpush1.msra.mxu0 %v906
      %912 = vmatprep.subr.mxu0 0.0
      %913 = vmatpush1.msra.mxu0 %v907
      %914 = vmatprep.subr.mxu0 0.0
      %915 = vmatpush1.msra.mxu0 %v908
      %916 = vmatprep.subr.mxu0 0.0
      %917 = vmatpush1.msra.mxu0 %v909
      %918 = vmatprep.subr.mxu0 0.0
      %919 = vmatpush1.msra.mxu0 0.0
      %920 = vmatprep.subr.mxu0 0.0
      %921 = vmatpush1.msra.mxu0 0.0
      %922 = vmatprep.subr.mxu0 0.0
      %923 = vmatpush1.msra.mxu0 0.0
      %924 = vmatprep.subr.mxu0 0.0
      %925 = vmatpush1.msra.mxu0 0.0
      %926 = vmatprep.subr.mxu0 0.0
      %927 = vmatpush1.msra.mxu0 0.0
      %928 = vmatprep.subr.mxu0 0.0
      %929 = vmatpush1.msra.mxu0 0.0
      %930 = vmatprep.subr.mxu0 0.0
      %931 = vmatpush1.msra.mxu0 0.0
      %932 = vmatprep.subr.mxu0 0.0
      %933 = vmatpush1.msra.mxu0 0.0
      %934 = vmatprep.subr.mxu0 0.0
      %935 = vmatpush1.msra.mxu0 0.0
      %936 = vmatprep.subr.mxu0 0.0
      %937 = vmatpush1.msra.mxu0 0.0
      %938 = vmatprep.subr.mxu0 0.0
      %939 = vmatpush1.msra.mxu0 0.0
      %940 = vmatprep.subr.mxu0 0.0
      %941 = vmatpush1.msra.mxu0 0.0
      %942 = vmatprep.subr.mxu0 0.0
      %943 = vmatpush1.msra.mxu0 0.0
      %944 = vmatprep.subr.mxu0 0.0
      %945 = vmatpush1.msra.mxu0 0.0
      %946 = vmatprep.subr.mxu0 0.0
      %947 = vmatpush1.msra.mxu0 0.0
      %948 = vmatprep.subr.mxu0 0.0
      %949 = vmatpush1.msra.mxu0 0.0
      %950 = vmatprep.subr.mxu0 0.0
      %951 = vmatpush1.msra.mxu0 0.0
      %952 = vmatprep.subr.mxu0 0.0
      %953 = vmatpush1.msra.mxu0 0.0
      %954 = vmatprep.subr.mxu0 0.0
      %955 = vmatpush1.msra.mxu0 0.0
      %956 = vmatprep.subr.mxu0 0.0
      %957 = vmatpush1.msra.mxu0 0.0
      %958 = vmatprep.subr.mxu0 0.0
      %959 = vmatpush1.msra.mxu0 0.0
      %960 = vmatprep.subr.mxu0 0.0
      %961 = vmatpush1.msra.mxu0 0.0
      %962 = vmatprep.subr.mxu0 0.0
      %963 = vmatpush1.msra.mxu0 0.0
      %964 = vmatprep.subr.mxu0 0.0
      %965 = vmatpush1.msra.mxu0 0.0
      %966 = vmatprep.subr.mxu0 0.0
      %967 = vmatpush1.msra.mxu0 0.0
      %968 = vmatprep.subr.mxu0 0.0
      %969 = vmatpush1.msra.mxu0 0.0
      %970 = vmatprep.subr.mxu0 0.0
      %971 = vmatpush1.msra.mxu0 0.0
      %972 = vmatprep.subr.mxu0 0.0
      %973 = vmatpush1.msra.mxu0 0.0
      %974 = vmatprep.mubr.f32.mxu0 0.0
      %975 = vmatmul.mubr.f32.gmra.mrb[0].mxu0 %v661
      %v976 = vpop.f32.mrb[0].mxu0
      %v977 = vadd.f32 0.0, %v976
      %v978 = vpop.f32.mrb[0].mxu0
      %979 = vmatprep.mubr.f32.mxu0 0.0
      %980 = vmatmul.mubr.f32.gmra.mrb[0].mxu0 %v664
      %v981 = vpop.f32.mrb[0].mxu0
      %v982 = vadd.f32 0.0, %v981
      %v983 = vpop.f32.mrb[0].mxu0
      %984 = vmatprep.mubr.f32.mxu0 0.0
      %985 = vmatmul.mubr.f32.gmra.mrb[0].mxu0 %v667
      %v986 = vpop.f32.mrb[0].mxu0
      %v987 = vadd.f32 0.0, %v986
      %v988 = vpop.f32.mrb[0].mxu0
      %989 = vmatprep.mubr.f32.mxu0 0.0
      %990 = vmatmul.mubr.f32.gmra.mrb[0].mxu0 %v670
      %v991 = vpop.f32.mrb[0].mxu0
      %v992 = vadd.f32 0.0, %v991
      %v993 = vpop.f32.mrb[0].mxu0
      %994 = vmatprep.mubr.f32.mxu0 0.0
      %995 = vmatmul.mubr.f32.gmra.mrb[0].mxu0 %v673
      %v996 = vpop.f32.mrb[0].mxu0
      %v997 = vadd.f32 0.0, %v996
      %v998 = vpop.f32.mrb[0].mxu0
      %999 = vmatprep.mubr.f32.mxu0 0.0
      %1000 = vmatmul.mubr.f32.gmra.mrb[0].mxu0 %v676
      %v1001 = vpop.f32.mrb[0].mxu0
      %v1002 = vadd.f32 0.0, %v1001
      %v1003 = vpop.f32.mrb[0].mxu0
      %1004 = vmatprep.mubr.f32.mxu0 0.0
      %1005 = vmatmul.mubr.f32.gmra.mrb[0].mxu0 %v679
      %v1006 = vpop.f32.mrb[0].mxu0
      %v1007 = vadd.f32 0.0, %v1006
      %v1008 = vpop.f32.mrb[0].mxu0
      %1009 = vmatprep.mubr.f32.mxu0 0.0
      %1010 = vmatmul.mubr.f32.gmra.mrb[0].mxu0 %v682
      %v1011 = vpop.f32.mrb[0].mxu0
      %v1012 = vadd.f32 0.0, %v1011
      %v1013 = vpop.f32.mrb[0].mxu0
      %1014 = vdwg.mxu0
      %v1016 = vsel %vm522, %v789, 0
      %v1019 = vsel %vm522, %v790, 0
      %v1022 = vsel %vm522, %v868, 0
      %v1025 = vsel %vm522, %v873, 0
      %1027 = vmatprep.subr.mxu0 0.0
      %1028 = vmatpush1.xpose.msra.mxu0 %v1022
      %1029 = vmatprep.subr.mxu0 0.0
      %1030 = vmatpush1.xpose.msra.mxu0 %v1025
      %1031 = vmatprep.subr.mxu0 0.0
      %1032 = vmatpush1.xpose.msra.mxu0 0.0
      %1033 = vmatprep.subr.mxu0 0.0
      %1034 = vmatpush1.xpose.msra.mxu0 0.0
      %1035 = vmatprep.subr.mxu0 0.0
      %1036 = vmatpush1.xpose.msra.mxu0 0.0
      %1037 = vmatprep.subr.mxu0 0.0
      %1038 = vmatpush1.xpose.msra.mxu0 0.0
      %1039 = vmatprep.subr.mxu0 0.0
      %1040 = vmatpush1.xpose.msra.mxu0 0.0
      %1041 = vmatprep.subr.mxu0 0.0
      %1042 = vmatpush1.xpose.msra.mxu0 0.0
      %1043 = vmatprep.subr.mxu0 0.0
      %1044 = vmatpush1.xpose.msra.mxu0 0.0
      %1045 = vmatprep.subr.mxu0 0.0
      %1046 = vmatpush1.xpose.msra.mxu0 0.0
      %1047 = vmatprep.subr.mxu0 0.0
      %1048 = vmatpush1.xpose.msra.mxu0 0.0
      %1049 = vmatprep.subr.mxu0 0.0
      %1050 = vmatpush1.xpose.msra.mxu0 0.0
      %1051 = vmatprep.subr.mxu0 0.0
      %1052 = vmatpush1.xpose.msra.mxu0 0.0
      %1053 = vmatprep.subr.mxu0 0.0
      %1054 = vmatpush1.xpose.msra.mxu0 0.0
      %1055 = vmatprep.subr.mxu0 0.0
      %1056 = vmatpush1.xpose.msra.mxu0 0.0
      %1057 = vmatprep.subr.mxu0 0.0
      %1058 = vmatpush1.xpose.msra.mxu0 0.0
      %1059 = vmatprep.subr.mxu0 0.0
      %1060 = vmatpush1.xpose.msra.mxu0 0.0
      %1061 = vmatprep.subr.mxu0 0.0
      %1062 = vmatpush1.xpose.msra.mxu0 0.0
      %1063 = vmatprep.subr.mxu0 0.0
      %1064 = vmatpush1.xpose.msra.mxu0 0.0
      %1065 = vmatprep.subr.mxu0 0.0
      %1066 = vmatpush1.xpose.msra.mxu0 0.0
      %1067 = vmatprep.subr.mxu0 0.0
      %1068 = vmatpush1.xpose.msra.mxu0 0.0
      %1069 = vmatprep.subr.mxu0 0.0
      %1070 = vmatpush1.xpose.msra.mxu0 0.0
      %1071 = vmatprep.subr.mxu0 0.0
      %1072 = vmatpush1.xpose.msra.mxu0 0.0
      %1073 = vmatprep.subr.mxu0 0.0
      %1074 = vmatpush1.xpose.msra.mxu0 0.0
      %1075 = vmatprep.subr.mxu0 0.0
      %1076 = vmatpush1.xpose.msra.mxu0 0.0
      %1077 = vmatprep.subr.mxu0 0.0
      %1078 = vmatpush1.xpose.msra.mxu0 0.0
      %1079 = vmatprep.subr.mxu0 0.0
      %1080 = vmatpush1.xpose.msra.mxu0 0.0
      %1081 = vmatprep.subr.mxu0 0.0
      %1082 = vmatpush1.xpose.msra.mxu0 0.0
      %1083 = vmatprep.subr.mxu0 0.0
      %1084 = vmatpush1.xpose.msra.mxu0 0.0
      %1085 = vmatprep.subr.mxu0 0.0
      %1086 = vmatpush1.xpose.msra.mxu0 0.0
      %1087 = vmatprep.subr.mxu0 0.0
      %1088 = vmatpush1.xpose.msra.mxu0 0.0
      %1089 = vmatprep.subr.mxu0 0.0
      %1090 = vmatpush1.xpose.msra.mxu0 0.0
      %1091 = vmatprep.mubr.f32.mxu0 0.0
      %1092 = vmatmul.mubr.f32.gmra.mrb[0].mxu0 %v1016
      %v1093 = vpop.f32.mrb[0].mxu0
      %v1094 = vadd.f32 0.0, %v1093
      %v1095 = vpop.f32.mrb[0].mxu0
      %1096 = vmatprep.mubr.f32.mxu0 0.0
      %1097 = vmatmul.mubr.f32.gmra.mrb[0].mxu0 %v1019
      %v1098 = vpop.f32.mrb[0].mxu0
      %v1099 = vadd.f32 0.0, %v1098
      %v1100 = vpop.f32.mrb[0].mxu0
      %1101 = vdwg.mxu0
      %v1103 = vsel %vm522, %v791, 0
      %v1106 = vsel %vm522, %v792, 0
      %v1109 = vsel %vm522, %v878, 0
      %v1112 = vsel %vm522, %v883, 0
      %1114 = vmatprep.subr.mxu0 0.0
      %1115 = vmatpush1.xpose.msra.mxu0 %v1109
      %1116 = vmatprep.subr.mxu0 0.0
      %1117 = vmatpush1.xpose.msra.mxu0 %v1112
      %1118 = vmatprep.subr.mxu0 0.0
      %1119 = vmatpush1.xpose.msra.mxu0 0.0
      %1120 = vmatprep.subr.mxu0 0.0
      %1121 = vmatpush1.xpose.msra.mxu0 0.0
      %1122 = vmatprep.subr.mxu0 0.0
      %1123 = vmatpush1.xpose.msra.mxu0 0.0
      %1124 = vmatprep.subr.mxu0 0.0
      %1125 = vmatpush1.xpose.msra.mxu0 0.0
      %1126 = vmatprep.subr.mxu0 0.0
      %1127 = vmatpush1.xpose.msra.mxu0 0.0
      %1128 = vmatprep.subr.mxu0 0.0
      %1129 = vmatpush1.xpose.msra.mxu0 0.0
      %1130 = vmatprep.subr.mxu0 0.0
      %1131 = vmatpush1.xpose.msra.mxu0 0.0
      %1132 = vmatprep.subr.mxu0 0.0
      %1133 = vmatpush1.xpose.msra.mxu0 0.0
      %1134 = vmatprep.subr.mxu0 0.0
      %1135 = vmatpush1.xpose.msra.mxu0 0.0
      %1136 = vmatprep.subr.mxu0 0.0
      %1137 = vmatpush1.xpose.msra.mxu0 0.0
      %1138 = vmatprep.subr.mxu0 0.0
      %1139 = vmatpush1.xpose.msra.mxu0 0.0
      %1140 = vmatprep.subr.mxu0 0.0
      %1141 = vmatpush1.xpose.msra.mxu0 0.0
      %1142 = vmatprep.subr.mxu0 0.0
      %1143 = vmatpush1.xpose.msra.mxu0 0.0
      %1144 = vmatprep.subr.mxu0 0.0
      %1145 = vmatpush1.xpose.msra.mxu0 0.0
      %1146 = vmatprep.subr.mxu0 0.0
      %1147 = vmatpush1.xpose.msra.mxu0 0.0
      %1148 = vmatprep.subr.mxu0 0.0
      %1149 = vmatpush1.xpose.msra.mxu0 0.0
      %1150 = vmatprep.subr.mxu0 0.0
      %1151 = vmatpush1.xpose.msra.mxu0 0.0
      %1152 = vmatprep.subr.mxu0 0.0
      %1153 = vmatpush1.xpose.msra.mxu0 0.0
      %1154 = vmatprep.subr.mxu0 0.0
      %1155 = vmatpush1.xpose.msra.mxu0 0.0
      %1156 = vmatprep.subr.mxu0 0.0
      %1157 = vmatpush1.xpose.msra.mxu0 0.0
      %1158 = vmatprep.subr.mxu0 0.0
      %1159 = vmatpush1.xpose.msra.mxu0 0.0
      %1160 = vmatprep.subr.mxu0 0.0
      %1161 = vmatpush1.xpose.msra.mxu0 0.0
      %1162 = vmatprep.subr.mxu0 0.0
      %1163 = vmatpush1.xpose.msra.mxu0 0.0
      %1164 = vmatprep.subr.mxu0 0.0
      %1165 = vmatpush1.xpose.msra.mxu0 0.0
      %1166 = vmatprep.subr.mxu0 0.0
      %1167 = vmatpush1.xpose.msra.mxu0 0.0
      %1168 = vmatprep.subr.mxu0 0.0
      %1169 = vmatpush1.xpose.msra.mxu0 0.0
      %1170 = vmatprep.subr.mxu0 0.0
      %1171 = vmatpush1.xpose.msra.mxu0 0.0
      %1172 = vmatprep.subr.mxu0 0.0
      %1173 = vmatpush1.xpose.msra.mxu0 0.0
      %1174 = vmatprep.subr.mxu0 0.0
      %1175 = vmatpush1.xpose.msra.mxu0 0.0
      %1176 = vmatprep.subr.mxu0 0.0
      %1177 = vmatpush1.xpose.msra.mxu0 0.0
      %1178 = vmatprep.mubr.f32.mxu0 0.0
      %1179 = vmatmul.mubr.f32.gmra.mrb[0].mxu0 %v1103
      %v1180 = vpop.f32.mrb[0].mxu0
      %v1181 = vadd.f32 0.0, %v1180
      %v1182 = vpop.f32.mrb[0].mxu0
      %1183 = vmatprep.mubr.f32.mxu0 0.0
      %1184 = vmatmul.mubr.f32.gmra.mrb[0].mxu0 %v1106
      %v1185 = vpop.f32.mrb[0].mxu0
      %v1186 = vadd.f32 0.0, %v1185
      %v1187 = vpop.f32.mrb[0].mxu0
      %1188 = vdwg.mxu0
      %v1190 = vsel %vm522, %v793, 0
      %v1193 = vsel %vm522, %v794, 0
      %v1196 = vsel %vm522, %v888, 0
      %v1199 = vsel %vm522, %v893, 0
      %1201 = vmatprep.subr.mxu0 0.0
      %1202 = vmatpush1.xpose.msra.mxu0 %v1196
      %1203 = vmatprep.subr.mxu0 0.0
      %1204 = vmatpush1.xpose.msra.mxu0 %v1199
      %1205 = vmatprep.subr.mxu0 0.0
      %1206 = vmatpush1.xpose.msra.mxu0 0.0
      %1207 = vmatprep.subr.mxu0 0.0
      %1208 = vmatpush1.xpose.msra.mxu0 0.0
      %1209 = vmatprep.subr.mxu0 0.0
      %1210 = vmatpush1.xpose.msra.mxu0 0.0
      %1211 = vmatprep.subr.mxu0 0.0
      %1212 = vmatpush1.xpose.msra.mxu0 0.0
      %1213 = vmatprep.subr.mxu0 0.0
      %1214 = vmatpush1.xpose.msra.mxu0 0.0
      %1215 = vmatprep.subr.mxu0 0.0
      %1216 = vmatpush1.xpose.msra.mxu0 0.0
      %1217 = vmatprep.subr.mxu0 0.0
      %1218 = vmatpush1.xpose.msra.mxu0 0.0
      %1219 = vmatprep.subr.mxu0 0.0
      %1220 = vmatpush1.xpose.msra.mxu0 0.0
      %1221 = vmatprep.subr.mxu0 0.0
      %1222 = vmatpush1.xpose.msra.mxu0 0.0
      %1223 = vmatprep.subr.mxu0 0.0
      %1224 = vmatpush1.xpose.msra.mxu0 0.0
      %1225 = vmatprep.subr.mxu0 0.0
      %1226 = vmatpush1.xpose.msra.mxu0 0.0
      %1227 = vmatprep.subr.mxu0 0.0
      %1228 = vmatpush1.xpose.msra.mxu0 0.0
      %1229 = vmatprep.subr.mxu0 0.0
      %1230 = vmatpush1.xpose.msra.mxu0 0.0
      %1231 = vmatprep.subr.mxu0 0.0
      %1232 = vmatpush1.xpose.msra.mxu0 0.0
      %1233 = vmatprep.subr.mxu0 0.0
      %1234 = vmatpush1.xpose.msra.mxu0 0.0
      %1235 = vmatprep.subr.mxu0 0.0
      %1236 = vmatpush1.xpose.msra.mxu0 0.0
      %1237 = vmatprep.subr.mxu0 0.0
      %1238 = vmatpush1.xpose.msra.mxu0 0.0
      %1239 = vmatprep.subr.mxu0 0.0
      %1240 = vmatpush1.xpose.msra.mxu0 0.0
      %1241 = vmatprep.subr.mxu0 0.0
      %1242 = vmatpush1.xpose.msra.mxu0 0.0
      %1243 = vmatprep.subr.mxu0 0.0
      %1244 = vmatpush1.xpose.msra.mxu0 0.0
      %1245 = vmatprep.subr.mxu0 0.0
      %1246 = vmatpush1.xpose.msra.mxu0 0.0
      %1247 = vmatprep.subr.mxu0 0.0
      %1248 = vmatpush1.xpose.msra.mxu0 0.0
      %1249 = vmatprep.subr.mxu0 0.0
      %1250 = vmatpush1.xpose.msra.mxu0 0.0
      %1251 = vmatprep.subr.mxu0 0.0
      %1252 = vmatpush1.xpose.msra.mxu0 0.0
      %1253 = vmatprep.subr.mxu0 0.0
      %1254 = vmatpush1.xpose.msra.mxu0 0.0
      %1255 = vmatprep.subr.mxu0 0.0
      %1256 = vmatpush1.xpose.msra.mxu0 0.0
      %1257 = vmatprep.subr.mxu0 0.0
      %1258 = vmatpush1.xpose.msra.mxu0 0.0
      %1259 = vmatprep.subr.mxu0 0.0
      %1260 = vmatpush1.xpose.msra.mxu0 0.0
      %1261 = vmatprep.subr.mxu0 0.0
      %1262 = vmatpush1.xpose.msra.mxu0 0.0
      %1263 = vmatprep.subr.mxu0 0.0
      %1264 = vmatpush1.xpose.msra.mxu0 0.0
      %1265 = vmatprep.mubr.f32.mxu0 0.0
      %1266 = vmatmul.mubr.f32.gmra.mrb[0].mxu0 %v1190
      %v1267 = vpop.f32.mrb[0].mxu0
      %v1268 = vadd.f32 0.0, %v1267
      %v1269 = vpop.f32.mrb[0].mxu0
      %1270 = vmatprep.mubr.f32.mxu0 0.0
      %1271 = vmatmul.mubr.f32.gmra.mrb[0].mxu0 %v1193
      %v1272 = vpop.f32.mrb[0].mxu0
      %v1273 = vadd.f32 0.0, %v1272
      %v1274 = vpop.f32.mrb[0].mxu0
      %1275 = vdwg.mxu0
      %v1277 = vsel %vm522, %v795, 0
      %v1280 = vsel %vm522, %v796, 0
      %v1283 = vsel %vm522, %v898, 0
      %v1286 = vsel %vm522, %v903, 0
      %1288 = vmatprep.subr.mxu0 0.0
      %1289 = vmatpush1.xpose.msra.mxu0 %v1283
      %1290 = vmatprep.subr.mxu0 0.0
      %1291 = vmatpush1.xpose.msra.mxu0 %v1286
      %1292 = vmatprep.subr.mxu0 0.0
      %1293 = vmatpush1.xpose.msra.mxu0 0.0
      %1294 = vmatprep.subr.mxu0 0.0
      %1295 = vmatpush1.xpose.msra.mxu0 0.0
      %1296 = vmatprep.subr.mxu0 0.0
      %1297 = vmatpush1.xpose.msra.mxu0 0.0
      %1298 = vmatprep.subr.mxu0 0.0
      %1299 = vmatpush1.xpose.msra.mxu0 0.0
      %1300 = vmatprep.subr.mxu0 0.0
      %1301 = vmatpush1.xpose.msra.mxu0 0.0
      %1302 = vmatprep.subr.mxu0 0.0
      %1303 = vmatpush1.xpose.msra.mxu0 0.0
      %1304 = vmatprep.subr.mxu0 0.0
      %1305 = vmatpush1.xpose.msra.mxu0 0.0
      %1306 = vmatprep.subr.mxu0 0.0
      %1307 = vmatpush1.xpose.msra.mxu0 0.0
      %1308 = vmatprep.subr.mxu0 0.0
      %1309 = vmatpush1.xpose.msra.mxu0 0.0
      %1310 = vmatprep.subr.mxu0 0.0
      %1311 = vmatpush1.xpose.msra.mxu0 0.0
      %1312 = vmatprep.subr.mxu0 0.0
      %1313 = vmatpush1.xpose.msra.mxu0 0.0
      %1314 = vmatprep.subr.mxu0 0.0
      %1315 = vmatpush1.xpose.msra.mxu0 0.0
      %1316 = vmatprep.subr.mxu0 0.0
      %1317 = vmatpush1.xpose.msra.mxu0 0.0
      %1318 = vmatprep.subr.mxu0 0.0
      %1319 = vmatpush1.xpose.msra.mxu0 0.0
      %1320 = vmatprep.subr.mxu0 0.0
      %1321 = vmatpush1.xpose.msra.mxu0 0.0
      %1322 = vmatprep.subr.mxu0 0.0
      %1323 = vmatpush1.xpose.msra.mxu0 0.0
      %1324 = vmatprep.subr.mxu0 0.0
      %1325 = vmatpush1.xpose.msra.mxu0 0.0
      %1326 = vmatprep.subr.mxu0 0.0
      %1327 = vmatpush1.xpose.msra.mxu0 0.0
      %1328 = vmatprep.subr.mxu0 0.0
      %1329 = vmatpush1.xpose.msra.mxu0 0.0
      %1330 = vmatprep.subr.mxu0 0.0
      %1331 = vmatpush1.xpose.msra.mxu0 0.0
      %1332 = vmatprep.subr.mxu0 0.0
      %1333 = vmatpush1.xpose.msra.mxu0 0.0
      %1334 = vmatprep.subr.mxu0 0.0
      %1335 = vmatpush1.xpose.msra.mxu0 0.0
      %1336 = vmatprep.subr.mxu0 0.0
      %1337 = vmatpush1.xpose.msra.mxu0 0.0
      %1338 = vmatprep.subr.mxu0 0.0
      %1339 = vmatpush1.xpose.msra.mxu0 0.0
      %1340 = vmatprep.subr.mxu0 0.0
      %1341 = vmatpush1.xpose.msra.mxu0 0.0
      %1342 = vmatprep.subr.mxu0 0.0
      %1343 = vmatpush1.xpose.msra.mxu0 0.0
      %1344 = vmatprep.subr.mxu0 0.0
      %1345 = vmatpush1.xpose.msra.mxu0 0.0
      %1346 = vmatprep.subr.mxu0 0.0
      %1347 = vmatpush1.xpose.msra.mxu0 0.0
      %1348 = vmatprep.subr.mxu0 0.0
      %1349 = vmatpush1.xpose.msra.mxu0 0.0
      %1350 = vmatprep.subr.mxu0 0.0
      %1351 = vmatpush1.xpose.msra.mxu0 0.0
      %1352 = vmatprep.mubr.f32.mxu0 0.0
      %1353 = vmatmul.mubr.f32.gmra.mrb[0].mxu0 %v1277
      %v1354 = vpop.f32.mrb[0].mxu0
      %v1355 = vadd.f32 0.0, %v1354
      %v1356 = vpop.f32.mrb[0].mxu0
      %1357 = vmatprep.mubr.f32.mxu0 0.0
      %1358 = vmatmul.mubr.f32.gmra.mrb[0].mxu0 %v1280
      %v1359 = vpop.f32.mrb[0].mxu0
      %v1360 = vadd.f32 0.0, %v1359
      %v1361 = vpop.f32.mrb[0].mxu0
      %1362 = vdwg.mxu0
      %vm1363 = vcmask 130048
      %v1364 = vsel %vm1363, %v1094, -inf
      %1365 = vmax.xlane.f32.xlu0 %v1364
      %v1366 = vpop.xlane.xlu0 %1365
      %v1367 = vsel %vm1363, %v1099, -inf
      %1368 = vmax.xlane.f32.xlu0 %v1367
      %v1369 = vpop.xlane.xlu0 %1368
      %v1370 = vsel %vm1363, %v1181, -inf
      %1371 = vmax.xlane.f32.xlu0 %v1370
      %v1372 = vpop.xlane.xlu0 %1371
      %v1373 = vsel %vm1363, %v1186, -inf
      %1374 = vmax.xlane.f32.xlu0 %v1373
      %v1375 = vpop.xlane.xlu0 %1374
      %v1376 = vsel %vm1363, %v1268, -inf
      %1377 = vmax.xlane.f32.xlu0 %v1376
      %v1378 = vpop.xlane.xlu0 %1377
      %v1379 = vsel %vm1363, %v1273, -inf
      %1380 = vmax.xlane.f32.xlu0 %v1379
      %v1381 = vpop.xlane.xlu0 %1380
      %v1382 = vsel %vm1363, %v1355, -inf
      %1383 = vmax.xlane.f32.xlu0 %v1382
      %v1384 = vpop.xlane.xlu0 %1383
      %v1385 = vsel %vm1363, %v1360, -inf
      %1386 = vmax.xlane.f32.xlu0 %v1385
      %v1387 = vpop.xlane.xlu0 %1386
      %v1388 = vsub.f32 %v1094, %v1366
      %v1389 = vsub.f32 %v1099, %v1369
      %v1390 = vsub.f32 %v1181, %v1372
      %v1391 = vsub.f32 %v1186, %v1375
      %v1392 = vsub.f32 %v1268, %v1378
      %v1393 = vsub.f32 %v1273, %v1381
      %v1394 = vsub.f32 %v1355, %v1384
      %v1395 = vsub.f32 %v1360, %v1387
      %v1396 = vmul.f32 %v1388, 1.442695
      %v1397 = vpow.pop %v1396
      %v1398 = vmul.f32 %v1389, 1.442695
      %v1399 = vpow.pop %v1398
      %v1400 = vmul.f32 %v1390, 1.442695
      %v1401 = vpow.pop %v1400
      %v1402 = vmul.f32 %v1391, 1.442695
      %v1403 = vpow.pop %v1402
      %v1404 = vmul.f32 %v1392, 1.442695
      %v1405 = vpow.pop %v1404
      %v1406 = vmul.f32 %v1393, 1.442695
      %v1407 = vpow.pop %v1406
      %v1408 = vmul.f32 %v1394, 1.442695
      %v1409 = vpow.pop %v1408
      %v1410 = vmul.f32 %v1395, 1.442695
      %v1411 = vpow.pop %v1410
      %v1412 = vsel %vm1363, %v1397, 0.0
      %1413 = vadd.xlane.f32.xlu0 %v1412
      %v1414 = vpop.xlane.xlu0 %1413
      %v1415 = vsel %vm1363, %v1399, 0.0
      %1416 = vadd.xlane.f32.xlu0 %v1415
      %v1417 = vpop.xlane.xlu0 %1416
      %v1418 = vsel %vm1363, %v1401, 0.0
      %1419 = vadd.xlane.f32.xlu0 %v1418
      %v1420 = vpop.xlane.xlu0 %1419
      %v1421 = vsel %vm1363, %v1403, 0.0
      %1422 = vadd.xlane.f32.xlu0 %v1421
      %v1423 = vpop.xlane.xlu0 %1422
      %v1424 = vsel %vm1363, %v1405, 0.0
      %1425 = vadd.xlane.f32.xlu0 %v1424
      %v1426 = vpop.xlane.xlu0 %1425
      %v1427 = vsel %vm1363, %v1407, 0.0
      %1428 = vadd.xlane.f32.xlu0 %v1427
      %v1429 = vpop.xlane.xlu0 %1428
      %v1430 = vsel %vm1363, %v1409, 0.0
      %1431 = vadd.xlane.f32.xlu0 %v1430
      %v1432 = vpop.xlane.xlu0 %1431
      %v1433 = vsel %vm1363, %v1411, 0.0
      %1434 = vadd.xlane.f32.xlu0 %v1433
      %v1435 = vpop.xlane.xlu0 %1434
      %v1436 = vrcp.pop %v1414
      %v1437 = vrcp.pop %v1417
      %v1438 = vrcp.pop %v1420
      %v1439 = vrcp.pop %v1423
      %v1440 = vrcp.pop %v1426
      %v1441 = vrcp.pop %v1429
      %v1442 = vrcp.pop %v1432
      %v1443 = vrcp.pop %v1435
      %v1444 = vmul.f32 %v1397, %v1436
      %v1445 = vmul.f32 %v1399, %v1437
      %v1446 = vmul.f32 %v1401, %v1438
      %v1447 = vmul.f32 %v1403, %v1439
      %v1448 = vmul.f32 %v1405, %v1440
      %v1449 = vmul.f32 %v1407, %v1441
      %v1450 = vmul.f32 %v1409, %v1442
      %v1451 = vmul.f32 %v1411, %v1443
      %v1452 = vld [vmem:[%s499] sm:$0xff]
      %v1453 = vld [vmem:[%s499 + $0x8] sm:$0xff]
      %v1454 = vld [vmem:[%s499 + $0x10] sm:$0xff]
      %v1455 = vld [vmem:[%s499 + $0x18] sm:$0xff]
      %v1456 = vld [vmem:[%s499 + $0x20] sm:$0xff]
      %v1457 = vld [vmem:[%s499 + $0x28] sm:$0xff]
      %v1458 = vld [vmem:[%s499 + $0x30] sm:$0xff]
      %v1459 = vld [vmem:[%s499 + $0x38] sm:$0xff]
      %v1460 = vadd.f32 %v1444, %v1452
      %v1461 = vadd.f32 %v1445, %v1453
      %v1462 = vadd.f32 %v1446, %v1454
      %v1463 = vadd.f32 %v1447, %v1455
      %v1464 = vadd.f32 %v1448, %v1456
      %v1465 = vadd.f32 %v1449, %v1457
      %v1466 = vadd.f32 %v1450, %v1458
      %v1467 = vadd.f32 %v1451, %v1459
      %v1468 = vld [vmem:[%s7] sm:$0xff]
      %v1469 = vld [vmem:[%s7 + $0x8] sm:$0xff]
      %v1470 = vld [vmem:[%s8] sm:$0x1]
      %v1472 = vlaneseq
      %v1473 = vshrl.u32 %v1472, 7
      %v1474 = vsub.s32 0, %v1473
      %v1475 = vrot.slane %v1470, %v1474
      %v1478 = vsel %vm1363, %v1460, 0
      %v1481 = vsel %vm1363, %v1461, 0
      %v1484 = vsel %vm1363, %v1462, 0
      %v1487 = vsel %vm1363, %v1463, 0
      %v1490 = vsel %vm1363, %v1464, 0
      %v1493 = vsel %vm1363, %v1465, 0
      %v1496 = vsel %vm1363, %v1466, 0
      %v1499 = vsel %vm1363, %v1467, 0
      %1501 = vmatprep.subr.mxu0 0.0
      %1502 = vmatpush1.msra.mxu0 %v1468
      %1503 = vmatprep.subr.mxu0 0.0
      %1504 = vmatpush1.msra.mxu0 %v1469
      %1505 = vmatprep.subr.mxu0 0.0
      %1506 = vmatpush1.msra.mxu0 0.0
      %1507 = vmatprep.subr.mxu0 0.0
      %1508 = vmatpush1.msra.mxu0 0.0
      %1509 = vmatprep.subr.mxu0 0.0
      %1510 = vmatpush1.msra.mxu0 0.0
      %1511 = vmatprep.subr.mxu0 0.0
      %1512 = vmatpush1.msra.mxu0 0.0
      %1513 = vmatprep.subr.mxu0 0.0
      %1514 = vmatpush1.msra.mxu0 0.0
      %1515 = vmatprep.subr.mxu0 0.0
      %1516 = vmatpush1.msra.mxu0 0.0
      %1517 = vmatprep.subr.mxu0 0.0
      %1518 = vmatpush1.msra.mxu0 0.0
      %1519 = vmatprep.subr.mxu0 0.0
      %1520 = vmatpush1.msra.mxu0 0.0
      %1521 = vmatprep.subr.mxu0 0.0
      %1522 = vmatpush1.msra.mxu0 0.0
      %1523 = vmatprep.subr.mxu0 0.0
      %1524 = vmatpush1.msra.mxu0 0.0
      %1525 = vmatprep.subr.mxu0 0.0
      %1526 = vmatpush1.msra.mxu0 0.0
      %1527 = vmatprep.subr.mxu0 0.0
      %1528 = vmatpush1.msra.mxu0 0.0
      %1529 = vmatprep.subr.mxu0 0.0
      %1530 = vmatpush1.msra.mxu0 0.0
      %1531 = vmatprep.subr.mxu0 0.0
      %1532 = vmatpush1.msra.mxu0 0.0
      %1533 = vmatprep.subr.mxu0 0.0
      %1534 = vmatpush1.msra.mxu0 0.0
      %1535 = vmatprep.subr.mxu0 0.0
      %1536 = vmatpush1.msra.mxu0 0.0
      %1537 = vmatprep.subr.mxu0 0.0
      %1538 = vmatpush1.msra.mxu0 0.0
      %1539 = vmatprep.subr.mxu0 0.0
      %1540 = vmatpush1.msra.mxu0 0.0
      %1541 = vmatprep.subr.mxu0 0.0
      %1542 = vmatpush1.msra.mxu0 0.0
      %1543 = vmatprep.subr.mxu0 0.0
      %1544 = vmatpush1.msra.mxu0 0.0
      %1545 = vmatprep.subr.mxu0 0.0
      %1546 = vmatpush1.msra.mxu0 0.0
      %1547 = vmatprep.subr.mxu0 0.0
      %1548 = vmatpush1.msra.mxu0 0.0
      %1549 = vmatprep.subr.mxu0 0.0
      %1550 = vmatpush1.msra.mxu0 0.0
      %1551 = vmatprep.subr.mxu0 0.0
      %1552 = vmatpush1.msra.mxu0 0.0
      %1553 = vmatprep.subr.mxu0 0.0
      %1554 = vmatpush1.msra.mxu0 0.0
      %1555 = vmatprep.subr.mxu0 0.0
      %1556 = vmatpush1.msra.mxu0 0.0
      %1557 = vmatprep.subr.mxu0 0.0
      %1558 = vmatpush1.msra.mxu0 0.0
      %1559 = vmatprep.subr.mxu0 0.0
      %1560 = vmatpush1.msra.mxu0 0.0
      %1561 = vmatprep.subr.mxu0 0.0
      %1562 = vmatpush1.msra.mxu0 0.0
      %1563 = vmatprep.subr.mxu0 0.0
      %1564 = vmatpush1.msra.mxu0 0.0
      %1565 = vmatprep.mubr.f32.mxu0 0.0
      %1566 = vmatmul.mubr.f32.gmra.mrb[0].mxu0 %v1478
      %v1567 = vpop.f32.mrb[0].mxu0
      %v1568 = vadd.f32 %v1475, %v1567
      %v1569 = vpop.f32.mrb[0].mxu0
      %1570 = vmatprep.mubr.f32.mxu0 0.0
      %1571 = vmatmul.mubr.f32.gmra.mrb[0].mxu0 %v1481
      %v1572 = vpop.f32.mrb[0].mxu0
      %v1573 = vadd.f32 %v1475, %v1572
      %v1574 = vpop.f32.mrb[0].mxu0
      %1575 = vmatprep.mubr.f32.mxu0 0.0
      %1576 = vmatmul.mubr.f32.gmra.mrb[0].mxu0 %v1484
      %v1577 = vpop.f32.mrb[0].mxu0
      %v1578 = vadd.f32 %v1475, %v1577
      %v1579 = vpop.f32.mrb[0].mxu0
      %1580 = vmatprep.mubr.f32.mxu0 0.0
      %1581 = vmatmul.mubr.f32.gmra.mrb[0].mxu0 %v1487
      %v1582 = vpop.f32.mrb[0].mxu0
      %v1583 = vadd.f32 %v1475, %v1582
      %v1584 = vpop.f32.mrb[0].mxu0
      %1585 = vmatprep.mubr.f32.mxu0 0.0
      %1586 = vmatmul.mubr.f32.gmra.mrb[0].mxu0 %v1490
      %v1587 = vpop.f32.mrb[0].mxu0
      %v1588 = vadd.f32 %v1475, %v1587
      %v1589 = vpop.f32.mrb[0].mxu0
      %1590 = vmatprep.mubr.f32.mxu0 0.0
      %1591 = vmatmul.mubr.f32.gmra.mrb[0].mxu0 %v1493
      %v1592 = vpop.f32.mrb[0].mxu0
      %v1593 = vadd.f32 %v1475, %v1592
      %v1594 = vpop.f32.mrb[0].mxu0
      %1595 = vmatprep.mubr.f32.mxu0 0.0
      %1596 = vmatmul.mubr.f32.gmra.mrb[0].mxu0 %v1496
      %v1597 = vpop.f32.mrb[0].mxu0
      %v1598 = vadd.f32 %v1475, %v1597
      %v1599 = vpop.f32.mrb[0].mxu0
      %1600 = vmatprep.mubr.f32.mxu0 0.0
      %1601 = vmatmul.mubr.f32.gmra.mrb[0].mxu0 %v1499
      %v1602 = vpop.f32.mrb[0].mxu0
      %v1603 = vadd.f32 %v1475, %v1602
      %v1604 = vpop.f32.mrb[0].mxu0
      %1605 = vdwg.mxu0
      %v1606 = vmax.f32 %v1568, 0.0
      %v1607 = vmax.f32 %v1573, 0.0
      %v1608 = vmax.f32 %v1578, 0.0
      %v1609 = vmax.f32 %v1583, 0.0
      %v1610 = vmax.f32 %v1588, 0.0
      %v1611 = vmax.f32 %v1593, 0.0
      %v1612 = vmax.f32 %v1598, 0.0
      %v1613 = vmax.f32 %v1603, 0.0
      %v1614 = vld [vmem:[%s9] sm:$0x1]
      %v1616 = vlaneseq
      %v1617 = vshrl.u32 %v1616, 7
      %v1618 = vsub.s32 0, %v1617
      %v1619 = vrot.slane %v1614, %v1618
      %v1621 = vmul.f32 %v1606, %v1619
      %v1622 = vmul.f32 %v1607, %v1619
      %v1623 = vmul.f32 %v1608, %v1619
      %v1624 = vmul.f32 %v1609, %v1619
      %v1625 = vmul.f32 %v1610, %v1619
      %v1626 = vmul.f32 %v1611, %v1619
      %v1627 = vmul.f32 %v1612, %v1619
      %v1628 = vmul.f32 %v1613, %v1619
      %v1629 = vsel %vm1363, %v1621, 0.0
      %1630 = vadd.xlane.f32.xlu0 %v1629
      %v1631 = vpop.xlane.xlu0 %1630
      %v1632 = vsel %vm1363, %v1622, 0.0
      %1633 = vadd.xlane.f32.xlu0 %v1632
      %v1634 = vpop.xlane.xlu0 %1633
      %v1635 = vsel %vm1363, %v1623, 0.0
      %1636 = vadd.xlane.f32.xlu0 %v1635
      %v1637 = vpop.xlane.xlu0 %1636
      %v1638 = vsel %vm1363, %v1624, 0.0
      %1639 = vadd.xlane.f32.xlu0 %v1638
      %v1640 = vpop.xlane.xlu0 %1639
      %v1641 = vsel %vm1363, %v1625, 0.0
      %1642 = vadd.xlane.f32.xlu0 %v1641
      %v1643 = vpop.xlane.xlu0 %1642
      %v1644 = vsel %vm1363, %v1626, 0.0
      %1645 = vadd.xlane.f32.xlu0 %v1644
      %v1646 = vpop.xlane.xlu0 %1645
      %v1647 = vsel %vm1363, %v1627, 0.0
      %1648 = vadd.xlane.f32.xlu0 %v1647
      %v1649 = vpop.xlane.xlu0 %1648
      %v1650 = vsel %vm1363, %v1628, 0.0
      %1651 = vadd.xlane.f32.xlu0 %v1650
      %v1652 = vpop.xlane.xlu0 %1651
      %v1653 = vld [vmem:[#allocation2] sm:$0x1]
      %v1655 = vlaneseq
      %v1656 = vshrl.u32 %v1655, 7
      %v1657 = vsub.s32 0, %v1656
      %v1658 = vrot.slane %v1653, %v1657
      %v1660 = vadd.f32 %v1631, %v1658
      %v1661 = vadd.f32 %v1634, %v1658
      %v1662 = vadd.f32 %v1637, %v1658
      %v1663 = vadd.f32 %v1640, %v1658
      %v1664 = vadd.f32 %v1643, %v1658
      %v1665 = vadd.f32 %v1646, %v1658
      %v1666 = vadd.f32 %v1649, %v1658
      %v1667 = vadd.f32 %v1652, %v1658
      %v1668 = vlaneseq
      %v1669 = vshrl.u32 %v1668, 7
      %v1670 = vadd.s32 %v1669, 8
      %v1671 = vlaneseq
      %v1672 = vand.u32 %v1671, 127
      %v1673 = vsub.s32 %v1672, %v1669
      %v1674 = vsub.s32 %v1672, %v1670
      %v1675 = vcvt.s32.f32 %v1673
      %v1676 = vcvt.s32.f32 %v1674
      %v1677 = vmul.f32 %v1675, %v1675
      %v1678 = vmul.f32 %v1676, %v1676
      %v1679 = vmul.f32 %v1660, 2.0
      %v1680 = vmul.f32 %v1661, 2.0
      %v1681 = vmul.f32 %v1662, 2.0
      %v1682 = vmul.f32 %v1663, 2.0
      %v1683 = vmul.f32 %v1664, 2.0
      %v1684 = vmul.f32 %v1665, 2.0
      %v1685 = vmul.f32 %v1666, 2.0
      %v1686 = vmul.f32 %v1667, 2.0
      %v1687 = vmul.f32 %v1679, %v1660
      %v1688 = vmul.f32 %v1680, %v1661
      %v1689 = vmul.f32 %v1681, %v1662
      %v1690 = vmul.f32 %v1682, %v1663
      %v1691 = vmul.f32 %v1683, %v1664
      %v1692 = vmul.f32 %v1684, %v1665
      %v1693 = vmul.f32 %v1685, %v1666
      %v1694 = vmul.f32 %v1686, %v1667
      %v1695 = vadd.f32 %v1687, 1e-06
      %v1696 = vadd.f32 %v1688, 1e-06
      %v1697 = vadd.f32 %v1689, 1e-06
      %v1698 = vadd.f32 %v1690, 1e-06
      %v1699 = vadd.f32 %v1691, 1e-06
      %v1700 = vadd.f32 %v1692, 1e-06
      %v1701 = vadd.f32 %v1693, 1e-06
      %v1702 = vadd.f32 %v1694, 1e-06
      %v1703 = vrcp.pop %v1695
      %v1704 = vrcp.pop %v1696
      %v1705 = vrcp.pop %v1697
      %v1706 = vrcp.pop %v1698
      %v1707 = vrcp.pop %v1699
      %v1708 = vrcp.pop %v1700
      %v1709 = vrcp.pop %v1701
      %v1710 = vrcp.pop %v1702
      %1712 = vset.pattern.permute.xlu0 0
      %1713 = vperm.xlu0 %1712, %v1703
      %v1714 = vpop.permute.xlu0 %1713
      %1717 = vset.pattern.permute.xlu0 0
      %1718 = vperm.xlu0 %1717, %v1704
      %v1719 = vpop.permute.xlu0 %1718
      %1722 = vset.pattern.permute.xlu0 0
      %1723 = vperm.xlu0 %1722, %v1705
      %v1724 = vpop.permute.xlu0 %1723
      %1727 = vset.pattern.permute.xlu0 0
      %1728 = vperm.xlu0 %1727, %v1706
      %v1729 = vpop.permute.xlu0 %1728
      %1732 = vset.pattern.permute.xlu0 0
      %1733 = vperm.xlu0 %1732, %v1707
      %v1734 = vpop.permute.xlu0 %1733
      %1737 = vset.pattern.permute.xlu0 0
      %1738 = vperm.xlu0 %1737, %v1708
      %v1739 = vpop.permute.xlu0 %1738
      %1742 = vset.pattern.permute.xlu0 0
      %1743 = vperm.xlu0 %1742, %v1709
      %v1744 = vpop.permute.xlu0 %1743
      %1747 = vset.pattern.permute.xlu0 0
      %1748 = vperm.xlu0 %1747, %v1710
      %v1749 = vpop.permute.xlu0 %1748
      %v1751 = vmul.f32 %v1677, %v1714
      %v1752 = vmul.f32 %v1678, %v1719
      %v1753 = vmul.f32 %v1677, %v1724
      %v1754 = vmul.f32 %v1678, %v1729
      %v1755 = vmul.f32 %v1677, %v1734
      %v1756 = vmul.f32 %v1678, %v1739
      %v1757 = vmul.f32 %v1677, %v1744
      %v1758 = vmul.f32 %v1678, %v1749
      %v1759 = vsub.f32 0.0, %v1751
      %v1760 = vsub.f32 0.0, %v1752
      %v1761 = vsub.f32 0.0, %v1753
      %v1762 = vsub.f32 0.0, %v1754
      %v1763 = vsub.f32 0.0, %v1755
      %v1764 = vsub.f32 0.0, %v1756
      %v1765 = vsub.f32 0.0, %v1757
      %v1766 = vsub.f32 0.0, %v1758
      %v1767 = vmul.f32 %v1759, 1.442695
      %v1768 = vpow.pop %v1767
      %v1769 = vmul.f32 %v1760, 1.442695
      %v1770 = vpow.pop %v1769
      %v1771 = vmul.f32 %v1761, 1.442695
      %v1772 = vpow.pop %v1771
      %v1773 = vmul.f32 %v1762, 1.442695
      %v1774 = vpow.pop %v1773
      %v1775 = vmul.f32 %v1763, 1.442695
      %v1776 = vpow.pop %v1775
      %v1777 = vmul.f32 %v1764, 1.442695
      %v1778 = vpow.pop %v1777
      %v1779 = vmul.f32 %v1765, 1.442695
      %v1780 = vpow.pop %v1779
      %v1781 = vmul.f32 %v1766, 1.442695
      %v1782 = vpow.pop %v1781
      %v1783 = vmul.f32 %v1444, %v1768
      %v1784 = vmul.f32 %v1445, %v1770
      %v1785 = vmul.f32 %v1446, %v1772
      %v1786 = vmul.f32 %v1447, %v1774
      %v1787 = vmul.f32 %v1448, %v1776
      %v1788 = vmul.f32 %v1449, %v1778
      %v1789 = vmul.f32 %v1450, %v1780
      %v1790 = vmul.f32 %v1451, %v1782
      %v1791 = vsel %vm1363, %v1783, -inf
      %1792 = vmax.xlane.f32.xlu0 %v1791
      %v1793 = vpop.xlane.xlu0 %1792
      %v1794 = vsel %vm1363, %v1784, -inf
      %1795 = vmax.xlane.f32.xlu0 %v1794
      %v1796 = vpop.xlane.xlu0 %1795
      %v1797 = vsel %vm1363, %v1785, -inf
      %1798 = vmax.xlane.f32.xlu0 %v1797
      %v1799 = vpop.xlane.xlu0 %1798
      %v1800 = vsel %vm1363, %v1786, -inf
      %1801 = vmax.xlane.f32.xlu0 %v1800
      %v1802 = vpop.xlane.xlu0 %1801
      %v1803 = vsel %vm1363, %v1787, -inf
      %1804 = vmax.xlane.f32.xlu0 %v1803
      %v1805 = vpop.xlane.xlu0 %1804
      %v1806 = vsel %vm1363, %v1788, -inf
      %1807 = vmax.xlane.f32.xlu0 %v1806
      %v1808 = vpop.xlane.xlu0 %1807
      %v1809 = vsel %vm1363, %v1789, -inf
      %1810 = vmax.xlane.f32.xlu0 %v1809
      %v1811 = vpop.xlane.xlu0 %1810
      %v1812 = vsel %vm1363, %v1790, -inf
      %1813 = vmax.xlane.f32.xlu0 %v1812
      %v1814 = vpop.xlane.xlu0 %1813
      %v1815 = vsub.f32 %v1783, %v1793
      %v1816 = vsub.f32 %v1784, %v1796
      %v1817 = vsub.f32 %v1785, %v1799
      %v1818 = vsub.f32 %v1786, %v1802
      %v1819 = vsub.f32 %v1787, %v1805
      %v1820 = vsub.f32 %v1788, %v1808
      %v1821 = vsub.f32 %v1789, %v1811
      %v1822 = vsub.f32 %v1790, %v1814
      %v1823 = vmul.f32 %v1815, 1.442695
      %v1824 = vpow.pop %v1823
      %v1825 = vmul.f32 %v1816, 1.442695
      %v1826 = vpow.pop %v1825
      %v1827 = vmul.f32 %v1817, 1.442695
      %v1828 = vpow.pop %v1827
      %v1829 = vmul.f32 %v1818, 1.442695
      %v1830 = vpow.pop %v1829
      %v1831 = vmul.f32 %v1819, 1.442695
      %v1832 = vpow.pop %v1831
      %v1833 = vmul.f32 %v1820, 1.442695
      %v1834 = vpow.pop %v1833
      %v1835 = vmul.f32 %v1821, 1.442695
      %v1836 = vpow.pop %v1835
      %v1837 = vmul.f32 %v1822, 1.442695
      %v1838 = vpow.pop %v1837
      %v1839 = vsel %vm1363, %v1824, 0.0
      %1840 = vadd.xlane.f32.xlu0 %v1839
      %v1841 = vpop.xlane.xlu0 %1840
      %v1842 = vsel %vm1363, %v1826, 0.0
      %1843 = vadd.xlane.f32.xlu0 %v1842
      %v1844 = vpop.xlane.xlu0 %1843
      %v1845 = vsel %vm1363, %v1828, 0.0
      %1846 = vadd.xlane.f32.xlu0 %v1845
      %v1847 = vpop.xlane.xlu0 %1846
      %v1848 = vsel %vm1363, %v1830, 0.0
      %1849 = vadd.xlane.f32.xlu0 %v1848
      %v1850 = vpop.xlane.xlu0 %1849
      %v1851 = vsel %vm1363, %v1832, 0.0
      %1852 = vadd.xlane.f32.xlu0 %v1851
      %v1853 = vpop.xlane.xlu0 %1852
      %v1854 = vsel %vm1363, %v1834, 0.0
      %1855 = vadd.xlane.f32.xlu0 %v1854
      %v1856 = vpop.xlane.xlu0 %1855
      %v1857 = vsel %vm1363, %v1836, 0.0
      %1858 = vadd.xlane.f32.xlu0 %v1857
      %v1859 = vpop.xlane.xlu0 %1858
      %v1860 = vsel %vm1363, %v1838, 0.0
      %1861 = vadd.xlane.f32.xlu0 %v1860
      %v1862 = vpop.xlane.xlu0 %1861
      %v1863 = vrcp.pop %v1841
      %v1864 = vrcp.pop %v1844
      %v1865 = vrcp.pop %v1847
      %v1866 = vrcp.pop %v1850
      %v1867 = vrcp.pop %v1853
      %v1868 = vrcp.pop %v1856
      %v1869 = vrcp.pop %v1859
      %v1870 = vrcp.pop %v1862
      %v1871 = vmul.f32 %v1824, %v1863
      %v1872 = vmul.f32 %v1826, %v1864
      %v1873 = vmul.f32 %v1828, %v1865
      %v1874 = vmul.f32 %v1830, %v1866
      %v1875 = vmul.f32 %v1832, %v1867
      %v1876 = vmul.f32 %v1834, %v1868
      %v1877 = vmul.f32 %v1836, %v1869
      %v1878 = vmul.f32 %v1838, %v1870
      %v1880 = vsel %vm1363, %v1871, 0
      %v1883 = vsel %vm1363, %v1872, 0
      %1885 = vmatprep.subr.mxu0 0.0
      %1886 = vmatpush1.msra.mxu0 %v977
      %1887 = vmatprep.subr.mxu0 0.0
      %1888 = vmatpush1.msra.mxu0 %v982
      %1889 = vmatprep.subr.mxu0 0.0
      %1890 = vmatpush1.msra.mxu0 0.0
      %1891 = vmatprep.subr.mxu0 0.0
      %1892 = vmatpush1.msra.mxu0 0.0
      %1893 = vmatprep.subr.mxu0 0.0
      %1894 = vmatpush1.msra.mxu0 0.0
      %1895 = vmatprep.subr.mxu0 0.0
      %1896 = vmatpush1.msra.mxu0 0.0
      %1897 = vmatprep.subr.mxu0 0.0
      %1898 = vmatpush1.msra.mxu0 0.0
      %1899 = vmatprep.subr.mxu0 0.0
      %1900 = vmatpush1.msra.mxu0 0.0
      %1901 = vmatprep.subr.mxu0 0.0
      %1902 = vmatpush1.msra.mxu0 0.0
      %1903 = vmatprep.subr.mxu0 0.0
      %1904 = vmatpush1.msra.mxu0 0.0
      %1905 = vmatprep.subr.mxu0 0.0
      %1906 = vmatpush1.msra.mxu0 0.0
      %1907 = vmatprep.subr.mxu0 0.0
      %1908 = vmatpush1.msra.mxu0 0.0
      %1909 = vmatprep.subr.mxu0 0.0
      %1910 = vmatpush1.msra.mxu0 0.0
      %1911 = vmatprep.subr.mxu0 0.0
      %1912 = vmatpush1.msra.mxu0 0.0
      %1913 = vmatprep.subr.mxu0 0.0
      %1914 = vmatpush1.msra.mxu0 0.0
      %1915 = vmatprep.subr.mxu0 0.0
      %1916 = vmatpush1.msra.mxu0 0.0
      %1917 = vmatprep.subr.mxu0 0.0
      %1918 = vmatpush1.msra.mxu0 0.0
      %1919 = vmatprep.subr.mxu0 0.0
      %1920 = vmatpush1.msra.mxu0 0.0
      %1921 = vmatprep.subr.mxu0 0.0
      %1922 = vmatpush1.msra.mxu0 0.0
      %1923 = vmatprep.subr.mxu0 0.0
      %1924 = vmatpush1.msra.mxu0 0.0
      %1925 = vmatprep.subr.mxu0 0.0
      %1926 = vmatpush1.msra.mxu0 0.0
      %1927 = vmatprep.subr.mxu0 0.0
      %1928 = vmatpush1.msra.mxu0 0.0
      %1929 = vmatprep.subr.mxu0 0.0
      %1930 = vmatpush1.msra.mxu0 0.0
      %1931 = vmatprep.subr.mxu0 0.0
      %1932 = vmatpush1.msra.mxu0 0.0
      %1933 = vmatprep.subr.mxu0 0.0
      %1934 = vmatpush1.msra.mxu0 0.0
      %1935 = vmatprep.subr.mxu0 0.0
      %1936 = vmatpush1.msra.mxu0 0.0
      %1937 = vmatprep.subr.mxu0 0.0
      %1938 = vmatpush1.msra.mxu0 0.0
      %1939 = vmatprep.subr.mxu0 0.0
      %1940 = vmatpush1.msra.mxu0 0.0
      %1941 = vmatprep.subr.mxu0 0.0
      %1942 = vmatpush1.msra.mxu0 0.0
      %1943 = vmatprep.subr.mxu0 0.0
      %1944 = vmatpush1.msra.mxu0 0.0
      %1945 = vmatprep.subr.mxu0 0.0
      %1946 = vmatpush1.msra.mxu0 0.0
      %1947 = vmatprep.subr.mxu0 0.0
      %1948 = vmatpush1.msra.mxu0 0.0
      %1949 = vmatprep.mubr.f32.mxu0 0.0
      %1950 = vmatmul.mubr.f32.gmra.mrb[0].mxu0 %v1880
      %v1951 = vpop.f32.mrb[0].mxu0
      %v1952 = vadd.f32 0.0, %v1951
      %v1953 = vpop.f32.mrb[0].mxu0
      %1954 = vmatprep.mubr.f32.mxu0 0.0
      %1955 = vmatmul.mubr.f32.gmra.mrb[0].mxu0 %v1883
      %v1956 = vpop.f32.mrb[0].mxu0
      %v1957 = vadd.f32 0.0, %v1956
      %v1958 = vpop.f32.mrb[0].mxu0
      %1959 = vdwg.mxu0
      %v1961 = vsel %vm1363, %v1873, 0
      %v1964 = vsel %vm1363, %v1874, 0
      %1966 = vmatprep.subr.mxu0 0.0
      %1967 = vmatpush1.msra.mxu0 %v987
      %1968 = vmatprep.subr.mxu0 0.0
      %1969 = vmatpush1.msra.mxu0 %v992
      %1970 = vmatprep.subr.mxu0 0.0
      %1971 = vmatpush1.msra.mxu0 0.0
      %1972 = vmatprep.subr.mxu0 0.0
      %1973 = vmatpush1.msra.mxu0 0.0
      %1974 = vmatprep.subr.mxu0 0.0
      %1975 = vmatpush1.msra.mxu0 0.0
      %1976 = vmatprep.subr.mxu0 0.0
      %1977 = vmatpush1.msra.mxu0 0.0
      %1978 = vmatprep.subr.mxu0 0.0
      %1979 = vmatpush1.msra.mxu0 0.0
      %1980 = vmatprep.subr.mxu0 0.0
      %1981 = vmatpush1.msra.mxu0 0.0
      %1982 = vmatprep.subr.mxu0 0.0
      %1983 = vmatpush1.msra.mxu0 0.0
      %1984 = vmatprep.subr.mxu0 0.0
      %1985 = vmatpush1.msra.mxu0 0.0
      %1986 = vmatprep.subr.mxu0 0.0
      %1987 = vmatpush1.msra.mxu0 0.0
      %1988 = vmatprep.subr.mxu0 0.0
      %1989 = vmatpush1.msra.mxu0 0.0
      %1990 = vmatprep.subr.mxu0 0.0
      %1991 = vmatpush1.msra.mxu0 0.0
      %1992 = vmatprep.subr.mxu0 0.0
      %1993 = vmatpush1.msra.mxu0 0.0
      %1994 = vmatprep.subr.mxu0 0.0
      %1995 = vmatpush1.msra.mxu0 0.0
      %1996 = vmatprep.subr.mxu0 0.0
      %1997 = vmatpush1.msra.mxu0 0.0
      %1998 = vmatprep.subr.mxu0 0.0
      %1999 = vmatpush1.msra.mxu0 0.0
      %2000 = vmatprep.subr.mxu0 0.0
      %2001 = vmatpush1.msra.mxu0 0.0
      %2002 = vmatprep.subr.mxu0 0.0
      %2003 = vmatpush1.msra.mxu0 0.0
      %2004 = vmatprep.subr.mxu0 0.0
      %2005 = vmatpush1.msra.mxu0 0.0
      %2006 = vmatprep.subr.mxu0 0.0
      %2007 = vmatpush1.msra.mxu0 0.0
      %2008 = vmatprep.subr.mxu0 0.0
      %2009 = vmatpush1.msra.mxu0 0.0
      %2010 = vmatprep.subr.mxu0 0.0
      %2011 = vmatpush1.msra.mxu0 0.0
      %2012 = vmatprep.subr.mxu0 0.0
      %2013 = vmatpush1.msra.mxu0 0.0
      %2014 = vmatprep.subr.mxu0 0.0
      %2015 = vmatpush1.msra.mxu0 0.0
      %2016 = vmatprep.subr.mxu0 0.0
      %2017 = vmatpush1.msra.mxu0 0.0
      %2018 = vmatprep.subr.mxu0 0.0
      %2019 = vmatpush1.msra.mxu0 0.0
      %2020 = vmatprep.subr.mxu0 0.0
      %2021 = vmatpush1.msra.mxu0 0.0
      %2022 = vmatprep.subr.mxu0 0.0
      %2023 = vmatpush1.msra.mxu0 0.0
      %2024 = vmatprep.subr.mxu0 0.0
      %2025 = vmatpush1.msra.mxu0 0.0
      %2026 = vmatprep.subr.mxu0 0.0
      %2027 = vmatpush1.msra.mxu0 0.0
      %2028 = vmatprep.subr.mxu0 0.0
      %2029 = vmatpush1.msra.mxu0 0.0
      %2030 = vmatprep.mubr.f32.mxu0 0.0
      %2031 = vmatmul.mubr.f32.gmra.mrb[0].mxu0 %v1961
      %v2032 = vpop.f32.mrb[0].mxu0
      %v2033 = vadd.f32 0.0, %v2032
      %v2034 = vpop.f32.mrb[0].mxu0
      %2035 = vmatprep.mubr.f32.mxu0 0.0
      %2036 = vmatmul.mubr.f32.gmra.mrb[0].mxu0 %v1964
      %v2037 = vpop.f32.mrb[0].mxu0
      %v2038 = vadd.f32 0.0, %v2037
      %v2039 = vpop.f32.mrb[0].mxu0
      %2040 = vdwg.mxu0
      %v2042 = vsel %vm1363, %v1875, 0
      %v2045 = vsel %vm1363, %v1876, 0
      %2047 = vmatprep.subr.mxu0 0.0
      %2048 = vmatpush1.msra.mxu0 %v997
      %2049 = vmatprep.subr.mxu0 0.0
      %2050 = vmatpush1.msra.mxu0 %v1002
      %2051 = vmatprep.subr.mxu0 0.0
      %2052 = vmatpush1.msra.mxu0 0.0
      %2053 = vmatprep.subr.mxu0 0.0
      %2054 = vmatpush1.msra.mxu0 0.0
      %2055 = vmatprep.subr.mxu0 0.0
      %2056 = vmatpush1.msra.mxu0 0.0
      %2057 = vmatprep.subr.mxu0 0.0
      %2058 = vmatpush1.msra.mxu0 0.0
      %2059 = vmatprep.subr.mxu0 0.0
      %2060 = vmatpush1.msra.mxu0 0.0
      %2061 = vmatprep.subr.mxu0 0.0
      %2062 = vmatpush1.msra.mxu0 0.0
      %2063 = vmatprep.subr.mxu0 0.0
      %2064 = vmatpush1.msra.mxu0 0.0
      %2065 = vmatprep.subr.mxu0 0.0
      %2066 = vmatpush1.msra.mxu0 0.0
      %2067 = vmatprep.subr.mxu0 0.0
      %2068 = vmatpush1.msra.mxu0 0.0
      %2069 = vmatprep.subr.mxu0 0.0
      %2070 = vmatpush1.msra.mxu0 0.0
      %2071 = vmatprep.subr.mxu0 0.0
      %2072 = vmatpush1.msra.mxu0 0.0
      %2073 = vmatprep.subr.mxu0 0.0
      %2074 = vmatpush1.msra.mxu0 0.0
      %2075 = vmatprep.subr.mxu0 0.0
      %2076 = vmatpush1.msra.mxu0 0.0
      %2077 = vmatprep.subr.mxu0 0.0
      %2078 = vmatpush1.msra.mxu0 0.0
      %2079 = vmatprep.subr.mxu0 0.0
      %2080 = vmatpush1.msra.mxu0 0.0
      %2081 = vmatprep.subr.mxu0 0.0
      %2082 = vmatpush1.msra.mxu0 0.0
      %2083 = vmatprep.subr.mxu0 0.0
      %2084 = vmatpush1.msra.mxu0 0.0
      %2085 = vmatprep.subr.mxu0 0.0
      %2086 = vmatpush1.msra.mxu0 0.0
      %2087 = vmatprep.subr.mxu0 0.0
      %2088 = vmatpush1.msra.mxu0 0.0
      %2089 = vmatprep.subr.mxu0 0.0
      %2090 = vmatpush1.msra.mxu0 0.0
      %2091 = vmatprep.subr.mxu0 0.0
      %2092 = vmatpush1.msra.mxu0 0.0
      %2093 = vmatprep.subr.mxu0 0.0
      %2094 = vmatpush1.msra.mxu0 0.0
      %2095 = vmatprep.subr.mxu0 0.0
      %2096 = vmatpush1.msra.mxu0 0.0
      %2097 = vmatprep.subr.mxu0 0.0
      %2098 = vmatpush1.msra.mxu0 0.0
      %2099 = vmatprep.subr.mxu0 0.0
      %2100 = vmatpush1.msra.mxu0 0.0
      %2101 = vmatprep.subr.mxu0 0.0
      %2102 = vmatpush1.msra.mxu0 0.0
      %2103 = vmatprep.subr.mxu0 0.0
      %2104 = vmatpush1.msra.mxu0 0.0
      %2105 = vmatprep.subr.mxu0 0.0
      %2106 = vmatpush1.msra.mxu0 0.0
      %2107 = vmatprep.subr.mxu0 0.0
      %2108 = vmatpush1.msra.mxu0 0.0
      %2109 = vmatprep.subr.mxu0 0.0
      %2110 = vmatpush1.msra.mxu0 0.0
      %2111 = vmatprep.mubr.f32.mxu0 0.0
      %2112 = vmatmul.mubr.f32.gmra.mrb[0].mxu0 %v2042
      %v2113 = vpop.f32.mrb[0].mxu0
      %v2114 = vadd.f32 0.0, %v2113
      %v2115 = vpop.f32.mrb[0].mxu0
      %2116 = vmatprep.mubr.f32.mxu0 0.0
      %2117 = vmatmul.mubr.f32.gmra.mrb[0].mxu0 %v2045
      %v2118 = vpop.f32.mrb[0].mxu0
      %v2119 = vadd.f32 0.0, %v2118
      %v2120 = vpop.f32.mrb[0].mxu0
      %2121 = vdwg.mxu0
      %v2123 = vsel %vm1363, %v1877, 0
      %v2126 = vsel %vm1363, %v1878, 0
      %2128 = vmatprep.subr.mxu0 0.0
      %2129 = vmatpush1.msra.mxu0 %v1007
      %2130 = vmatprep.subr.mxu0 0.0
      %2131 = vmatpush1.msra.mxu0 %v1012
      %2132 = vmatprep.subr.mxu0 0.0
      %2133 = vmatpush1.msra.mxu0 0.0
      %2134 = vmatprep.subr.mxu0 0.0
      %2135 = vmatpush1.msra.mxu0 0.0
      %2136 = vmatprep.subr.mxu0 0.0
      %2137 = vmatpush1.msra.mxu0 0.0
      %2138 = vmatprep.subr.mxu0 0.0
      %2139 = vmatpush1.msra.mxu0 0.0
      %2140 = vmatprep.subr.mxu0 0.0
      %2141 = vmatpush1.msra.mxu0 0.0
      %2142 = vmatprep.subr.mxu0 0.0
      %2143 = vmatpush1.msra.mxu0 0.0
      %2144 = vmatprep.subr.mxu0 0.0
      %2145 = vmatpush1.msra.mxu0 0.0
      %2146 = vmatprep.subr.mxu0 0.0
      %2147 = vmatpush1.msra.mxu0 0.0
      %2148 = vmatprep.subr.mxu0 0.0
      %2149 = vmatpush1.msra.mxu0 0.0
      %2150 = vmatprep.subr.mxu0 0.0
      %2151 = vmatpush1.msra.mxu0 0.0
      %2152 = vmatprep.subr.mxu0 0.0
      %2153 = vmatpush1.msra.mxu0 0.0
      %2154 = vmatprep.subr.mxu0 0.0
      %2155 = vmatpush1.msra.mxu0 0.0
      %2156 = vmatprep.subr.mxu0 0.0
      %2157 = vmatpush1.msra.mxu0 0.0
      %2158 = vmatprep.subr.mxu0 0.0
      %2159 = vmatpush1.msra.mxu0 0.0
      %2160 = vmatprep.subr.mxu0 0.0
      %2161 = vmatpush1.msra.mxu0 0.0
      %2162 = vmatprep.subr.mxu0 0.0
      %2163 = vmatpush1.msra.mxu0 0.0
      %2164 = vmatprep.subr.mxu0 0.0
      %2165 = vmatpush1.msra.mxu0 0.0
      %2166 = vmatprep.subr.mxu0 0.0
      %2167 = vmatpush1.msra.mxu0 0.0
      %2168 = vmatprep.subr.mxu0 0.0
      %2169 = vmatpush1.msra.mxu0 0.0
      %2170 = vmatprep.subr.mxu0 0.0
      %2171 = vmatpush1.msra.mxu0 0.0
      %2172 = vmatprep.subr.mxu0 0.0
      %2173 = vmatpush1.msra.mxu0 0.0
      %2174 = vmatprep.subr.mxu0 0.0
      %2175 = vmatpush1.msra.mxu0 0.0
      %2176 = vmatprep.subr.mxu0 0.0
      %2177 = vmatpush1.msra.mxu0 0.0
      %2178 = vmatprep.subr.mxu0 0.0
      %2179 = vmatpush1.msra.mxu0 0.0
      %2180 = vmatprep.subr.mxu0 0.0
      %2181 = vmatpush1.msra.mxu0 0.0
      %2182 = vmatprep.subr.mxu0 0.0
      %2183 = vmatpush1.msra.mxu0 0.0
      %2184 = vmatprep.subr.mxu0 0.0
      %2185 = vmatpush1.msra.mxu0 0.0
      %2186 = vmatprep.subr.mxu0 0.0
      %2187 = vmatpush1.msra.mxu0 0.0
      %2188 = vmatprep.subr.mxu0 0.0
      %2189 = vmatpush1.msra.mxu0 0.0
      %2190 = vmatprep.subr.mxu0 0.0
      %2191 = vmatpush1.msra.mxu0 0.0
      %2192 = vmatprep.mubr.f32.mxu0 0.0
      %2193 = vmatmul.mubr.f32.gmra.mrb[0].mxu0 %v2123
      %v2194 = vpop.f32.mrb[0].mxu0
      %v2195 = vadd.f32 0.0, %v2194
      %v2196 = vpop.f32.mrb[0].mxu0
      %2197 = vmatprep.mubr.f32.mxu0 0.0
      %2198 = vmatmul.mubr.f32.gmra.mrb[0].mxu0 %v2126
      %v2199 = vpop.f32.mrb[0].mxu0
      %v2200 = vadd.f32 0.0, %v2199
      %v2201 = vpop.f32.mrb[0].mxu0
      %2202 = vdwg.mxu0
      %v2203 = vld [vmem:[%s11] sm:$0xff]
      %v2204 = vld [vmem:[%s11 + $0x8] sm:$0xff]
      %v2205 = vld [vmem:[%s11 + $0x10] sm:$0xff]
      %v2206 = vld [vmem:[%s11 + $0x18] sm:$0xff]
      %v2207 = vld [vmem:[%s12] sm:$0x1]
      %v2209 = vlaneseq
      %v2210 = vshrl.u32 %v2209, 7
      %v2211 = vsub.s32 0, %v2210
      %v2212 = vrot.slane %v2207, %v2211
      %v2215 = vsel %vm522, %v1952, 0
      %v2218 = vsel %vm522, %v1957, 0
      %v2221 = vsel %vm522, %v2033, 0
      %v2224 = vsel %vm522, %v2038, 0
      %v2227 = vsel %vm522, %v2114, 0
      %v2230 = vsel %vm522, %v2119, 0
      %v2233 = vsel %vm522, %v2195, 0
      %v2236 = vsel %vm522, %v2200, 0
      %2238 = vmatprep.subr.mxu0 0.0
      %2239 = vmatpush1.msra.mxu0 %v2203
      %2240 = vmatprep.subr.mxu0 0.0
      %2241 = vmatpush1.msra.mxu0 %v2204
      %2242 = vmatprep.subr.mxu0 0.0
      %2243 = vmatpush1.msra.mxu0 %v2205
      %2244 = vmatprep.subr.mxu0 0.0
      %2245 = vmatpush1.msra.mxu0 %v2206
      %2246 = vmatprep.subr.mxu0 0.0
      %2247 = vmatpush1.msra.mxu0 0.0
      %2248 = vmatprep.subr.mxu0 0.0
      %2249 = vmatpush1.msra.mxu0 0.0
      %2250 = vmatprep.subr.mxu0 0.0
      %2251 = vmatpush1.msra.mxu0 0.0
      %2252 = vmatprep.subr.mxu0 0.0
      %2253 = vmatpush1.msra.mxu0 0.0
      %2254 = vmatprep.subr.mxu0 0.0
      %2255 = vmatpush1.msra.mxu0 0.0
      %2256 = vmatprep.subr.mxu0 0.0
      %2257 = vmatpush1.msra.mxu0 0.0
      %2258 = vmatprep.subr.mxu0 0.0
      %2259 = vmatpush1.msra.mxu0 0.0
      %2260 = vmatprep.subr.mxu0 0.0
      %2261 = vmatpush1.msra.mxu0 0.0
      %2262 = vmatprep.subr.mxu0 0.0
      %2263 = vmatpush1.msra.mxu0 0.0
      %2264 = vmatprep.subr.mxu0 0.0
      %2265 = vmatpush1.msra.mxu0 0.0
      %2266 = vmatprep.subr.mxu0 0.0
      %2267 = vmatpush1.msra.mxu0 0.0
      %2268 = vmatprep.subr.mxu0 0.0
      %2269 = vmatpush1.msra.mxu0 0.0
      %2270 = vmatprep.subr.mxu0 0.0
      %2271 = vmatpush1.msra.mxu0 0.0
      %2272 = vmatprep.subr.mxu0 0.0
      %2273 = vmatpush1.msra.mxu0 0.0
      %2274 = vmatprep.subr.mxu0 0.0
      %2275 = vmatpush1.msra.mxu0 0.0
      %2276 = vmatprep.subr.mxu0 0.0
      %2277 = vmatpush1.msra.mxu0 0.0
      %2278 = vmatprep.subr.mxu0 0.0
      %2279 = vmatpush1.msra.mxu0 0.0
      %2280 = vmatprep.subr.mxu0 0.0
      %2281 = vmatpush1.msra.mxu0 0.0
      %2282 = vmatprep.subr.mxu0 0.0
      %2283 = vmatpush1.msra.mxu0 0.0
      %2284 = vmatprep.subr.mxu0 0.0
      %2285 = vmatpush1.msra.mxu0 0.0
      %2286 = vmatprep.subr.mxu0 0.0
      %2287 = vmatpush1.msra.mxu0 0.0
      %2288 = vmatprep.subr.mxu0 0.0
      %2289 = vmatpush1.msra.mxu0 0.0
      %2290 = vmatprep.subr.mxu0 0.0
      %2291 = vmatpush1.msra.mxu0 0.0
      %2292 = vmatprep.subr.mxu0 0.0
      %2293 = vmatpush1.msra.mxu0 0.0
      %2294 = vmatprep.subr.mxu0 0.0
      %2295 = vmatpush1.msra.mxu0 0.0
      %2296 = vmatprep.subr.mxu0 0.0
      %2297 = vmatpush1.msra.mxu0 0.0
      %2298 = vmatprep.subr.mxu0 0.0
      %2299 = vmatpush1.msra.mxu0 0.0
      %2300 = vmatprep.subr.mxu0 0.0
      %2301 = vmatpush1.msra.mxu0 0.0
      %2302 = vmatprep.mubr.f32.mxu0 0.0
      %2303 = vmatmul.mubr.f32.gmra.mrb[0].mxu0 %v2215
      %v2304 = vpop.f32.mrb[0].mxu0
      %v2305 = vadd.f32 %v2212, %v2304
      %v2306 = vpop.f32.mrb[0].mxu0
      %2307 = vmatprep.mubr.f32.mxu0 0.0
      %2308 = vmatmul.mubr.f32.gmra.mrb[0].mxu0 %v2218
      %v2309 = vpop.f32.mrb[0].mxu0
      %v2310 = vadd.f32 %v2212, %v2309
      %v2311 = vpop.f32.mrb[0].mxu0
      %2312 = vmatprep.mubr.f32.mxu0 0.0
      %2313 = vmatmul.mubr.f32.gmra.mrb[0].mxu0 %v2221
      %v2314 = vpop.f32.mrb[0].mxu0
      %v2315 = vadd.f32 %v2212, %v2314
      %v2316 = vpop.f32.mrb[0].mxu0
      %2317 = vmatprep.mubr.f32.mxu0 0.0
      %2318 = vmatmul.mubr.f32.gmra.mrb[0].mxu0 %v2224
      %v2319 = vpop.f32.mrb[0].mxu0
      %v2320 = vadd.f32 %v2212, %v2319
      %v2321 = vpop.f32.mrb[0].mxu0
      %2322 = vmatprep.mubr.f32.mxu0 0.0
      %2323 = vmatmul.mubr.f32.gmra.mrb[0].mxu0 %v2227
      %v2324 = vpop.f32.mrb[0].mxu0
      %v2325 = vadd.f32 %v2212, %v2324
      %v2326 = vpop.f32.mrb[0].mxu0
      %2327 = vmatprep.mubr.f32.mxu0 0.0
      %2328 = vmatmul.mubr.f32.gmra.mrb[0].mxu0 %v2230
      %v2329 = vpop.f32.mrb[0].mxu0
      %v2330 = vadd.f32 %v2212, %v2329
      %v2331 = vpop.f32.mrb[0].mxu0
      %2332 = vmatprep.mubr.f32.mxu0 0.0
      %2333 = vmatmul.mubr.f32.gmra.mrb[0].mxu0 %v2233
      %v2334 = vpop.f32.mrb[0].mxu0
      %v2335 = vadd.f32 %v2212, %v2334
      %v2336 = vpop.f32.mrb[0].mxu0
      %2337 = vmatprep.mubr.f32.mxu0 0.0
      %2338 = vmatmul.mubr.f32.gmra.mrb[0].mxu0 %v2236
      %v2339 = vpop.f32.mrb[0].mxu0
      %v2340 = vadd.f32 %v2212, %v2339
      %v2341 = vpop.f32.mrb[0].mxu0
      %2342 = vdwg.mxu0
      %v2343 = vadd.f32 %v2305, %v512
      %v2344 = vadd.f32 %v2310, %v513
      %v2345 = vadd.f32 %v2315, %v514
      %v2346 = vadd.f32 %v2320, %v515
      %v2347 = vadd.f32 %v2325, %v516
      %v2348 = vadd.f32 %v2330, %v517
      %v2349 = vadd.f32 %v2335, %v518
      %v2350 = vadd.f32 %v2340, %v519
      %2351 = vst.msk [vmem:[%s510] sm:$0xff] %vm522, %v2343
      %2352 = vst.msk [vmem:[%s510 + $0x8] sm:$0xff] %vm522, %v2344
      %2353 = vst.msk [vmem:[%s510 + $0x10] sm:$0xff] %vm522, %v2345
      %2354 = vst.msk [vmem:[%s510 + $0x18] sm:$0xff] %vm522, %v2346
      %2355 = vst.msk [vmem:[%s510 + $0x20] sm:$0xff] %vm522, %v2347
      %2356 = vst.msk [vmem:[%s510 + $0x28] sm:$0xff] %vm522, %v2348
      %2357 = vst.msk [vmem:[%s510 + $0x30] sm:$0xff] %vm522, %v2349
      %2358 = vst.msk [vmem:[%s510 + $0x38] sm:$0xff] %vm522, %v2350
      %s2359 = smul.u32 4, %s30
      %p2360 = scmp.lt.s32.totalorder %s31, 1
      %s2361 = scalar_select %p2360, %s31, 1
      %p2362 = scmp.lt.s32.totalorder %s2359, 3
      %s2363 = scalar_select %p2362, %s2359, 3
      %s2364 = smul.addr %s2363, 2
      %s2365 = smul.addr %s2361, 8
      %s2366 = sadd.s32 %s2364, %s2365
      %s2367 = smul.addr %s2366, 8
      %s2368 = scalar_lea.vmem %s13, %s2367
      // Predicated region
      $region73: #{transformer_forward.4} parent=71 // pred_check
        %p2369 = pneg %p343
      $region74: #{transformer_forward.4} parent=71 // pred_check_branch
        %2371 = sbr.rel (%p2369) target = $region76
      $region75: #{transformer_forward.4} parent=71 // pred_region
        %s2372 = smul.u32 4, %s30
      $region76: #{transformer_forward.4} parent=71 // pred_fallthru
        _
    $region72: #{transformer_forward.4} parent=5 // pred_fallthru
      _
    %p2373 = scmp.le.s32.totalorder 2, %s21
    // Predicated region
    $region77: #{transformer_forward.4} parent=5 // pred_check
      %p2374 = pneg %p2373
    $region78: #{transformer_forward.4} parent=5 // pred_check_branch
      %2376 = sbr.rel (%p2374) target = $region80
    $region79: #{transformer_forward.4} parent=5 // pred_region
      %s2377 = ssub.s32 %s21, 2
      // Predicated region
      $region81: #{transformer_forward.4} parent=79 // pred_check
        %p2378 = pneg %p349
      $region82: #{transformer_forward.4} parent=79 // pred_check_branch
        %2380 = sbr.rel (%p2378) target = $region84
      $region83: #{transformer_forward.4} parent=79 // pred_region
        %s2381 = smul.u32 4, %s32
        %p2382 = scmp.lt.s32.totalorder %s33, 1
        %s2383 = scalar_select %p2382, %s33, 1
        %p2384 = scmp.lt.s32.totalorder %s2381, 3
        %s2385 = scalar_select %p2384, %s2381, 3
        %s2386 = smul.addr %s2385, 2
        %s2387 = smul.addr %s2383, 8
        %s2388 = sadd.s32 %s2386, %s2387
        %s2389 = smul.addr %s2388, 8
        %s2390 = scalar_lea.vmem %s13, %s2389
      $region84: #{transformer_forward.4} parent=79 // pred_fallthru
        _
    $region80: #{transformer_forward.4} parent=5 // pred_fallthru
      _
  $region6: #{transformer_forward.4} parent=0 // loop_footer
    %s25 = sadd.s32 1, %s21
  $region7: #{transformer_forward.4} parent=0 // loop_footer_branch
    %20 = sbr.rel target = $region3
  $region8: #{transformer_forward.4} parent=0 // loop_exit
    _

</llo_original>
